<compile_context>
chip_gen: v7x
topology: tpu7x:2x2x1
jax: 0.10.0
libtpu: 0.0.40
codegen_flags: <defaults>
</compile_context>

<pallas_src>
import math
import functools

import numpy as np
import jax
import jax.numpy as jnp
from jax import lax
from jax.experimental import pallas as pl
from jax.experimental.pallas import tpu as pltpu

_INV_SQRT_2PI = 1.0 / math.sqrt(2.0 * math.pi)


def _diff_attn_kernel(sigt_ref, q_ref, k_ref, v_ref,
                      vout_ref, series_ref, prior_ref,
                      *, scale, mask_flag, tq, loop_heads):
    """One grid step = (one batch element) x (one tq-row slice of queries),
    all heads.  K/V for the whole window stay resident across the row axis."""
    qi = pl.program_id(1)
    H = q_ref.shape[1]
    L = k_ref.shape[2]

    # Row/col indices of this tile: causal mask + (i-j) distances generated
    # in-kernel (no (L, L) distance array is ever read from HBM).
    row = qi * tq + lax.broadcasted_iota(jnp.int32, (tq, L), 0)
    col = lax.broadcasted_iota(jnp.int32, (tq, L), 1)
    causal = col > row
    d = (row - col).astype(jnp.float32)            # (i-j); squared below, so no abs
    neg_half_d2 = -0.5 * d * d                     # == -|i-j|^2 / 2, once per tile

    # ---- Gaussian prior: independent of q/k/v, static per-head loop keeps
    # ---- indexing static and live temps at ~one (tq, L) block.
    for h in range(H):
        inv_h = pl.reciprocal(sigt_ref[0, h])[:, None]          # (tq, 1), exact
        prior_h = (_INV_SQRT_2PI * inv_h) * jnp.exp(neg_half_d2 * (inv_h * inv_h))
        prior_ref[0, h] = prior_h.astype(prior_ref.dtype)

    # ---- Attention: scores -> masked softmax -> PV.
    def attn_one(q_blk, k_blk, v_blk):
        # q (.., tq, E), k (.., L, E), v (.., L, D); accumulate scores in f32.
        scores = jnp.einsum('...qe,...ke->...qk', q_blk, k_blk,
                            preferred_element_type=jnp.float32) * scale
        if mask_flag:
            scores = jnp.where(causal, -jnp.inf, scores)
        m = jnp.max(scores, axis=-1, keepdims=True)
        e = jnp.exp(scores - m)
        # exact reciprocal: `series` feeds a KL divergence downstream, keep
        # rows summing to 1 within f32 rounding.
        series = e * pl.reciprocal(jnp.sum(e, axis=-1, keepdims=True))
        # PV matmul in the value dtype (bf16 x bf16 -> f32 acc when inputs are
        # bf16) instead of silently promoting v to f32.
        pv = jnp.einsum('...qk,...kd->...qd', series.astype(v_blk.dtype), v_blk,
                        preferred_element_type=jnp.float32)
        return series, pv

    if loop_heads:
        # Bound live intermediates (scores/e/series/pv) to a single head at a
        # time; needed for large L on v7x's 64 MiB VMEM.  DMAs stay fat: the
        # whole (1,H,*) blocks are still moved once per grid step.
        def body(h, carry):
            series, pv = attn_one(q_ref[0, h], k_ref[0, h], v_ref[0, h])
            vout_ref[0, h] = pv.astype(vout_ref.dtype)
            series_ref[0, h] = series.astype(series_ref.dtype)
            return carry
        lax.fori_loop(0, H, body, 0)
    else:
        series, pv = attn_one(q_ref[0], k_ref[0], v_ref[0])
        vout_ref[0] = pv.astype(vout_ref.dtype)
        series_ref[0] = series.astype(series_ref.dtype)


def _select_tiling(L, H, E, D, qk_bytes, v_bytes, attn_bytes, vout_bytes):
    """Pick (row tile tq, loop_heads, vmem_limit) so the per-step working set
    fits this generation's VMEM (v5e/v6e: 128 MiB, v7x: 64 MiB)."""
    try:
        cap = int(pltpu.get_tpu_info().vmem_capacity_bytes)
    except Exception:
        cap = 64 * 1024 * 1024                 # conservative (v7x-sized) default
    usable = (cap * 3) // 4                    # headroom for Mosaic internal scratch

    def footprint(tq, loop_heads):
        in_dbuf = 2 * (H * tq * 4 + H * tq * E * qk_bytes)            # sigma_t col + q
        kv = H * L * (E * qk_bytes + D * v_bytes)                     # single-buffered K/V
        out_dbuf = 2 * (H * tq * D * vout_bytes + 2 * H * tq * L * attn_bytes)
        live_heads = 1 if loop_heads else H
        inter = live_heads * (4 * tq * L + tq * D) * 4                # scores/e/series/prior + pv
        return in_dbuf + kv + out_dbuf + inter

    # tq must be a multiple of 128 (lane axis of the sigma_t block) or == L.
    cands = ([L] if L <= 512 else []) + [c for c in (512, 256, 128) if c < L]
    for tq in cands:
        for loop_heads in (False, True):       # prefer batched heads when it fits
            if footprint(tq, loop_heads) <= usable:
                return tq, loop_heads, usable
    return cands[-1], True, usable             # last resort: smallest tile, per-head loop


def diffusion_anomaly_attention(queries, keys, values, sigma, attn_mask,
                                sqrt_alphas_cumprod, t,
                                *, scale=None, mask_flag=True,
                                output_attention=True, attn_dtype=None,
                                loop_heads=None):
    """queries/keys: (B, L, H, E); values: (B, S, H, D); sigma: (B, L, H);
    sqrt_alphas_cumprod: (T,); t: scalar diffusion timestep.

    Note: bf16 q/k/v is the fast path (bf16 MXU + half the DMA bytes); f32
    inputs are passed through untouched to match reference numerics."""
    if attn_mask is not None:
        # TODO(synk): support caller-provided attn_mask; only the default
        # TriangularCausalMask (mask_flag=True, attn_mask=None) is fused.
        raise NotImplementedError("only the default TriangularCausalMask is supported")
    # TODO(synk): attention_dropout is 0.0 in the reference config; dropout omitted.

    B, L, H, E = queries.shape
    _, S, _, D = values.shape
    assert S == L, "win_size attention assumes S == L"
    scale_val = float(scale) if scale is not None else 1.0 / math.sqrt(E)
    out_dtype = attn_dtype if attn_dtype is not None else queries.dtype

    # glue: layout transposes to head-major (dtypes passed through untouched)
    q = jnp.transpose(queries, (0, 2, 1, 3))                 # (B, H, L, E)
    k = jnp.transpose(keys, (0, 2, 1, 3))                    # (B, H, L, E)
    v = jnp.transpose(values, (0, 2, 1, 3))                  # (B, H, L, D)

    # sigma_t column (B, H, L): trivial elementwise, computed once in XLA.
    # The kernel only needs it for the Gaussian prior; the module's full
    # (B, H, L, L) sigma_t output is a lane-broadcast of this column.
    sig = jnp.transpose(sigma, (0, 2, 1)).astype(jnp.float32)
    sig = jax.nn.sigmoid(sig * 5.0) + 1e-5
    sig = jnp.power(3.0, sig) - 1.0
    sigma_t_col = sqrt_alphas_cumprod[t].astype(jnp.float32) * sig   # (B, H, L)

    qk_bytes = queries.dtype.itemsize
    v_bytes = values.dtype.itemsize
    attn_bytes = jnp.dtype(out_dtype).itemsize
    vout_bytes = values.dtype.itemsize
    tq, auto_loop_heads, vmem_limit = _select_tiling(
        L, H, E, D, qk_bytes, v_bytes, attn_bytes, vout_bytes)
    if loop_heads is None:
        loop_heads = auto_loop_heads
    n_qt = pl.cdiv(L, tq)                      # padded last tile when tq does not divide L

    kernel = functools.partial(_diff_attn_kernel, scale=scale_val,
                               mask_flag=bool(mask_flag), tq=tq,
                               loop_heads=bool(loop_heads))

    out_shape = (
        jax.ShapeDtypeStruct((B, H, L, D), values.dtype),    # V (head-major)
        jax.ShapeDtypeStruct((B, H, L, L), out_dtype),       # series
        jax.ShapeDtypeStruct((B, H, L, L), out_dtype),       # prior
    )

    def _build(single_buffer_kv):
        kv_kwargs = {"pipeline_mode": pl.Buffered(1)} if single_buffer_kv else {}
        in_specs = [
            pl.BlockSpec((1, H, tq), lambda b, qi: (b, 0, qi)),          # sigma_t col (f32, lane-dense)
            pl.BlockSpec((1, H, tq, E), lambda b, qi: (b, 0, qi, 0)),    # q
            pl.BlockSpec((1, H, L, E), lambda b, qi: (b, 0, 0, 0), **kv_kwargs),   # k (resident per b)
            pl.BlockSpec((1, H, L, D), lambda b, qi: (b, 0, 0, 0), **kv_kwargs),   # v (resident per b)
        ]
        out_specs = (
            pl.BlockSpec((1, H, tq, D), lambda b, qi: (b, 0, qi, 0)),
            pl.BlockSpec((1, H, tq, L), lambda b, qi: (b, 0, qi, 0)),
            pl.BlockSpec((1, H, tq, L), lambda b, qi: (b, 0, qi, 0)),
        )
        return pl.pallas_call(
            kernel,
            out_shape=out_shape,
            grid=(B, n_qt),
            in_specs=in_specs,
            out_specs=out_specs,
            compiler_params=pltpu.CompilerParams(
                dimension_semantics=("parallel", "parallel"),
                vmem_limit_bytes=int(vmem_limit)),
        )

    try:
        V_bh, series, prior = _build(True)(sigma_t_col, q, k, v)
    except Exception:
        # pipeline_mode=pl.Buffered(1) not supported on this jax/libtpu:
        # fall back to plain double-buffered K/V (correctness unchanged).
        V_bh, series, prior = _build(False)(sigma_t_col, q, k, v)

    V = jnp.transpose(V_bh, (0, 2, 1, 3))                    # back to (B, L, H, D)
    if output_attention:
        sigma_t = jnp.broadcast_to(sigma_t_col[..., None],
                                   (B, H, L, L)).astype(sigma.dtype)
        return V, series, prior, sigma_t
    return V, None


def _reference(queries, keys, values, sigma, sqrt_alphas_cumprod, t,
               scale=None, mask_flag=True):
    """Pure-JAX reference mirroring the PyTorch forward."""
    B, L, H, E = queries.shape
    scale = scale or 1.0 / math.sqrt(E)
    scores = jnp.einsum('blhe,bshe->bhls', queries, keys)
    if mask_flag:
        r = jnp.arange(L)[:, None]
        c = jnp.arange(L)[None, :]
        scores = jnp.where((c > r)[None, None], -jnp.inf, scores)
    attn = scale * scores
    sig = jnp.transpose(sigma, (0, 2, 1))                      # (B, H, L)
    sig = jax.nn.sigmoid(sig * 5.0) + 1e-5
    sig = jnp.power(3.0, sig) - 1.0
    sig = jnp.repeat(sig[..., None], L, axis=-1)               # (B, H, L, L)
    sigma_t = sqrt_alphas_cumprod[t] * sig
    idx = jnp.arange(L, dtype=jnp.float32)
    dist = jnp.abs(idx[:, None] - idx[None, :])[None, None]
    prior = 1.0 / (math.sqrt(2.0 * math.pi) * sigma_t) * jnp.exp(
        -dist ** 2 / 2.0 / sigma_t ** 2)
    series = jax.nn.softmax(attn, axis=-1)
    V = jnp.einsum('bhls,bshd->blhd', series, values)
    return V, series, prior, sigma_t


if __name__ == "__main__":
    B, L, H, E, D, T = 2, 8, 4, 32, 32, 10   # win_size = L = 8

    key = jax.random.PRNGKey(0)
    kq, kk, kv, ks, ka = jax.random.split(key, 5)
    queries = jax.random.normal(kq, (B, L, H, E), dtype=jnp.float32)
    keys_ = jax.random.normal(kk, (B, L, H, E), dtype=jnp.float32)
    values = jax.random.normal(kv, (B, L, H, D), dtype=jnp.float32)
    sigma = jax.random.normal(ks, (B, L, H), dtype=jnp.float32)
    sqrt_alphas_cumprod = jax.random.uniform(
        ka, (T,), dtype=jnp.float32, minval=0.1, maxval=1.0)
    t = 3   # scalar diffusion timestep

    outs = diffusion_anomaly_attention(
        queries, keys_, values, sigma, None, sqrt_alphas_cumprod, t,
        mask_flag=True, output_attention=True)
    jax.block_until_ready(outs)
    V, series, prior, sigma_t = outs

    V_r, series_r, prior_r, sigma_t_r = _reference(
        queries, keys_, values, sigma, sqrt_alphas_cumprod, t, mask_flag=True)

    np.testing.assert_allclose(np.asarray(V), np.asarray(V_r), rtol=5e-3, atol=1e-5)
    np.testing.assert_allclose(np.asarray(series), np.asarray(series_r), rtol=5e-3, atol=1e-5)
    np.testing.assert_allclose(np.asarray(prior), np.asarray(prior_r), rtol=5e-3, atol=1e-5)
    np.testing.assert_allclose(np.asarray(sigma_t), np.asarray(sigma_t_r), rtol=5e-3, atol=1e-5)

    # Also exercise the bounded-live-range (per-head fori_loop) variant that
    # the auto-tiler selects for large L on v7x.
    outs2 = diffusion_anomaly_attention(
        queries, keys_, values, sigma, None, sqrt_alphas_cumprod, t,
        mask_flag=True, output_attention=True, loop_heads=True)
    jax.block_until_ready(outs2)
    V2, series2, prior2, _ = outs2
    np.testing.assert_allclose(np.asarray(V2), np.asarray(V_r), rtol=5e-3, atol=1e-5)
    np.testing.assert_allclose(np.asarray(series2), np.asarray(series_r), rtol=5e-3, atol=1e-5)
    np.testing.assert_allclose(np.asarray(prior2), np.asarray(prior_r), rtol=5e-3, atol=1e-5)

    print("KERNEL_OK")
</pallas_src>

<mosaic_0001>
module attributes {stable_mosaic.version = 11 : i64} {
  func.func @_diff_attn_kernel(%arg0: i32, %arg1: i32, %arg2: memref<1x4x8xf32, #tpu.memory_space<vmem>>, %arg3: memref<1x4x8x32xf32, #tpu.memory_space<vmem>>, %arg4: memref<1x4x8x32xf32, #tpu.memory_space<vmem>>, %arg5: memref<1x4x8x32xf32, #tpu.memory_space<vmem>>, %arg6: memref<1x4x8x32xf32, #tpu.memory_space<vmem>>, %arg7: memref<1x4x8x8xf32, #tpu.memory_space<vmem>>, %arg8: memref<1x4x8x8xf32, #tpu.memory_space<vmem>>) attributes {dimension_semantics = [#tpu.dimension_semantics<parallel>, #tpu.dimension_semantics<parallel>], iteration_bounds = array<i64: 2, 1>, scalar_prefetch = 0 : i64, scratch_operands = 0 : i64, tpu.core_type = #tpu.core_type<tc>, window_params = [{transform_indices = @transform_0, window_bounds = array<i64: 1, 4, 8>}, {transform_indices = @transform_1, window_bounds = array<i64: 1, 4, 8, 32>}, {pipeline_mode = #tpu.pipeline_mode<synchronous>, transform_indices = @transform_2, window_bounds = array<i64: 1, 4, 8, 32>}, {pipeline_mode = #tpu.pipeline_mode<synchronous>, transform_indices = @transform_3, window_bounds = array<i64: 1, 4, 8, 32>}, {transform_indices = @transform_4, window_bounds = array<i64: 1, 4, 8, 32>}, {transform_indices = @transform_5, window_bounds = array<i64: 1, 4, 8, 8>}, {transform_indices = @transform_6, window_bounds = array<i64: 1, 4, 8, 8>}]} {
    %c8_i32 = arith.constant 8 : i32
    %0 = arith.muli %arg1, %c8_i32 : i32
    %1 = tpu.iota {dimensions = array<i32: 0>} : vector<8x8xi32>
    %2 = vector.broadcast %0 : i32 to vector<8x8xi32>
    %3 = arith.addi %2, %1 : vector<8x8xi32>
    %4 = tpu.iota {dimensions = array<i32: 1>} : vector<8x8xi32>
    %5 = arith.cmpi sgt, %4, %3 : vector<8x8xi32>
    %6 = arith.subi %3, %4 : vector<8x8xi32>
    %7 = arith.sitofp %6 : vector<8x8xi32> to vector<8x8xf32>
    %cst = arith.constant -5.000000e-01 : f32
    %8 = vector.broadcast %cst : f32 to vector<8x8xf32>
    %9 = arith.mulf %8, %7 : vector<8x8xf32>
    %10 = arith.mulf %9, %7 : vector<8x8xf32>
    %c0 = arith.constant 0 : index
    %c0_0 = arith.constant 0 : index
    %c0_1 = arith.constant 0 : index
    %11 = vector.load %arg2[%c0, %c0_0, %c0_1] : memref<1x4x8xf32, #tpu.memory_space<vmem>>, vector<1x1x8xf32>
    %12 = vector.shape_cast %11 : vector<1x1x8xf32> to vector<8xf32>
    %13 = tpu.reciprocal %12 : vector<8xf32> -> vector<8xf32>
    %14 = vector.shape_cast %13 : vector<8xf32> to vector<8x1xf32>
    %cst_2 = arith.constant 0.398942292 : f32
    %15 = vector.broadcast %cst_2 : f32 to vector<8x1xf32>
    %16 = arith.mulf %15, %14 : vector<8x1xf32>
    %17 = arith.mulf %14, %14 : vector<8x1xf32>
    %18 = vector.broadcast %17 : vector<8x1xf32> to vector<8x8xf32>
    %19 = arith.mulf %10, %18 : vector<8x8xf32>
    %20 = math.exp %19 : vector<8x8xf32>
    %21 = vector.broadcast %16 : vector<8x1xf32> to vector<8x8xf32>
    %22 = arith.mulf %21, %20 : vector<8x8xf32>
    %c0_3 = arith.constant 0 : index
    %c0_4 = arith.constant 0 : index
    %c0_5 = arith.constant 0 : index
    %c0_6 = arith.constant 0 : index
    %23 = vector.load %arg8[%c0_3, %c0_4, %c0_5, %c0_6] : memref<1x4x8x8xf32, #tpu.memory_space<vmem>>, vector<1x1x8x8xf32>
    %24 = vector.shape_cast %23 : vector<1x1x8x8xf32> to vector<8x8xf32>
    %25 = vector.shape_cast %22 : vector<8x8xf32> to vector<1x1x8x8xf32>
    tpu.vector_store %arg8[%c0_3, %c0_4, %c0_5, %c0_6], %25 {strides = array<i32>} : memref<1x4x8x8xf32, #tpu.memory_space<vmem>>, vector<1x1x8x8xf32>,
    %c0_7 = arith.constant 0 : index
    %c1 = arith.constant 1 : index
    %c0_8 = arith.constant 0 : index
    %26 = vector.load %arg2[%c0_7, %c1, %c0_8] : memref<1x4x8xf32, #tpu.memory_space<vmem>>, vector<1x1x8xf32>
    %27 = vector.shape_cast %26 : vector<1x1x8xf32> to vector<8xf32>
    %28 = tpu.reciprocal %27 : vector<8xf32> -> vector<8xf32>
    %29 = vector.shape_cast %28 : vector<8xf32> to vector<8x1xf32>
    %cst_9 = arith.constant 0.398942292 : f32
    %30 = vector.broadcast %cst_9 : f32 to vector<8x1xf32>
    %31 = arith.mulf %30, %29 : vector<8x1xf32>
    %32 = arith.mulf %29, %29 : vector<8x1xf32>
    %33 = vector.broadcast %32 : vector<8x1xf32> to vector<8x8xf32>
    %34 = arith.mulf %10, %33 : vector<8x8xf32>
    %35 = math.exp %34 : vector<8x8xf32>
    %36 = vector.broadcast %31 : vector<8x1xf32> to vector<8x8xf32>
    %37 = arith.mulf %36, %35 : vector<8x8xf32>
    %c0_10 = arith.constant 0 : index
    %c1_11 = arith.constant 1 : index
    %c0_12 = arith.constant 0 : index
    %c0_13 = arith.constant 0 : index
    %38 = vector.load %arg8[%c0_10, %c1_11, %c0_12, %c0_13] : memref<1x4x8x8xf32, #tpu.memory_space<vmem>>, vector<1x1x8x8xf32>
    %39 = vector.shape_cast %38 : vector<1x1x8x8xf32> to vector<8x8xf32>
    %40 = vector.shape_cast %37 : vector<8x8xf32> to vector<1x1x8x8xf32>
    tpu.vector_store %arg8[%c0_10, %c1_11, %c0_12, %c0_13], %40 {strides = array<i32>} : memref<1x4x8x8xf32, #tpu.memory_space<vmem>>, vector<1x1x8x8xf32>,
    %c0_14 = arith.constant 0 : index
    %c2 = arith.constant 2 : index
    %c0_15 = arith.constant 0 : index
    %41 = vector.load %arg2[%c0_14, %c2, %c0_15] : memref<1x4x8xf32, #tpu.memory_space<vmem>>, vector<1x1x8xf32>
    %42 = vector.shape_cast %41 : vector<1x1x8xf32> to vector<8xf32>
    %43 = tpu.reciprocal %42 : vector<8xf32> -> vector<8xf32>
    %44 = vector.shape_cast %43 : vector<8xf32> to vector<8x1xf32>
    %cst_16 = arith.constant 0.398942292 : f32
    %45 = vector.broadcast %cst_16 : f32 to vector<8x1xf32>
    %46 = arith.mulf %45, %44 : vector<8x1xf32>
    %47 = arith.mulf %44, %44 : vector<8x1xf32>
    %48 = vector.broadcast %47 : vector<8x1xf32> to vector<8x8xf32>
    %49 = arith.mulf %10, %48 : vector<8x8xf32>
    %50 = math.exp %49 : vector<8x8xf32>
    %51 = vector.broadcast %46 : vector<8x1xf32> to vector<8x8xf32>
    %52 = arith.mulf %51, %50 : vector<8x8xf32>
    %c0_17 = arith.constant 0 : index
    %c2_18 = arith.constant 2 : index
    %c0_19 = arith.constant 0 : index
    %c0_20 = arith.constant 0 : index
    %53 = vector.load %arg8[%c0_17, %c2_18, %c0_19, %c0_20] : memref<1x4x8x8xf32, #tpu.memory_space<vmem>>, vector<1x1x8x8xf32>
    %54 = vector.shape_cast %53 : vector<1x1x8x8xf32> to vector<8x8xf32>
    %55 = vector.shape_cast %52 : vector<8x8xf32> to vector<1x1x8x8xf32>
    tpu.vector_store %arg8[%c0_17, %c2_18, %c0_19, %c0_20], %55 {strides = array<i32>} : memref<1x4x8x8xf32, #tpu.memory_space<vmem>>, vector<1x1x8x8xf32>,
    %c0_21 = arith.constant 0 : index
    %c3 = arith.constant 3 : index
    %c0_22 = arith.constant 0 : index
    %56 = vector.load %arg2[%c0_21, %c3, %c0_22] : memref<1x4x8xf32, #tpu.memory_space<vmem>>, vector<1x1x8xf32>
    %57 = vector.shape_cast %56 : vector<1x1x8xf32> to vector<8xf32>
    %58 = tpu.reciprocal %57 : vector<8xf32> -> vector<8xf32>
    %59 = vector.shape_cast %58 : vector<8xf32> to vector<8x1xf32>
    %cst_23 = arith.constant 0.398942292 : f32
    %60 = vector.broadcast %cst_23 : f32 to vector<8x1xf32>
    %61 = arith.mulf %60, %59 : vector<8x1xf32>
    %62 = arith.mulf %59, %59 : vector<8x1xf32>
    %63 = vector.broadcast %62 : vector<8x1xf32> to vector<8x8xf32>
    %64 = arith.mulf %10, %63 : vector<8x8xf32>
    %65 = math.exp %64 : vector<8x8xf32>
    %66 = vector.broadcast %61 : vector<8x1xf32> to vector<8x8xf32>
    %67 = arith.mulf %66, %65 : vector<8x8xf32>
    %c0_24 = arith.constant 0 : index
    %c3_25 = arith.constant 3 : index
    %c0_26 = arith.constant 0 : index
    %c0_27 = arith.constant 0 : index
    %68 = vector.load %arg8[%c0_24, %c3_25, %c0_26, %c0_27] : memref<1x4x8x8xf32, #tpu.memory_space<vmem>>, vector<1x1x8x8xf32>
    %69 = vector.shape_cast %68 : vector<1x1x8x8xf32> to vector<8x8xf32>
    %70 = vector.shape_cast %67 : vector<8x8xf32> to vector<1x1x8x8xf32>
    tpu.vector_store %arg8[%c0_24, %c3_25, %c0_26, %c0_27], %70 {strides = array<i32>} : memref<1x4x8x8xf32, #tpu.memory_space<vmem>>, vector<1x1x8x8xf32>,
    %c0_28 = arith.constant 0 : index
    %c0_29 = arith.constant 0 : index
    %c0_30 = arith.constant 0 : index
    %c0_31 = arith.constant 0 : index
    %71 = vector.load %arg3[%c0_28, %c0_29, %c0_30, %c0_31] : memref<1x4x8x32xf32, #tpu.memory_space<vmem>>, vector<1x4x8x32xf32>
    %72 = vector.shape_cast %71 : vector<1x4x8x32xf32> to vector<4x8x32xf32>
    %c0_32 = arith.constant 0 : index
    %c0_33 = arith.constant 0 : index
    %c0_34 = arith.constant 0 : index
    %c0_35 = arith.constant 0 : index
    %73 = vector.load %arg4[%c0_32, %c0_33, %c0_34, %c0_35] : memref<1x4x8x32xf32, #tpu.memory_space<vmem>>, vector<1x4x8x32xf32>
    %74 = vector.shape_cast %73 : vector<1x4x8x32xf32> to vector<4x8x32xf32>
    %c0_36 = arith.constant 0 : index
    %c0_37 = arith.constant 0 : index
    %c0_38 = arith.constant 0 : index
    %c0_39 = arith.constant 0 : index
    %75 = vector.load %arg5[%c0_36, %c0_37, %c0_38, %c0_39] : memref<1x4x8x32xf32, #tpu.memory_space<vmem>>, vector<1x4x8x32xf32>
    %76 = vector.shape_cast %75 : vector<1x4x8x32xf32> to vector<4x8x32xf32>
    "tpu.trace_start"() <{level = 10 : i32, message = "...qe,...ke->...qk"}> : () -> ()
    %cst_40 = arith.constant dense<0.000000e+00> : vector<4x8x8xf32>
    %77 = tpu.matmul %72, %74, %cst_40 {dimension_numbers = #tpu.dot_dimension_numbers<[2], [2], [1], [1], [0, 0, 0, 1, 1, 1], [0], [0]>} : vector<4x8x32xf32>, vector<4x8x32xf32>, vector<4x8x8xf32> -> vector<4x8x8xf32>
    "tpu.trace_stop"() : () -> ()
    %cst_41 = arith.constant 0.176776692 : f32
    %78 = vector.broadcast %cst_41 : f32 to vector<4x8x8xf32>
    %79 = arith.mulf %77, %78 : vector<4x8x8xf32>
    %cst_42 = arith.constant 0xFF800000 : f32
    %80 = vector.shape_cast %5 : vector<8x8xi1> to vector<1x8x8xi1>
    %81 = vector.broadcast %80 : vector<1x8x8xi1> to vector<4x8x8xi1>
    %82 = vector.broadcast %cst_42 : f32 to vector<4x8x8xf32>
    %83 = arith.select %81, %82, %79 : vector<4x8x8xi1>, vector<4x8x8xf32>
    %cst_43 = arith.constant dense<0xFF800000> : vector<4x8xf32>
    %84 = vector.multi_reduction <maximumf>, %83, %cst_43 [2] : vector<4x8x8xf32> to vector<4x8xf32>
    %85 = vector.shape_cast %84 : vector<4x8xf32> to vector<4x8x1xf32>
    %86 = vector.broadcast %85 : vector<4x8x1xf32> to vector<4x8x8xf32>
    %87 = arith.subf %83, %86 : vector<4x8x8xf32>
    %88 = math.exp %87 : vector<4x8x8xf32>
    %cst_44 = arith.constant dense<0.000000e+00> : vector<4x8xf32>
    %89 = vector.multi_reduction <add>, %88, %cst_44 [2] : vector<4x8x8xf32> to vector<4x8xf32>
    %90 = vector.shape_cast %89 : vector<4x8xf32> to vector<4x8x1xf32>
    %91 = tpu.reciprocal %90 : vector<4x8x1xf32> -> vector<4x8x1xf32>
    %92 = vector.broadcast %91 : vector<4x8x1xf32> to vector<4x8x8xf32>
    %93 = arith.mulf %88, %92 : vector<4x8x8xf32>
    "tpu.trace_start"() <{level = 10 : i32, message = "...qk,...kd->...qd"}> : () -> ()
    %cst_45 = arith.constant dense<0.000000e+00> : vector<4x8x32xf32>
    %94 = tpu.matmul %93, %76, %cst_45 {dimension_numbers = #tpu.dot_dimension_numbers<[2], [1], [1], [2], [0, 0, 0, 1, 1, 2], [0], [0]>} : vector<4x8x8xf32>, vector<4x8x32xf32>, vector<4x8x32xf32> -> vector<4x8x32xf32>
    "tpu.trace_stop"() : () -> ()
    %c0_46 = arith.constant 0 : index
    %c0_47 = arith.constant 0 : index
    %c0_48 = arith.constant 0 : index
    %c0_49 = arith.constant 0 : index
    %95 = vector.load %arg6[%c0_46, %c0_47, %c0_48, %c0_49] : memref<1x4x8x32xf32, #tpu.memory_space<vmem>>, vector<1x4x8x32xf32>
    %96 = vector.shape_cast %95 : vector<1x4x8x32xf32> to vector<4x8x32xf32>
    %97 = vector.shape_cast %94 : vector<4x8x32xf32> to vector<1x4x8x32xf32>
    tpu.vector_store %arg6[%c0_46, %c0_47, %c0_48, %c0_49], %97 {strides = array<i32>} : memref<1x4x8x32xf32, #tpu.memory_space<vmem>>, vector<1x4x8x32xf32>,
    %c0_50 = arith.constant 0 : index
    %c0_51 = arith.constant 0 : index
    %c0_52 = arith.constant 0 : index
    %c0_53 = arith.constant 0 : index
    %98 = vector.load %arg7[%c0_50, %c0_51, %c0_52, %c0_53] : memref<1x4x8x8xf32, #tpu.memory_space<vmem>>, vector<1x4x8x8xf32>
    %99 = vector.shape_cast %98 : vector<1x4x8x8xf32> to vector<4x8x8xf32>
    %100 = vector.shape_cast %93 : vector<4x8x8xf32> to vector<1x4x8x8xf32>
    tpu.vector_store %arg7[%c0_50, %c0_51, %c0_52, %c0_53], %100 {strides = array<i32>} : memref<1x4x8x8xf32, #tpu.memory_space<vmem>>, vector<1x4x8x8xf32>,
    return
  }
  func.func @transform_0(%arg0: i32, %arg1: i32) -> (i32, i32, i32) {
    %c0_i32 = arith.constant 0 : i32
    %c0_i32_0 = arith.constant 0 : i32
    return %arg0, %c0_i32, %arg1 : i32, i32, i32
  }
  func.func @transform_1(%arg0: i32, %arg1: i32) -> (i32, i32, i32, i32) {
    %c0_i32 = arith.constant 0 : i32
    %c0_i32_0 = arith.constant 0 : i32
    %c0_i32_1 = arith.constant 0 : i32
    return %arg0, %c0_i32, %arg1, %c0_i32_0 : i32, i32, i32, i32
  }
  func.func @transform_2(%arg0: i32, %arg1: i32) -> (i32, i32, i32, i32) {
    %c0_i32 = arith.constant 0 : i32
    %c0_i32_0 = arith.constant 0 : i32
    %c0_i32_1 = arith.constant 0 : i32
    %c0_i32_2 = arith.constant 0 : i32
    return %arg0, %c0_i32, %c0_i32_0, %c0_i32_1 : i32, i32, i32, i32
  }
  func.func @transform_3(%arg0: i32, %arg1: i32) -> (i32, i32, i32, i32) {
    %c0_i32 = arith.constant 0 : i32
    %c0_i32_0 = arith.constant 0 : i32
    %c0_i32_1 = arith.constant 0 : i32
    %c0_i32_2 = arith.constant 0 : i32
    return %arg0, %c0_i32, %c0_i32_0, %c0_i32_1 : i32, i32, i32, i32
  }
  func.func @transform_4(%arg0: i32, %arg1: i32) -> (i32, i32, i32, i32) {
    %c0_i32 = arith.constant 0 : i32
    %c0_i32_0 = arith.constant 0 : i32
    %c0_i32_1 = arith.constant 0 : i32
    return %arg0, %c0_i32, %arg1, %c0_i32_0 : i32, i32, i32, i32
  }
  func.func @transform_5(%arg0: i32, %arg1: i32) -> (i32, i32, i32, i32) {
    %c0_i32 = arith.constant 0 : i32
    %c0_i32_0 = arith.constant 0 : i32
    %c0_i32_1 = arith.constant 0 : i32
    return %arg0, %c0_i32, %arg1, %c0_i32_0 : i32, i32, i32, i32
  }
  func.func @transform_6(%arg0: i32, %arg1: i32) -> (i32, i32, i32, i32) {
    %c0_i32 = arith.constant 0 : i32
    %c0_i32_0 = arith.constant 0 : i32
    %c0_i32_1 = arith.constant 0 : i32
    return %arg0, %c0_i32, %arg1, %c0_i32_0 : i32, i32, i32, i32
  }
}

module attributes {stable_mosaic.version = 11 : i64} {
  func.func @_diff_attn_kernel(%arg0: i32, %arg1: i32, %arg2: memref<1x4x8xf32, #tpu.memory_space<vmem>>, %arg3: memref<1x4x8x32xf32, #tpu.memory_space<vmem>>, %arg4: memref<1x4x8x32xf32, #tpu.memory_space<vmem>>, %arg5: memref<1x4x8x32xf32, #tpu.memory_space<vmem>>, %arg6: memref<1x4x8x32xf32, #tpu.memory_space<vmem>>, %arg7: memref<1x4x8x8xf32, #tpu.memory_space<vmem>>, %arg8: memref<1x4x8x8xf32, #tpu.memory_space<vmem>>) attributes {dimension_semantics = [#tpu.dimension_semantics<parallel>, #tpu.dimension_semantics<parallel>], iteration_bounds = array<i64: 2, 1>, scalar_prefetch = 0 : i64, scratch_operands = 0 : i64, tpu.core_type = #tpu.core_type<tc>, window_params = [{transform_indices = @transform_0, window_bounds = array<i64: 1, 4, 8>}, {transform_indices = @transform_1, window_bounds = array<i64: 1, 4, 8, 32>}, {transform_indices = @transform_2, window_bounds = array<i64: 1, 4, 8, 32>}, {transform_indices = @transform_3, window_bounds = array<i64: 1, 4, 8, 32>}, {transform_indices = @transform_4, window_bounds = array<i64: 1, 4, 8, 32>}, {transform_indices = @transform_5, window_bounds = array<i64: 1, 4, 8, 8>}, {transform_indices = @transform_6, window_bounds = array<i64: 1, 4, 8, 8>}]} {
    %c8_i32 = arith.constant 8 : i32
    %0 = arith.muli %arg1, %c8_i32 : i32
    %1 = tpu.iota {dimensions = array<i32: 0>} : vector<8x8xi32>
    %2 = vector.broadcast %0 : i32 to vector<8x8xi32>
    %3 = arith.addi %2, %1 : vector<8x8xi32>
    %4 = tpu.iota {dimensions = array<i32: 1>} : vector<8x8xi32>
    %5 = arith.cmpi sgt, %4, %3 : vector<8x8xi32>
    %6 = arith.subi %3, %4 : vector<8x8xi32>
    %7 = arith.sitofp %6 : vector<8x8xi32> to vector<8x8xf32>
    %cst = arith.constant -5.000000e-01 : f32
    %8 = vector.broadcast %cst : f32 to vector<8x8xf32>
    %9 = arith.mulf %8, %7 : vector<8x8xf32>
    %10 = arith.mulf %9, %7 : vector<8x8xf32>
    %c0 = arith.constant 0 : index
    %c0_0 = arith.constant 0 : index
    %c0_1 = arith.constant 0 : index
    %11 = vector.load %arg2[%c0, %c0_0, %c0_1] : memref<1x4x8xf32, #tpu.memory_space<vmem>>, vector<1x1x8xf32>
    %12 = vector.shape_cast %11 : vector<1x1x8xf32> to vector<8xf32>
    %13 = tpu.reciprocal %12 : vector<8xf32> -> vector<8xf32>
    %14 = vector.shape_cast %13 : vector<8xf32> to vector<8x1xf32>
    %cst_2 = arith.constant 0.398942292 : f32
    %15 = vector.broadcast %cst_2 : f32 to vector<8x1xf32>
    %16 = arith.mulf %15, %14 : vector<8x1xf32>
    %17 = arith.mulf %14, %14 : vector<8x1xf32>
    %18 = vector.broadcast %17 : vector<8x1xf32> to vector<8x8xf32>
    %19 = arith.mulf %10, %18 : vector<8x8xf32>
    %20 = math.exp %19 : vector<8x8xf32>
    %21 = vector.broadcast %16 : vector<8x1xf32> to vector<8x8xf32>
    %22 = arith.mulf %21, %20 : vector<8x8xf32>
    %c0_3 = arith.constant 0 : index
    %c0_4 = arith.constant 0 : index
    %c0_5 = arith.constant 0 : index
    %c0_6 = arith.constant 0 : index
    %23 = vector.load %arg8[%c0_3, %c0_4, %c0_5, %c0_6] : memref<1x4x8x8xf32, #tpu.memory_space<vmem>>, vector<1x1x8x8xf32>
    %24 = vector.shape_cast %23 : vector<1x1x8x8xf32> to vector<8x8xf32>
    %25 = vector.shape_cast %22 : vector<8x8xf32> to vector<1x1x8x8xf32>
    tpu.vector_store %arg8[%c0_3, %c0_4, %c0_5, %c0_6], %25 {strides = array<i32>} : memref<1x4x8x8xf32, #tpu.memory_space<vmem>>, vector<1x1x8x8xf32>,
    %c0_7 = arith.constant 0 : index
    %c1 = arith.constant 1 : index
    %c0_8 = arith.constant 0 : index
    %26 = vector.load %arg2[%c0_7, %c1, %c0_8] : memref<1x4x8xf32, #tpu.memory_space<vmem>>, vector<1x1x8xf32>
    %27 = vector.shape_cast %26 : vector<1x1x8xf32> to vector<8xf32>
    %28 = tpu.reciprocal %27 : vector<8xf32> -> vector<8xf32>
    %29 = vector.shape_cast %28 : vector<8xf32> to vector<8x1xf32>
    %cst_9 = arith.constant 0.398942292 : f32
    %30 = vector.broadcast %cst_9 : f32 to vector<8x1xf32>
    %31 = arith.mulf %30, %29 : vector<8x1xf32>
    %32 = arith.mulf %29, %29 : vector<8x1xf32>
    %33 = vector.broadcast %32 : vector<8x1xf32> to vector<8x8xf32>
    %34 = arith.mulf %10, %33 : vector<8x8xf32>
    %35 = math.exp %34 : vector<8x8xf32>
    %36 = vector.broadcast %31 : vector<8x1xf32> to vector<8x8xf32>
    %37 = arith.mulf %36, %35 : vector<8x8xf32>
    %c0_10 = arith.constant 0 : index
    %c1_11 = arith.constant 1 : index
    %c0_12 = arith.constant 0 : index
    %c0_13 = arith.constant 0 : index
    %38 = vector.load %arg8[%c0_10, %c1_11, %c0_12, %c0_13] : memref<1x4x8x8xf32, #tpu.memory_space<vmem>>, vector<1x1x8x8xf32>
    %39 = vector.shape_cast %38 : vector<1x1x8x8xf32> to vector<8x8xf32>
    %40 = vector.shape_cast %37 : vector<8x8xf32> to vector<1x1x8x8xf32>
    tpu.vector_store %arg8[%c0_10, %c1_11, %c0_12, %c0_13], %40 {strides = array<i32>} : memref<1x4x8x8xf32, #tpu.memory_space<vmem>>, vector<1x1x8x8xf32>,
    %c0_14 = arith.constant 0 : index
    %c2 = arith.constant 2 : index
    %c0_15 = arith.constant 0 : index
    %41 = vector.load %arg2[%c0_14, %c2, %c0_15] : memref<1x4x8xf32, #tpu.memory_space<vmem>>, vector<1x1x8xf32>
    %42 = vector.shape_cast %41 : vector<1x1x8xf32> to vector<8xf32>
    %43 = tpu.reciprocal %42 : vector<8xf32> -> vector<8xf32>
    %44 = vector.shape_cast %43 : vector<8xf32> to vector<8x1xf32>
    %cst_16 = arith.constant 0.398942292 : f32
    %45 = vector.broadcast %cst_16 : f32 to vector<8x1xf32>
    %46 = arith.mulf %45, %44 : vector<8x1xf32>
    %47 = arith.mulf %44, %44 : vector<8x1xf32>
    %48 = vector.broadcast %47 : vector<8x1xf32> to vector<8x8xf32>
    %49 = arith.mulf %10, %48 : vector<8x8xf32>
    %50 = math.exp %49 : vector<8x8xf32>
    %51 = vector.broadcast %46 : vector<8x1xf32> to vector<8x8xf32>
    %52 = arith.mulf %51, %50 : vector<8x8xf32>
    %c0_17 = arith.constant 0 : index
    %c2_18 = arith.constant 2 : index
    %c0_19 = arith.constant 0 : index
    %c0_20 = arith.constant 0 : index
    %53 = vector.load %arg8[%c0_17, %c2_18, %c0_19, %c0_20] : memref<1x4x8x8xf32, #tpu.memory_space<vmem>>, vector<1x1x8x8xf32>
    %54 = vector.shape_cast %53 : vector<1x1x8x8xf32> to vector<8x8xf32>
    %55 = vector.shape_cast %52 : vector<8x8xf32> to vector<1x1x8x8xf32>
    tpu.vector_store %arg8[%c0_17, %c2_18, %c0_19, %c0_20], %55 {strides = array<i32>} : memref<1x4x8x8xf32, #tpu.memory_space<vmem>>, vector<1x1x8x8xf32>,
    %c0_21 = arith.constant 0 : index
    %c3 = arith.constant 3 : index
    %c0_22 = arith.constant 0 : index
    %56 = vector.load %arg2[%c0_21, %c3, %c0_22] : memref<1x4x8xf32, #tpu.memory_space<vmem>>, vector<1x1x8xf32>
    %57 = vector.shape_cast %56 : vector<1x1x8xf32> to vector<8xf32>
    %58 = tpu.reciprocal %57 : vector<8xf32> -> vector<8xf32>
    %59 = vector.shape_cast %58 : vector<8xf32> to vector<8x1xf32>
    %cst_23 = arith.constant 0.398942292 : f32
    %60 = vector.broadcast %cst_23 : f32 to vector<8x1xf32>
    %61 = arith.mulf %60, %59 : vector<8x1xf32>
    %62 = arith.mulf %59, %59 : vector<8x1xf32>
    %63 = vector.broadcast %62 : vector<8x1xf32> to vector<8x8xf32>
    %64 = arith.mulf %10, %63 : vector<8x8xf32>
    %65 = math.exp %64 : vector<8x8xf32>
    %66 = vector.broadcast %61 : vector<8x1xf32> to vector<8x8xf32>
    %67 = arith.mulf %66, %65 : vector<8x8xf32>
    %c0_24 = arith.constant 0 : index
    %c3_25 = arith.constant 3 : index
    %c0_26 = arith.constant 0 : index
    %c0_27 = arith.constant 0 : index
    %68 = vector.load %arg8[%c0_24, %c3_25, %c0_26, %c0_27] : memref<1x4x8x8xf32, #tpu.memory_space<vmem>>, vector<1x1x8x8xf32>
    %69 = vector.shape_cast %68 : vector<1x1x8x8xf32> to vector<8x8xf32>
    %70 = vector.shape_cast %67 : vector<8x8xf32> to vector<1x1x8x8xf32>
    tpu.vector_store %arg8[%c0_24, %c3_25, %c0_26, %c0_27], %70 {strides = array<i32>} : memref<1x4x8x8xf32, #tpu.memory_space<vmem>>, vector<1x1x8x8xf32>,
    %c0_28 = arith.constant 0 : index
    %c0_29 = arith.constant 0 : index
    %c0_30 = arith.constant 0 : index
    %c0_31 = arith.constant 0 : index
    %71 = vector.load %arg3[%c0_28, %c0_29, %c0_30, %c0_31] : memref<1x4x8x32xf32, #tpu.memory_space<vmem>>, vector<1x4x8x32xf32>
    %72 = vector.shape_cast %71 : vector<1x4x8x32xf32> to vector<4x8x32xf32>
    %c0_32 = arith.constant 0 : index
    %c0_33 = arith.constant 0 : index
    %c0_34 = arith.constant 0 : index
    %c0_35 = arith.constant 0 : index
    %73 = vector.load %arg4[%c0_32, %c0_33, %c0_34, %c0_35] : memref<1x4x8x32xf32, #tpu.memory_space<vmem>>, vector<1x4x8x32xf32>
    %74 = vector.shape_cast %73 : vector<1x4x8x32xf32> to vector<4x8x32xf32>
    %c0_36 = arith.constant 0 : index
    %c0_37 = arith.constant 0 : index
    %c0_38 = arith.constant 0 : index
    %c0_39 = arith.constant 0 : index
    %75 = vector.load %arg5[%c0_36, %c0_37, %c0_38, %c0_39] : memref<1x4x8x32xf32, #tpu.memory_space<vmem>>, vector<1x4x8x32xf32>
    %76 = vector.shape_cast %75 : vector<1x4x8x32xf32> to vector<4x8x32xf32>
    "tpu.trace_start"() <{level = 10 : i32, message = "...qe,...ke->...qk"}> : () -> ()
    %cst_40 = arith.constant dense<0.000000e+00> : vector<4x8x8xf32>
    %77 = tpu.matmul %72, %74, %cst_40 {dimension_numbers = #tpu.dot_dimension_numbers<[2], [2], [1], [1], [0, 0, 0, 1, 1, 1], [0], [0]>} : vector<4x8x32xf32>, vector<4x8x32xf32>, vector<4x8x8xf32> -> vector<4x8x8xf32>
    "tpu.trace_stop"() : () -> ()
    %cst_41 = arith.constant 0.176776692 : f32
    %78 = vector.broadcast %cst_41 : f32 to vector<4x8x8xf32>
    %79 = arith.mulf %77, %78 : vector<4x8x8xf32>
    %cst_42 = arith.constant 0xFF800000 : f32
    %80 = vector.shape_cast %5 : vector<8x8xi1> to vector<1x8x8xi1>
    %81 = vector.broadcast %80 : vector<1x8x8xi1> to vector<4x8x8xi1>
    %82 = vector.broadcast %cst_42 : f32 to vector<4x8x8xf32>
    %83 = arith.select %81, %82, %79 : vector<4x8x8xi1>, vector<4x8x8xf32>
    %cst_43 = arith.constant dense<0xFF800000> : vector<4x8xf32>
    %84 = vector.multi_reduction <maximumf>, %83, %cst_43 [2] : vector<4x8x8xf32> to vector<4x8xf32>
    %85 = vector.shape_cast %84 : vector<4x8xf32> to vector<4x8x1xf32>
    %86 = vector.broadcast %85 : vector<4x8x1xf32> to vector<4x8x8xf32>
    %87 = arith.subf %83, %86 : vector<4x8x8xf32>
    %88 = math.exp %87 : vector<4x8x8xf32>
    %cst_44 = arith.constant dense<0.000000e+00> : vector<4x8xf32>
    %89 = vector.multi_reduction <add>, %88, %cst_44 [2] : vector<4x8x8xf32> to vector<4x8xf32>
    %90 = vector.shape_cast %89 : vector<4x8xf32> to vector<4x8x1xf32>
    %91 = tpu.reciprocal %90 : vector<4x8x1xf32> -> vector<4x8x1xf32>
    %92 = vector.broadcast %91 : vector<4x8x1xf32> to vector<4x8x8xf32>
    %93 = arith.mulf %88, %92 : vector<4x8x8xf32>
    "tpu.trace_start"() <{level = 10 : i32, message = "...qk,...kd->...qd"}> : () -> ()
    %cst_45 = arith.constant dense<0.000000e+00> : vector<4x8x32xf32>
    %94 = tpu.matmul %93, %76, %cst_45 {dimension_numbers = #tpu.dot_dimension_numbers<[2], [1], [1], [2], [0, 0, 0, 1, 1, 2], [0], [0]>} : vector<4x8x8xf32>, vector<4x8x32xf32>, vector<4x8x32xf32> -> vector<4x8x32xf32>
    "tpu.trace_stop"() : () -> ()
    %c0_46 = arith.constant 0 : index
    %c0_47 = arith.constant 0 : index
    %c0_48 = arith.constant 0 : index
    %c0_49 = arith.constant 0 : index
    %95 = vector.load %arg6[%c0_46, %c0_47, %c0_48, %c0_49] : memref<1x4x8x32xf32, #tpu.memory_space<vmem>>, vector<1x4x8x32xf32>
    %96 = vector.shape_cast %95 : vector<1x4x8x32xf32> to vector<4x8x32xf32>
    %97 = vector.shape_cast %94 : vector<4x8x32xf32> to vector<1x4x8x32xf32>
    tpu.vector_store %arg6[%c0_46, %c0_47, %c0_48, %c0_49], %97 {strides = array<i32>} : memref<1x4x8x32xf32, #tpu.memory_space<vmem>>, vector<1x4x8x32xf32>,
    %c0_50 = arith.constant 0 : index
    %c0_51 = arith.constant 0 : index
    %c0_52 = arith.constant 0 : index
    %c0_53 = arith.constant 0 : index
    %98 = vector.load %arg7[%c0_50, %c0_51, %c0_52, %c0_53] : memref<1x4x8x8xf32, #tpu.memory_space<vmem>>, vector<1x4x8x8xf32>
    %99 = vector.shape_cast %98 : vector<1x4x8x8xf32> to vector<4x8x8xf32>
    %100 = vector.shape_cast %93 : vector<4x8x8xf32> to vector<1x4x8x8xf32>
    tpu.vector_store %arg7[%c0_50, %c0_51, %c0_52, %c0_53], %100 {strides = array<i32>} : memref<1x4x8x8xf32, #tpu.memory_space<vmem>>, vector<1x4x8x8xf32>,
    return
  }
  func.func @transform_0(%arg0: i32, %arg1: i32) -> (i32, i32, i32) {
    %c0_i32 = arith.constant 0 : i32
    %c0_i32_0 = arith.constant 0 : i32
    return %arg0, %c0_i32, %arg1 : i32, i32, i32
  }
  func.func @transform_1(%arg0: i32, %arg1: i32) -> (i32, i32, i32, i32) {
    %c0_i32 = arith.constant 0 : i32
    %c0_i32_0 = arith.constant 0 : i32
    %c0_i32_1 = arith.constant 0 : i32
    return %arg0, %c0_i32, %arg1, %c0_i32_0 : i32, i32, i32, i32
  }
  func.func @transform_2(%arg0: i32, %arg1: i32) -> (i32, i32, i32, i32) {
    %c0_i32 = arith.constant 0 : i32
    %c0_i32_0 = arith.constant 0 : i32
    %c0_i32_1 = arith.constant 0 : i32
    %c0_i32_2 = arith.constant 0 : i32
    return %arg0, %c0_i32, %c0_i32_0, %c0_i32_1 : i32, i32, i32, i32
  }
  func.func @transform_3(%arg0: i32, %arg1: i32) -> (i32, i32, i32, i32) {
    %c0_i32 = arith.constant 0 : i32
    %c0_i32_0 = arith.constant 0 : i32
    %c0_i32_1 = arith.constant 0 : i32
    %c0_i32_2 = arith.constant 0 : i32
    return %arg0, %c0_i32, %c0_i32_0, %c0_i32_1 : i32, i32, i32, i32
  }
  func.func @transform_4(%arg0: i32, %arg1: i32) -> (i32, i32, i32, i32) {
    %c0_i32 = arith.constant 0 : i32
    %c0_i32_0 = arith.constant 0 : i32
    %c0_i32_1 = arith.constant 0 : i32
    return %arg0, %c0_i32, %arg1, %c0_i32_0 : i32, i32, i32, i32
  }
  func.func @transform_5(%arg0: i32, %arg1: i32) -> (i32, i32, i32, i32) {
    %c0_i32 = arith.constant 0 : i32
    %c0_i32_0 = arith.constant 0 : i32
    %c0_i32_1 = arith.constant 0 : i32
    return %arg0, %c0_i32, %arg1, %c0_i32_0 : i32, i32, i32, i32
  }
  func.func @transform_6(%arg0: i32, %arg1: i32) -> (i32, i32, i32, i32) {
    %c0_i32 = arith.constant 0 : i32
    %c0_i32_0 = arith.constant 0 : i32
    %c0_i32_1 = arith.constant 0 : i32
    return %arg0, %c0_i32, %arg1, %c0_i32_0 : i32, i32, i32, i32
  }
}

</mosaic_0001>

<llo_original>
// kernel: tpu_custom_call.1
$region0: #{tpu_custom_call.1}
  #allocation0 [shape = 'u32[]', space=smem, size = 0x4, offset = 0x4, fixed_abs, tag = 'smem constant byte address 0x4 - core index']
  #allocation1 [shape = 'u32[144,128]{1,0:T(1,128)}', space=vmem, size = 0x12000, scoped, tag = 'internal scratch']
  %s0 = inlined_call_operand.hbm [shape: f32[2,4,8], index: 0, kind: input, shape index: {}]
  %s1 = inlined_call_operand.hbm [shape: f32[2,4,8,32], index: 1, kind: input, shape index: {}]
  %s2 = inlined_call_operand.hbm [shape: f32[2,4,8,32], index: 2, kind: input, shape index: {}]
  %s3 = inlined_call_operand.hbm [shape: f32[2,4,8,32], index: 3, kind: input, shape index: {}]
  %s4 = inlined_call_operand.hbm [shape: f32[2,4,8,32], index: 4, kind: output, shape index: {0}]
  %s5 = inlined_call_operand.hbm [shape: f32[2,4,8,8], index: 5, kind: output, shape index: {1}]
  %s6 = inlined_call_operand.hbm [shape: f32[2,4,8,8], index: 6, kind: output, shape index: {2}]
  %7 = xla_tuple %s4, %s5, %s6
  %s8 = sld [smem:[#allocation0]]
  $region81: #{tpu_custom_call.1} parent=0
    _
  %s10 = ssub.s32 1, %s8
  %s11 = scalar_select 0, %s10, %s8
  $region1: #{tpu_custom_call.1} parent=0
    #allocation2 [shape = 'u8[4096]{0}', space=vmem, size = 0x1000, scoped, tag = 'input window, operand 0']
    #allocation3 [shape = 's32[2]{0}', space=sflag, size = 0x8, scoped, tag = 'scoped memory for tpu_custom_call.1']
    #allocation4 [shape = 's32[2]{0}', space=sflag, size = 0x8, scoped, tag = 'scoped memory for tpu_custom_call.1']
    #allocation5 [shape = 'u8[32768]{0}', space=vmem, size = 0x8000, scoped, tag = 'input window, operand 1']
    #allocation6 [shape = 's32[2]{0}', space=sflag, size = 0x8, scoped, tag = 'scoped memory for tpu_custom_call.1']
    #allocation7 [shape = 'u8[16384]{0}', space=vmem, size = 0x4000, scoped, tag = 'input window, operand 2, single buffered']
    #allocation8 [shape = 'u8[16384]{0}', space=vmem, size = 0x4000, scoped, tag = 'input window, operand 3, single buffered']
    #allocation9 [shape = 's32[1]{0}', space=sflag, size = 0x4, scoped, tag = 'scoped memory for tpu_custom_call.1']
    #allocation10 [shape = 'u8[32768]{0}', space=vmem, size = 0x8000, scoped, tag = 'output window, operand 0']
    #allocation11 [shape = 'u8[32768]{0}', space=vmem, size = 0x8000, scoped, tag = 'output window, operand 1']
    #allocation12 [shape = 's32[2]{0}', space=sflag, size = 0x8, scoped, tag = 'scoped memory for tpu_custom_call.1']
    #allocation13 [shape = 'u8[32768]{0}', space=vmem, size = 0x8000, scoped, tag = 'output window, operand 2']
    %12 = vsyncpa [#allocation3], 0
    %s13 = scalar_lea.sflag [#allocation3], 1
    %14 = vsyncpa %s13, 0
    %15 = vsyncpa [#allocation6], 0
    %s16 = scalar_lea.sflag [#allocation6], 1
    %17 = vsyncpa %s16, 0
    %18 = vsyncpa [#allocation9], 0
    %19 = vsyncpa [#allocation4], 0
    %s20 = scalar_lea.sflag [#allocation4], 1
    %21 = vsyncpa %s20, 0
    %22 = vsyncpa [#allocation12], 0
    %s23 = scalar_lea.sflag [#allocation12], 1
    %24 = vsyncpa %s23, 0
    loop: start=0, step=1, limit=4
    $region2: #{tpu_custom_call.1} parent=1 // loop_pre_header
      _
    $region3: #{tpu_custom_call.1} parent=1 // loop_header
      %s26 = sphi 0, %s30
      %p27 = scmp.ge.s32.totalorder %s26, 4
      %s33 = sphi 0, %s45
      %s34 = sphi 0, %s41
      %s35 = sphi 0, %s33
      %s36 = sphi 0, %s34
      %s37 = sphi 0, %s35
      %s38 = sphi 0, %s36
      %s50 = sphi 0, %s52
      %s53 = sphi 0, %s50
      %s54 = sphi 0, %s53
      %s70 = sphi 0, %s54
      %s78 = sphi 0, %s80
      %s81 = sphi 0, %s78
      %s82 = sphi 0, %s81
      %s98 = sphi 0, %s82
      %s104 = sphi 0, %s106
      %s107 = sphi 0, %s104
      %s108 = sphi 0, %s107
      %s124 = sphi 0, %s108
      %s130 = sphi 0, %s132
      %s133 = sphi 0, %s130
      %s134 = sphi 0, %s133
      %s150 = sphi 0, %s134
      %s158 = sphi 0, %s160
      %s161 = sphi 0, %s158
      %s162 = sphi 0, %s161
      %s178 = sphi 0, %s162
      %s186 = sphi 0, %s188
      %s189 = sphi 0, %s186
      %s190 = sphi 0, %s189
      %s206 = sphi 0, %s190
      %s214 = sphi 0, %s216
      %s217 = sphi 0, %s214
      %s218 = sphi 0, %s217
      %s234 = sphi 0, %s218
    $region4: #{tpu_custom_call.1} parent=1 // loop_header_branch
      %29 = sbr.rel (%p27) target = $region8
    $region5: #{tpu_custom_call.1} parent=1 // loop_body
      %s31 = ssub.s32 %s26, 1
      %s32 = ssub.s32 %s26, 2
      %s39 = sadd.s32 1, %s34
      %p40 = scmp.ge.s32.totalorder %s39, 1
      %s41 = scalar_select %p40, 0, %s39
      %s42 = sadd.s32 1, %s33
      %s43 = scalar_select %p40, %s42, %s33
      %p44 = scmp.ge.s32.totalorder %s43, 2
      %s45 = scalar_select %p44, 0, %s43
      %s46 = ssub.s32 %s33, %s45
      %s47 = ssub.s32 %s34, %s41
      %s48 = sor.u32 %s46, %s47
      %p49 = scmp.eq.s32.totalorder %s48, 0
      %s51 = sadd.s32 %s50, 1
      %s52 = scalar_select %p49, %s50, %s51
      %p55 = pneg %p49
      %p56 = scmp.eq.s32.totalorder %s26, 1
      %p57 = por %p55, %p56
      %p58 = scmp.ne.s32.totalorder %s50, %s53
      %p59 = scmp.eq.s32.totalorder %s26, 0
      %p60 = por %p58, %p59
      %p61 = scmp.ne.s32.totalorder %s50, %s53
      %p62 = scmp.eq.s32.totalorder %s31, 1
      %p63 = por %p61, %p62
      %p64 = scmp.ne.s32.totalorder %s53, %s54
      %p65 = scmp.eq.s32.totalorder %s31, 0
      %p66 = por %p64, %p65
      %p67 = scmp.ne.s32.totalorder %s53, %s54
      %p68 = scmp.eq.s32.totalorder %s32, 1
      %p69 = por %p67, %p68
      %p71 = scmp.ne.s32.totalorder %s54, %s70
      %p72 = scmp.eq.s32.totalorder %s32, 0
      %p73 = por %p71, %p72
      %s74 = ssub.s32 %s33, %s45
      %s75 = ssub.s32 %s34, %s41
      %s76 = sor.u32 %s74, %s75
      %p77 = scmp.eq.s32.totalorder %s76, 0
      %s79 = sadd.s32 %s78, 1
      %s80 = scalar_select %p77, %s78, %s79
      %p83 = pneg %p77
      %p84 = scmp.eq.s32.totalorder %s26, 1
      %p85 = por %p83, %p84
      %p86 = scmp.ne.s32.totalorder %s78, %s81
      %p87 = scmp.eq.s32.totalorder %s26, 0
      %p88 = por %p86, %p87
      %p89 = scmp.ne.s32.totalorder %s78, %s81
      %p90 = scmp.eq.s32.totalorder %s31, 1
      %p91 = por %p89, %p90
      %p92 = scmp.ne.s32.totalorder %s81, %s82
      %p93 = scmp.eq.s32.totalorder %s31, 0
      %p94 = por %p92, %p93
      %p95 = scmp.ne.s32.totalorder %s81, %s82
      %p96 = scmp.eq.s32.totalorder %s32, 1
      %p97 = por %p95, %p96
      %p99 = scmp.ne.s32.totalorder %s82, %s98
      %p100 = scmp.eq.s32.totalorder %s32, 0
      %p101 = por %p99, %p100
      %s102 = ssub.s32 %s33, %s45
      %p103 = scmp.eq.s32.totalorder %s102, 0
      %s105 = sadd.s32 %s104, 1
      %s106 = scalar_select %p103, %s104, %s105
      %p109 = pneg %p103
      %p110 = scmp.eq.s32.totalorder %s26, 1
      %p111 = por %p109, %p110
      %p112 = scmp.ne.s32.totalorder %s104, %s107
      %p113 = scmp.eq.s32.totalorder %s26, 0
      %p114 = por %p112, %p113
      %p115 = scmp.ne.s32.totalorder %s104, %s107
      %p116 = scmp.eq.s32.totalorder %s31, 1
      %p117 = por %p115, %p116
      %p118 = scmp.ne.s32.totalorder %s107, %s108
      %p119 = scmp.eq.s32.totalorder %s31, 0
      %p120 = por %p118, %p119
      %p121 = scmp.ne.s32.totalorder %s107, %s108
      %p122 = scmp.eq.s32.totalorder %s32, 1
      %p123 = por %p121, %p122
      %p125 = scmp.ne.s32.totalorder %s108, %s124
      %p126 = scmp.eq.s32.totalorder %s32, 0
      %p127 = por %p125, %p126
      %s128 = ssub.s32 %s33, %s45
      %p129 = scmp.eq.s32.totalorder %s128, 0
      %s131 = sadd.s32 %s130, 1
      %s132 = scalar_select %p129, %s130, %s131
      %p135 = pneg %p129
      %p136 = scmp.eq.s32.totalorder %s26, 1
      %p137 = por %p135, %p136
      %p138 = scmp.ne.s32.totalorder %s130, %s133
      %p139 = scmp.eq.s32.totalorder %s26, 0
      %p140 = por %p138, %p139
      %p141 = scmp.ne.s32.totalorder %s130, %s133
      %p142 = scmp.eq.s32.totalorder %s31, 1
      %p143 = por %p141, %p142
      %p144 = scmp.ne.s32.totalorder %s133, %s134
      %p145 = scmp.eq.s32.totalorder %s31, 0
      %p146 = por %p144, %p145
      %p147 = scmp.ne.s32.totalorder %s133, %s134
      %p148 = scmp.eq.s32.totalorder %s32, 1
      %p149 = por %p147, %p148
      %p151 = scmp.ne.s32.totalorder %s134, %s150
      %p152 = scmp.eq.s32.totalorder %s32, 0
      %p153 = por %p151, %p152
      %s154 = ssub.s32 %s33, %s45
      %s155 = ssub.s32 %s34, %s41
      %s156 = sor.u32 %s154, %s155
      %p157 = scmp.eq.s32.totalorder %s156, 0
      %s159 = sadd.s32 %s158, 1
      %s160 = scalar_select %p157, %s158, %s159
      %p163 = pneg %p157
      %p164 = scmp.eq.s32.totalorder %s26, 1
      %p165 = por %p163, %p164
      %p166 = scmp.ne.s32.totalorder %s158, %s161
      %p167 = scmp.eq.s32.totalorder %s26, 0
      %p168 = por %p166, %p167
      %p169 = scmp.ne.s32.totalorder %s158, %s161
      %p170 = scmp.eq.s32.totalorder %s31, 1
      %p171 = por %p169, %p170
      %p172 = scmp.ne.s32.totalorder %s161, %s162
      %p173 = scmp.eq.s32.totalorder %s31, 0
      %p174 = por %p172, %p173
      %p175 = scmp.ne.s32.totalorder %s161, %s162
      %p176 = scmp.eq.s32.totalorder %s32, 1
      %p177 = por %p175, %p176
      %p179 = scmp.ne.s32.totalorder %s162, %s178
      %p180 = scmp.eq.s32.totalorder %s32, 0
      %p181 = por %p179, %p180
      %s182 = ssub.s32 %s33, %s45
      %s183 = ssub.s32 %s34, %s41
      %s184 = sor.u32 %s182, %s183
      %p185 = scmp.eq.s32.totalorder %s184, 0
      %s187 = sadd.s32 %s186, 1
      %s188 = scalar_select %p185, %s186, %s187
      %p191 = pneg %p185
      %p192 = scmp.eq.s32.totalorder %s26, 1
      %p193 = por %p191, %p192
      %p194 = scmp.ne.s32.totalorder %s186, %s189
      %p195 = scmp.eq.s32.totalorder %s26, 0
      %p196 = por %p194, %p195
      %p197 = scmp.ne.s32.totalorder %s186, %s189
      %p198 = scmp.eq.s32.totalorder %s31, 1
      %p199 = por %p197, %p198
      %p200 = scmp.ne.s32.totalorder %s189, %s190
      %p201 = scmp.eq.s32.totalorder %s31, 0
      %p202 = por %p200, %p201
      %p203 = scmp.ne.s32.totalorder %s189, %s190
      %p204 = scmp.eq.s32.totalorder %s32, 1
      %p205 = por %p203, %p204
      %p207 = scmp.ne.s32.totalorder %s190, %s206
      %p208 = scmp.eq.s32.totalorder %s32, 0
      %p209 = por %p207, %p208
      %s210 = ssub.s32 %s33, %s45
      %s211 = ssub.s32 %s34, %s41
      %s212 = sor.u32 %s210, %s211
      %p213 = scmp.eq.s32.totalorder %s212, 0
      %s215 = sadd.s32 %s214, 1
      %s216 = scalar_select %p213, %s214, %s215
      %p219 = pneg %p213
      %p220 = scmp.eq.s32.totalorder %s26, 1
      %p221 = por %p219, %p220
      %p222 = scmp.ne.s32.totalorder %s214, %s217
      %p223 = scmp.eq.s32.totalorder %s26, 0
      %p224 = por %p222, %p223
      %p225 = scmp.ne.s32.totalorder %s214, %s217
      %p226 = scmp.eq.s32.totalorder %s31, 1
      %p227 = por %p225, %p226
      %p228 = scmp.ne.s32.totalorder %s217, %s218
      %p229 = scmp.eq.s32.totalorder %s31, 0
      %p230 = por %p228, %p229
      %p231 = scmp.ne.s32.totalorder %s217, %s218
      %p232 = scmp.eq.s32.totalorder %s32, 1
      %p233 = por %p231, %p232
      %p235 = scmp.ne.s32.totalorder %s218, %s234
      %p236 = scmp.eq.s32.totalorder %s32, 0
      %p237 = por %p235, %p236
      %p238 = scmp.le.s32.totalorder 1, %s26
      %p239 = scmp.lt.s32.totalorder %s26, 3
      %p240 = pnand %p238, %p239
      %p241 = pneg %p240
      // Predicated region
      $region9: #{tpu_custom_call.1} parent=5 // pred_check
        _
      $region10: #{tpu_custom_call.1} parent=5 // pred_check_branch
        %243 = sbr.rel (%p240) target = $region12
      $region11: #{tpu_custom_call.1} parent=5 // pred_region
        %s244 = ssub.s32 %s26, 1
        // Predicated region
        $region13: #{tpu_custom_call.1} parent=11 // pred_check
          %p245 = pneg %p120
        $region14: #{tpu_custom_call.1} parent=11 // pred_check_branch
          %247 = sbr.rel (%p245) target = $region16
        $region15: #{tpu_custom_call.1} parent=11 // pred_region
          %s249 = ssub.s32 512, 512
          %250 = vsyncadd [#allocation6], %s249
          %s251 = smul.addr %s35, 4
          %s252 = smul.addr %s251, 128
          %s253 = scalar_lea.hbm %s2, %s252
          %s254 = sshll.u32 [#allocation7], 4
          %s255 = int_to_ptr.vmem [resolvable:$true] %s254
          %260 = dma.hbm_to_vmem [thread:$0]  %s253, 512, %s255, [#allocation6], 128, 128, 8
        $region16: #{tpu_custom_call.1} parent=11 // pred_fallthru
          _
        // Predicated region
        $region17: #{tpu_custom_call.1} parent=11 // pred_check
          %p261 = pneg %p146
        $region18: #{tpu_custom_call.1} parent=11 // pred_check_branch
          %263 = sbr.rel (%p261) target = $region20
        $region19: #{tpu_custom_call.1} parent=11 // pred_region
          %s265 = ssub.s32 512, 512
          %266 = vsyncadd [#allocation9], %s265
          %s267 = smul.addr %s35, 4
          %s268 = smul.addr %s267, 128
          %s269 = scalar_lea.hbm %s3, %s268
          %s270 = sshll.u32 [#allocation8], 4
          %s271 = int_to_ptr.vmem [resolvable:$true] %s270
          %276 = dma.hbm_to_vmem [thread:$0]  %s269, 512, %s271, [#allocation9], 128, 128, 8
        $region20: #{tpu_custom_call.1} parent=11 // pred_fallthru
          _
      $region12: #{tpu_custom_call.1} parent=5 // pred_fallthru
        _
      %p277 = scmp.lt.s32.totalorder %s26, 2
      // Predicated region
      $region21: #{tpu_custom_call.1} parent=5 // pred_check
        %p278 = pneg %p277
      $region22: #{tpu_custom_call.1} parent=5 // pred_check_branch
        %280 = sbr.rel (%p278) target = $region24
      $region23: #{tpu_custom_call.1} parent=5 // pred_region
        // Predicated region
        $region25: #{tpu_custom_call.1} parent=23 // pred_check
          %p281 = pneg %p60
        $region26: #{tpu_custom_call.1} parent=23 // pred_check_branch
          %283 = sbr.rel (%p281) target = $region28
        $region27: #{tpu_custom_call.1} parent=23 // pred_region
          %s284 = sand.u32 %s50, 1
          %s285 = scalar_lea.sflag [#allocation3], %s284
          %s286 = sand.u32 %s50, 1
          %s287 = smul.addr %s286, 4
          %s288 = scalar_lea.vmem [#allocation2], %s287
          %s290 = ssub.s32 64, 64
          %291 = vsyncadd %s285, %s290
          %s292 = sadd.s32 %s34, %s33
          %s293 = smul.addr %s292, 64
          %s294 = scalar_lea.hbm %s0, %s293
          %s296 = sshll.u32 %s288, 4
          %s297 = int_to_ptr.vmem [resolvable:$true] %s296
          %299 = dma.hbm_to_vmem [thread:$0]  %s294, 64, %s297, %s285
        $region28: #{tpu_custom_call.1} parent=23 // pred_fallthru
          _
        // Predicated region
        $region29: #{tpu_custom_call.1} parent=23 // pred_check
          %p300 = pneg %p88
        $region30: #{tpu_custom_call.1} parent=23 // pred_check_branch
          %302 = sbr.rel (%p300) target = $region32
        $region31: #{tpu_custom_call.1} parent=23 // pred_region
          %s303 = sand.u32 %s26, 1
          %s304 = scalar_lea.sflag [#allocation6], %s303
          %s305 = sand.u32 %s78, 1
          %s306 = smul.addr %s305, 32
          %s307 = scalar_lea.vmem [#allocation5], %s306
          %s309 = ssub.s32 512, 512
          %310 = vsyncadd %s304, %s309
          %s311 = smul.addr %s33, 4
          %s312 = sadd.s32 %s34, %s311
          %s313 = smul.addr %s312, 128
          %s314 = scalar_lea.hbm %s1, %s313
          %s315 = sshll.u32 %s307, 4
          %s316 = int_to_ptr.vmem [resolvable:$true] %s315
          %321 = dma.hbm_to_vmem [thread:$0]  %s314, 512, %s316, %s304, 128, 128, 8
        $region32: #{tpu_custom_call.1} parent=23 // pred_fallthru
          _
      $region24: #{tpu_custom_call.1} parent=5 // pred_fallthru
        _
      %p322 = scmp.le.s32.totalorder 1, %s26
      %p323 = scmp.lt.s32.totalorder %s26, 3
      %p324 = pnand %p322, %p323
      %p325 = pneg %p324
      // Predicated region
      $region33: #{tpu_custom_call.1} parent=5 // pred_check
        _
      $region34: #{tpu_custom_call.1} parent=5 // pred_check_branch
        %327 = sbr.rel (%p324) target = $region36
      $region35: #{tpu_custom_call.1} parent=5 // pred_region
        %s328 = ssub.s32 %s26, 1
        %s329 = sand.u32 %s53, 1
        %s330 = scalar_lea.sflag [#allocation3], %s329
        %s331 = sand.u32 %s53, 1
        %s332 = smul.addr %s331, 4
        %s333 = scalar_lea.vmem [#allocation2], %s332
        // Predicated region
        $region37: #{tpu_custom_call.1} parent=35 // pred_check
          %p334 = pneg %p66
        $region38: #{tpu_custom_call.1} parent=35 // pred_check_branch
          %336 = sbr.rel (%p334) target = $region40
        $region39: #{tpu_custom_call.1} parent=35 // pred_region
          %337 = dma.done %s330, 64
        $region40: #{tpu_custom_call.1} parent=35 // pred_fallthru
          _
        %s338 = sand.u32 %s31, 1
        %s339 = scalar_lea.sflag [#allocation6], %s338
        %s340 = sand.u32 %s81, 1
        %s341 = smul.addr %s340, 32
        %s342 = scalar_lea.vmem [#allocation5], %s341
        // Predicated region
        $region41: #{tpu_custom_call.1} parent=35 // pred_check
          %p343 = pneg %p94
        $region42: #{tpu_custom_call.1} parent=35 // pred_check_branch
          %345 = sbr.rel (%p343) target = $region44
        $region43: #{tpu_custom_call.1} parent=35 // pred_region
          %346 = dma.done %s339, 512
        $region44: #{tpu_custom_call.1} parent=35 // pred_fallthru
          _
        // Predicated region
        $region45: #{tpu_custom_call.1} parent=35 // pred_check
          %p347 = pneg %p120
        $region46: #{tpu_custom_call.1} parent=35 // pred_check_branch
          %349 = sbr.rel (%p347) target = $region48
        $region47: #{tpu_custom_call.1} parent=35 // pred_region
          %350 = dma.done [#allocation6], 512
        $region48: #{tpu_custom_call.1} parent=35 // pred_fallthru
          _
        // Predicated region
        $region49: #{tpu_custom_call.1} parent=35 // pred_check
          %p351 = pneg %p146
        $region50: #{tpu_custom_call.1} parent=35 // pred_check_branch
          %353 = sbr.rel (%p351) target = $region52
        $region51: #{tpu_custom_call.1} parent=35 // pred_region
          %354 = dma.done [#allocation9], 512
        $region52: #{tpu_custom_call.1} parent=35 // pred_fallthru
          _
        %s355 = sand.u32 %s53, 1
        %s356 = scalar_lea.sflag [#allocation3], %s355
        %s357 = sand.u32 %s53, 1
        %s358 = smul.addr %s357, 4
        %s359 = scalar_lea.vmem [#allocation2], %s358
        %p360 = pneg %p66
        %p361 = pneg %p63
        %s362 = sand.u32 %s31, 1
        %s363 = scalar_lea.sflag [#allocation6], %s362
        %s364 = sand.u32 %s81, 1
        %s365 = smul.addr %s364, 32
        %s366 = scalar_lea.vmem [#allocation5], %s365
        %p367 = pneg %p94
        %p368 = pneg %p91
        %p369 = pneg %p120
        %p370 = pneg %p117
        %p371 = pneg %p146
        %p372 = pneg %p143
        %p373 = pneg %p174
        %p374 = pneg %p171
        %s375 = sand.u32 %s161, 1
        %s376 = scalar_lea.sflag [#allocation4], %s375
        %s377 = sand.u32 %s161, 1
        %s378 = smul.addr %s377, 32
        %s379 = scalar_lea.vmem [#allocation10], %s378
        %p380 = pneg %p202
        %p381 = pneg %p199
        %s382 = sand.u32 %s31, 1
        %s383 = scalar_lea.sflag [#allocation12], %s382
        %s384 = sand.u32 %s189, 1
        %s385 = smul.addr %s384, 32
        %s386 = scalar_lea.vmem [#allocation11], %s385
        %p387 = pneg %p230
        %p388 = pneg %p227
        %s389 = sand.u32 %s31, 1
        %s390 = scalar_lea.sflag [#allocation12], %s389
        %s391 = sand.u32 %s217, 1
        %s392 = smul.addr %s391, 32
        %s393 = scalar_lea.vmem [#allocation13], %s392
        %s394 = smul.u32 %s36, 8
        %v395 = vlaneseq
        %v396 = vshrl.u32 %v395, 7
        %v397 = vstv %s394
        %v398 = vadd.s32 %v397, %v396
        %v399 = vlaneseq
        %v400 = vand.u32 %v399, 127
        %vm401 = vcmp.gt.s32.totalorder %v400, %v398
        %v402 = vsub.s32 %v398, %v400
        %v403 = vcvt.s32.f32 %v402
        %v404 = vmul.f32 %v403, -0.5
        %v405 = vmul.f32 %v404, %v403
        %v406 = vld [vmem:[%s333] sm:$0x1]
        %v407 = vrcp.pop %v406
        %v408 = vlaneseq
        %v409 = vshrl.u32 %v408, 7
        %v410 = vsub.s32 0, %v409
        %v411 = vrot.slane %v407, %v410
        %413 = vbcast.lane.b32.xlu0 %v411, 256
        %v414 = vpop.permute.xlu0 %413
        %v415 = vmul.f32 %v414, 0.3989423
        %v416 = vmul.f32 %v414, %v414
        %v417 = vmul.f32 %v405, %v416
        %v418 = vmul.f32 %v417, 1.442695
        %v419 = vpow.pop %v418
        %v420 = vmul.f32 %v415, %v419
        %vm421 = vcmask 64512
        %422 = vst.msk [vmem:[%s393] sm:$0xff] %vm421, %v420
        %v423 = vld [vmem:[%s333 + $0x1] sm:$0x1]
        %v424 = vrcp.pop %v423
        %v425 = vlaneseq
        %v426 = vshrl.u32 %v425, 7
        %v427 = vsub.s32 0, %v426
        %v428 = vrot.slane %v424, %v427
        %430 = vbcast.lane.b32.xlu0 %v428, 256
        %v431 = vpop.permute.xlu0 %430
        %v432 = vmul.f32 %v431, 0.3989423
        %v433 = vmul.f32 %v431, %v431
        %v434 = vmul.f32 %v405, %v433
        %v435 = vmul.f32 %v434, 1.442695
        %v436 = vpow.pop %v435
        %v437 = vmul.f32 %v432, %v436
        %s438 = scalar_lea.vmem %s393, 8 [#allocation13]
        %439 = vst.msk [vmem:[%s438] sm:$0xff] %vm421, %v437
        %v440 = vld [vmem:[%s333 + $0x2] sm:$0x1]
        %v441 = vrcp.pop %v440
        %v442 = vlaneseq
        %v443 = vshrl.u32 %v442, 7
        %v444 = vsub.s32 0, %v443
        %v445 = vrot.slane %v441, %v444
        %447 = vbcast.lane.b32.xlu0 %v445, 256
        %v448 = vpop.permute.xlu0 %447
        %v449 = vmul.f32 %v448, 0.3989423
        %v450 = vmul.f32 %v448, %v448
        %v451 = vmul.f32 %v405, %v450
        %v452 = vmul.f32 %v451, 1.442695
        %v453 = vpow.pop %v452
        %v454 = vmul.f32 %v449, %v453
        %s455 = scalar_lea.vmem %s393, 16 [#allocation13]
        %456 = vst.msk [vmem:[%s455] sm:$0xff] %vm421, %v454
        %v457 = vld [vmem:[%s333 + $0x3] sm:$0x1]
        %v458 = vrcp.pop %v457
        %v459 = vlaneseq
        %v460 = vshrl.u32 %v459, 7
        %v461 = vsub.s32 0, %v460
        %v462 = vrot.slane %v458, %v461
        %464 = vbcast.lane.b32.xlu0 %v462, 256
        %v465 = vpop.permute.xlu0 %464
        %v466 = vmul.f32 %v465, 0.3989423
        %v467 = vmul.f32 %v465, %v465
        %v468 = vmul.f32 %v405, %v467
        %v469 = vmul.f32 %v468, 1.442695
        %v470 = vpow.pop %v469
        %v471 = vmul.f32 %v466, %v470
        %s472 = scalar_lea.vmem %s393, 24 [#allocation13]
        %473 = vst.msk [vmem:[%s472] sm:$0xff] %vm421, %v471
        %v474 = vld [vmem:[%s342] sm:$0xff]
        %v475 = vld [vmem:[%s342 + $0x8] sm:$0xff]
        %v476 = vld [vmem:[%s342 + $0x10] sm:$0xff]
        %v477 = vld [vmem:[%s342 + $0x18] sm:$0xff]
        %v478 = vld [vmem:[#allocation7] sm:$0xff]
        %v479 = vld [vmem:[#allocation7 + $0x8] sm:$0xff]
        %v480 = vld [vmem:[#allocation7 + $0x10] sm:$0xff]
        %v481 = vld [vmem:[#allocation7 + $0x18] sm:$0xff]
        %v482 = vld [vmem:[#allocation8] sm:$0xff]
        %v483 = vld [vmem:[#allocation8 + $0x8] sm:$0xff]
        %v484 = vld [vmem:[#allocation8 + $0x10] sm:$0xff]
        %v485 = vld [vmem:[#allocation8 + $0x18] sm:$0xff]
        %vm486 = vcmask 261120
        %v488 = vsel %vm486, %v474, 0
        %v491 = vsel %vm486, %v478, 0
        %493 = vmatprep.subr.mxu0 0.0
        %494 = vmatpush1.xpose.msra.mxu0 %v491
        %495 = vmatprep.subr.mxu0 0.0
        %496 = vmatpush1.xpose.msra.mxu0 0.0
        %497 = vmatprep.subr.mxu0 0.0
        %498 = vmatpush1.xpose.msra.mxu0 0.0
        %499 = vmatprep.subr.mxu0 0.0
        %500 = vmatpush1.xpose.msra.mxu0 0.0
        %501 = vmatprep.subr.mxu0 0.0
        %502 = vmatpush1.xpose.msra.mxu0 0.0
        %503 = vmatprep.subr.mxu0 0.0
        %504 = vmatpush1.xpose.msra.mxu0 0.0
        %505 = vmatprep.subr.mxu0 0.0
        %506 = vmatpush1.xpose.msra.mxu0 0.0
        %507 = vmatprep.subr.mxu0 0.0
        %508 = vmatpush1.xpose.msra.mxu0 0.0
        %509 = vmatprep.subr.mxu0 0.0
        %510 = vmatpush1.xpose.msra.mxu0 0.0
        %511 = vmatprep.subr.mxu0 0.0
        %512 = vmatpush1.xpose.msra.mxu0 0.0
        %513 = vmatprep.subr.mxu0 0.0
        %514 = vmatpush1.xpose.msra.mxu0 0.0
        %515 = vmatprep.subr.mxu0 0.0
        %516 = vmatpush1.xpose.msra.mxu0 0.0
        %517 = vmatprep.subr.mxu0 0.0
        %518 = vmatpush1.xpose.msra.mxu0 0.0
        %519 = vmatprep.subr.mxu0 0.0
        %520 = vmatpush1.xpose.msra.mxu0 0.0
        %521 = vmatprep.subr.mxu0 0.0
        %522 = vmatpush1.xpose.msra.mxu0 0.0
        %523 = vmatprep.subr.mxu0 0.0
        %524 = vmatpush1.xpose.msra.mxu0 0.0
        %525 = vmatprep.subr.mxu0 0.0
        %526 = vmatpush1.xpose.msra.mxu0 0.0
        %527 = vmatprep.subr.mxu0 0.0
        %528 = vmatpush1.xpose.msra.mxu0 0.0
        %529 = vmatprep.subr.mxu0 0.0
        %530 = vmatpush1.xpose.msra.mxu0 0.0
        %531 = vmatprep.subr.mxu0 0.0
        %532 = vmatpush1.xpose.msra.mxu0 0.0
        %533 = vmatprep.subr.mxu0 0.0
        %534 = vmatpush1.xpose.msra.mxu0 0.0
        %535 = vmatprep.subr.mxu0 0.0
        %536 = vmatpush1.xpose.msra.mxu0 0.0
        %537 = vmatprep.subr.mxu0 0.0
        %538 = vmatpush1.xpose.msra.mxu0 0.0
        %539 = vmatprep.subr.mxu0 0.0
        %540 = vmatpush1.xpose.msra.mxu0 0.0
        %541 = vmatprep.subr.mxu0 0.0
        %542 = vmatpush1.xpose.msra.mxu0 0.0
        %543 = vmatprep.subr.mxu0 0.0
        %544 = vmatpush1.xpose.msra.mxu0 0.0
        %545 = vmatprep.subr.mxu0 0.0
        %546 = vmatpush1.xpose.msra.mxu0 0.0
        %547 = vmatprep.subr.mxu0 0.0
        %548 = vmatpush1.xpose.msra.mxu0 0.0
        %549 = vmatprep.subr.mxu0 0.0
        %550 = vmatpush1.xpose.msra.mxu0 0.0
        %551 = vmatprep.subr.mxu0 0.0
        %552 = vmatpush1.xpose.msra.mxu0 0.0
        %553 = vmatprep.subr.mxu0 0.0
        %554 = vmatpush1.xpose.msra.mxu0 0.0
        %555 = vmatprep.subr.mxu0 0.0
        %556 = vmatpush1.xpose.msra.mxu0 0.0
        %557 = vmatprep.mubr.f32.mxu0 0.0
        %558 = vmatmul.mubr.f32.gmra.mrb[0].mxu0 %v488
        %v559 = vpop.f32.mrb[0].mxu0
        %v560 = vadd.f32 0.0, %v559
        %v561 = vpop.f32.mrb[0].mxu0
        %562 = vdwg.mxu0
        %v564 = vsel %vm486, %v475, 0
        %v567 = vsel %vm486, %v479, 0
        %569 = vmatprep.subr.mxu0 0.0
        %570 = vmatpush1.xpose.msra.mxu0 %v567
        %571 = vmatprep.subr.mxu0 0.0
        %572 = vmatpush1.xpose.msra.mxu0 0.0
        %573 = vmatprep.subr.mxu0 0.0
        %574 = vmatpush1.xpose.msra.mxu0 0.0
        %575 = vmatprep.subr.mxu0 0.0
        %576 = vmatpush1.xpose.msra.mxu0 0.0
        %577 = vmatprep.subr.mxu0 0.0
        %578 = vmatpush1.xpose.msra.mxu0 0.0
        %579 = vmatprep.subr.mxu0 0.0
        %580 = vmatpush1.xpose.msra.mxu0 0.0
        %581 = vmatprep.subr.mxu0 0.0
        %582 = vmatpush1.xpose.msra.mxu0 0.0
        %583 = vmatprep.subr.mxu0 0.0
        %584 = vmatpush1.xpose.msra.mxu0 0.0
        %585 = vmatprep.subr.mxu0 0.0
        %586 = vmatpush1.xpose.msra.mxu0 0.0
        %587 = vmatprep.subr.mxu0 0.0
        %588 = vmatpush1.xpose.msra.mxu0 0.0
        %589 = vmatprep.subr.mxu0 0.0
        %590 = vmatpush1.xpose.msra.mxu0 0.0
        %591 = vmatprep.subr.mxu0 0.0
        %592 = vmatpush1.xpose.msra.mxu0 0.0
        %593 = vmatprep.subr.mxu0 0.0
        %594 = vmatpush1.xpose.msra.mxu0 0.0
        %595 = vmatprep.subr.mxu0 0.0
        %596 = vmatpush1.xpose.msra.mxu0 0.0
        %597 = vmatprep.subr.mxu0 0.0
        %598 = vmatpush1.xpose.msra.mxu0 0.0
        %599 = vmatprep.subr.mxu0 0.0
        %600 = vmatpush1.xpose.msra.mxu0 0.0
        %601 = vmatprep.subr.mxu0 0.0
        %602 = vmatpush1.xpose.msra.mxu0 0.0
        %603 = vmatprep.subr.mxu0 0.0
        %604 = vmatpush1.xpose.msra.mxu0 0.0
        %605 = vmatprep.subr.mxu0 0.0
        %606 = vmatpush1.xpose.msra.mxu0 0.0
        %607 = vmatprep.subr.mxu0 0.0
        %608 = vmatpush1.xpose.msra.mxu0 0.0
        %609 = vmatprep.subr.mxu0 0.0
        %610 = vmatpush1.xpose.msra.mxu0 0.0
        %611 = vmatprep.subr.mxu0 0.0
        %612 = vmatpush1.xpose.msra.mxu0 0.0
        %613 = vmatprep.subr.mxu0 0.0
        %614 = vmatpush1.xpose.msra.mxu0 0.0
        %615 = vmatprep.subr.mxu0 0.0
        %616 = vmatpush1.xpose.msra.mxu0 0.0
        %617 = vmatprep.subr.mxu0 0.0
        %618 = vmatpush1.xpose.msra.mxu0 0.0
        %619 = vmatprep.subr.mxu0 0.0
        %620 = vmatpush1.xpose.msra.mxu0 0.0
        %621 = vmatprep.subr.mxu0 0.0
        %622 = vmatpush1.xpose.msra.mxu0 0.0
        %623 = vmatprep.subr.mxu0 0.0
        %624 = vmatpush1.xpose.msra.mxu0 0.0
        %625 = vmatprep.subr.mxu0 0.0
        %626 = vmatpush1.xpose.msra.mxu0 0.0
        %627 = vmatprep.subr.mxu0 0.0
        %628 = vmatpush1.xpose.msra.mxu0 0.0
        %629 = vmatprep.subr.mxu0 0.0
        %630 = vmatpush1.xpose.msra.mxu0 0.0
        %631 = vmatprep.subr.mxu0 0.0
        %632 = vmatpush1.xpose.msra.mxu0 0.0
        %633 = vmatprep.mubr.f32.mxu0 0.0
        %634 = vmatmul.mubr.f32.gmra.mrb[0].mxu0 %v564
        %v635 = vpop.f32.mrb[0].mxu0
        %v636 = vadd.f32 0.0, %v635
        %v637 = vpop.f32.mrb[0].mxu0
        %638 = vdwg.mxu0
        %v640 = vsel %vm486, %v476, 0
        %v643 = vsel %vm486, %v480, 0
        %645 = vmatprep.subr.mxu0 0.0
        %646 = vmatpush1.xpose.msra.mxu0 %v643
        %647 = vmatprep.subr.mxu0 0.0
        %648 = vmatpush1.xpose.msra.mxu0 0.0
        %649 = vmatprep.subr.mxu0 0.0
        %650 = vmatpush1.xpose.msra.mxu0 0.0
        %651 = vmatprep.subr.mxu0 0.0
        %652 = vmatpush1.xpose.msra.mxu0 0.0
        %653 = vmatprep.subr.mxu0 0.0
        %654 = vmatpush1.xpose.msra.mxu0 0.0
        %655 = vmatprep.subr.mxu0 0.0
        %656 = vmatpush1.xpose.msra.mxu0 0.0
        %657 = vmatprep.subr.mxu0 0.0
        %658 = vmatpush1.xpose.msra.mxu0 0.0
        %659 = vmatprep.subr.mxu0 0.0
        %660 = vmatpush1.xpose.msra.mxu0 0.0
        %661 = vmatprep.subr.mxu0 0.0
        %662 = vmatpush1.xpose.msra.mxu0 0.0
        %663 = vmatprep.subr.mxu0 0.0
        %664 = vmatpush1.xpose.msra.mxu0 0.0
        %665 = vmatprep.subr.mxu0 0.0
        %666 = vmatpush1.xpose.msra.mxu0 0.0
        %667 = vmatprep.subr.mxu0 0.0
        %668 = vmatpush1.xpose.msra.mxu0 0.0
        %669 = vmatprep.subr.mxu0 0.0
        %670 = vmatpush1.xpose.msra.mxu0 0.0
        %671 = vmatprep.subr.mxu0 0.0
        %672 = vmatpush1.xpose.msra.mxu0 0.0
        %673 = vmatprep.subr.mxu0 0.0
        %674 = vmatpush1.xpose.msra.mxu0 0.0
        %675 = vmatprep.subr.mxu0 0.0
        %676 = vmatpush1.xpose.msra.mxu0 0.0
        %677 = vmatprep.subr.mxu0 0.0
        %678 = vmatpush1.xpose.msra.mxu0 0.0
        %679 = vmatprep.subr.mxu0 0.0
        %680 = vmatpush1.xpose.msra.mxu0 0.0
        %681 = vmatprep.subr.mxu0 0.0
        %682 = vmatpush1.xpose.msra.mxu0 0.0
        %683 = vmatprep.subr.mxu0 0.0
        %684 = vmatpush1.xpose.msra.mxu0 0.0
        %685 = vmatprep.subr.mxu0 0.0
        %686 = vmatpush1.xpose.msra.mxu0 0.0
        %687 = vmatprep.subr.mxu0 0.0
        %688 = vmatpush1.xpose.msra.mxu0 0.0
        %689 = vmatprep.subr.mxu0 0.0
        %690 = vmatpush1.xpose.msra.mxu0 0.0
        %691 = vmatprep.subr.mxu0 0.0
        %692 = vmatpush1.xpose.msra.mxu0 0.0
        %693 = vmatprep.subr.mxu0 0.0
        %694 = vmatpush1.xpose.msra.mxu0 0.0
        %695 = vmatprep.subr.mxu0 0.0
        %696 = vmatpush1.xpose.msra.mxu0 0.0
        %697 = vmatprep.subr.mxu0 0.0
        %698 = vmatpush1.xpose.msra.mxu0 0.0
        %699 = vmatprep.subr.mxu0 0.0
        %700 = vmatpush1.xpose.msra.mxu0 0.0
        %701 = vmatprep.subr.mxu0 0.0
        %702 = vmatpush1.xpose.msra.mxu0 0.0
        %703 = vmatprep.subr.mxu0 0.0
        %704 = vmatpush1.xpose.msra.mxu0 0.0
        %705 = vmatprep.subr.mxu0 0.0
        %706 = vmatpush1.xpose.msra.mxu0 0.0
        %707 = vmatprep.subr.mxu0 0.0
        %708 = vmatpush1.xpose.msra.mxu0 0.0
        %709 = vmatprep.mubr.f32.mxu0 0.0
        %710 = vmatmul.mubr.f32.gmra.mrb[0].mxu0 %v640
        %v711 = vpop.f32.mrb[0].mxu0
        %v712 = vadd.f32 0.0, %v711
        %v713 = vpop.f32.mrb[0].mxu0
        %714 = vdwg.mxu0
        %v716 = vsel %vm486, %v477, 0
        %v719 = vsel %vm486, %v481, 0
        %721 = vmatprep.subr.mxu0 0.0
        %722 = vmatpush1.xpose.msra.mxu0 %v719
        %723 = vmatprep.subr.mxu0 0.0
        %724 = vmatpush1.xpose.msra.mxu0 0.0
        %725 = vmatprep.subr.mxu0 0.0
        %726 = vmatpush1.xpose.msra.mxu0 0.0
        %727 = vmatprep.subr.mxu0 0.0
        %728 = vmatpush1.xpose.msra.mxu0 0.0
        %729 = vmatprep.subr.mxu0 0.0
        %730 = vmatpush1.xpose.msra.mxu0 0.0
        %731 = vmatprep.subr.mxu0 0.0
        %732 = vmatpush1.xpose.msra.mxu0 0.0
        %733 = vmatprep.subr.mxu0 0.0
        %734 = vmatpush1.xpose.msra.mxu0 0.0
        %735 = vmatprep.subr.mxu0 0.0
        %736 = vmatpush1.xpose.msra.mxu0 0.0
        %737 = vmatprep.subr.mxu0 0.0
        %738 = vmatpush1.xpose.msra.mxu0 0.0
        %739 = vmatprep.subr.mxu0 0.0
        %740 = vmatpush1.xpose.msra.mxu0 0.0
        %741 = vmatprep.subr.mxu0 0.0
        %742 = vmatpush1.xpose.msra.mxu0 0.0
        %743 = vmatprep.subr.mxu0 0.0
        %744 = vmatpush1.xpose.msra.mxu0 0.0
        %745 = vmatprep.subr.mxu0 0.0
        %746 = vmatpush1.xpose.msra.mxu0 0.0
        %747 = vmatprep.subr.mxu0 0.0
        %748 = vmatpush1.xpose.msra.mxu0 0.0
        %749 = vmatprep.subr.mxu0 0.0
        %750 = vmatpush1.xpose.msra.mxu0 0.0
        %751 = vmatprep.subr.mxu0 0.0
        %752 = vmatpush1.xpose.msra.mxu0 0.0
        %753 = vmatprep.subr.mxu0 0.0
        %754 = vmatpush1.xpose.msra.mxu0 0.0
        %755 = vmatprep.subr.mxu0 0.0
        %756 = vmatpush1.xpose.msra.mxu0 0.0
        %757 = vmatprep.subr.mxu0 0.0
        %758 = vmatpush1.xpose.msra.mxu0 0.0
        %759 = vmatprep.subr.mxu0 0.0
        %760 = vmatpush1.xpose.msra.mxu0 0.0
        %761 = vmatprep.subr.mxu0 0.0
        %762 = vmatpush1.xpose.msra.mxu0 0.0
        %763 = vmatprep.subr.mxu0 0.0
        %764 = vmatpush1.xpose.msra.mxu0 0.0
        %765 = vmatprep.subr.mxu0 0.0
        %766 = vmatpush1.xpose.msra.mxu0 0.0
        %767 = vmatprep.subr.mxu0 0.0
        %768 = vmatpush1.xpose.msra.mxu0 0.0
        %769 = vmatprep.subr.mxu0 0.0
        %770 = vmatpush1.xpose.msra.mxu0 0.0
        %771 = vmatprep.subr.mxu0 0.0
        %772 = vmatpush1.xpose.msra.mxu0 0.0
        %773 = vmatprep.subr.mxu0 0.0
        %774 = vmatpush1.xpose.msra.mxu0 0.0
        %775 = vmatprep.subr.mxu0 0.0
        %776 = vmatpush1.xpose.msra.mxu0 0.0
        %777 = vmatprep.subr.mxu0 0.0
        %778 = vmatpush1.xpose.msra.mxu0 0.0
        %779 = vmatprep.subr.mxu0 0.0
        %780 = vmatpush1.xpose.msra.mxu0 0.0
        %781 = vmatprep.subr.mxu0 0.0
        %782 = vmatpush1.xpose.msra.mxu0 0.0
        %783 = vmatprep.subr.mxu0 0.0
        %784 = vmatpush1.xpose.msra.mxu0 0.0
        %785 = vmatprep.mubr.f32.mxu0 0.0
        %786 = vmatmul.mubr.f32.gmra.mrb[0].mxu0 %v716
        %v787 = vpop.f32.mrb[0].mxu0
        %v788 = vadd.f32 0.0, %v787
        %v789 = vpop.f32.mrb[0].mxu0
        %790 = vdwg.mxu0
        %v791 = vmul.f32 %v560, 0.17677669
        %v792 = vmul.f32 %v636, 0.17677669
        %v793 = vmul.f32 %v712, 0.17677669
        %v794 = vmul.f32 %v788, 0.17677669
        %v795 = vsel %vm401, 1, 0
        %vm796 = vcmp.eq.s32.totalorder %v795, 1
        %v797 = vsel %vm796, -inf, %v791
        %v798 = vsel %vm796, -inf, %v792
        %v799 = vsel %vm796, -inf, %v793
        %v800 = vsel %vm796, -inf, %v794
        %v801 = vsel %vm421, %v797, -inf
        %802 = vmax.xlane.f32.xlu0 %v801
        %v803 = vpop.xlane.xlu0 %802
        %v804 = vsel %vm421, %v798, -inf
        %805 = vmax.xlane.f32.xlu0 %v804
        %v806 = vpop.xlane.xlu0 %805
        %v807 = vsel %vm421, %v799, -inf
        %808 = vmax.xlane.f32.xlu0 %v807
        %v809 = vpop.xlane.xlu0 %808
        %v810 = vsel %vm421, %v800, -inf
        %811 = vmax.xlane.f32.xlu0 %v810
        %v812 = vpop.xlane.xlu0 %811
        %v813 = vsub.f32 %v797, %v803
        %v814 = vsub.f32 %v798, %v806
        %v815 = vsub.f32 %v799, %v809
        %v816 = vsub.f32 %v800, %v812
        %v817 = vmul.f32 %v813, 1.442695
        %v818 = vpow.pop %v817
        %v819 = vmul.f32 %v814, 1.442695
        %v820 = vpow.pop %v819
        %v821 = vmul.f32 %v815, 1.442695
        %v822 = vpow.pop %v821
        %v823 = vmul.f32 %v816, 1.442695
        %v824 = vpow.pop %v823
        %v825 = vsel %vm421, %v818, 0.0
        %826 = vadd.xlane.f32.xlu0 %v825
        %v827 = vpop.xlane.xlu0 %826
        %v828 = vsel %vm421, %v820, 0.0
        %829 = vadd.xlane.f32.xlu0 %v828
        %v830 = vpop.xlane.xlu0 %829
        %v831 = vsel %vm421, %v822, 0.0
        %832 = vadd.xlane.f32.xlu0 %v831
        %v833 = vpop.xlane.xlu0 %832
        %v834 = vsel %vm421, %v824, 0.0
        %835 = vadd.xlane.f32.xlu0 %v834
        %v836 = vpop.xlane.xlu0 %835
        %v837 = vrcp.pop %v827
        %v838 = vrcp.pop %v830
        %v839 = vrcp.pop %v833
        %v840 = vrcp.pop %v836
        %v841 = vmul.f32 %v818, %v837
        %v842 = vmul.f32 %v820, %v838
        %v843 = vmul.f32 %v822, %v839
        %v844 = vmul.f32 %v824, %v840
        %v846 = vsel %vm421, %v841, 0
        %848 = vmatprep.subr.mxu0 0.0
        %849 = vmatpush1.msra.mxu0 %v482
        %850 = vmatprep.subr.mxu0 0.0
        %851 = vmatpush1.msra.mxu0 0.0
        %852 = vmatprep.subr.mxu0 0.0
        %853 = vmatpush1.msra.mxu0 0.0
        %854 = vmatprep.subr.mxu0 0.0
        %855 = vmatpush1.msra.mxu0 0.0
        %856 = vmatprep.subr.mxu0 0.0
        %857 = vmatpush1.msra.mxu0 0.0
        %858 = vmatprep.subr.mxu0 0.0
        %859 = vmatpush1.msra.mxu0 0.0
        %860 = vmatprep.subr.mxu0 0.0
        %861 = vmatpush1.msra.mxu0 0.0
        %862 = vmatprep.subr.mxu0 0.0
        %863 = vmatpush1.msra.mxu0 0.0
        %864 = vmatprep.subr.mxu0 0.0
        %865 = vmatpush1.msra.mxu0 0.0
        %866 = vmatprep.subr.mxu0 0.0
        %867 = vmatpush1.msra.mxu0 0.0
        %868 = vmatprep.subr.mxu0 0.0
        %869 = vmatpush1.msra.mxu0 0.0
        %870 = vmatprep.subr.mxu0 0.0
        %871 = vmatpush1.msra.mxu0 0.0
        %872 = vmatprep.subr.mxu0 0.0
        %873 = vmatpush1.msra.mxu0 0.0
        %874 = vmatprep.subr.mxu0 0.0
        %875 = vmatpush1.msra.mxu0 0.0
        %876 = vmatprep.subr.mxu0 0.0
        %877 = vmatpush1.msra.mxu0 0.0
        %878 = vmatprep.subr.mxu0 0.0
        %879 = vmatpush1.msra.mxu0 0.0
        %880 = vmatprep.subr.mxu0 0.0
        %881 = vmatpush1.msra.mxu0 0.0
        %882 = vmatprep.subr.mxu0 0.0
        %883 = vmatpush1.msra.mxu0 0.0
        %884 = vmatprep.subr.mxu0 0.0
        %885 = vmatpush1.msra.mxu0 0.0
        %886 = vmatprep.subr.mxu0 0.0
        %887 = vmatpush1.msra.mxu0 0.0
        %888 = vmatprep.subr.mxu0 0.0
        %889 = vmatpush1.msra.mxu0 0.0
        %890 = vmatprep.subr.mxu0 0.0
        %891 = vmatpush1.msra.mxu0 0.0
        %892 = vmatprep.subr.mxu0 0.0
        %893 = vmatpush1.msra.mxu0 0.0
        %894 = vmatprep.subr.mxu0 0.0
        %895 = vmatpush1.msra.mxu0 0.0
        %896 = vmatprep.subr.mxu0 0.0
        %897 = vmatpush1.msra.mxu0 0.0
        %898 = vmatprep.subr.mxu0 0.0
        %899 = vmatpush1.msra.mxu0 0.0
        %900 = vmatprep.subr.mxu0 0.0
        %901 = vmatpush1.msra.mxu0 0.0
        %902 = vmatprep.subr.mxu0 0.0
        %903 = vmatpush1.msra.mxu0 0.0
        %904 = vmatprep.subr.mxu0 0.0
        %905 = vmatpush1.msra.mxu0 0.0
        %906 = vmatprep.subr.mxu0 0.0
        %907 = vmatpush1.msra.mxu0 0.0
        %908 = vmatprep.subr.mxu0 0.0
        %909 = vmatpush1.msra.mxu0 0.0
        %910 = vmatprep.subr.mxu0 0.0
        %911 = vmatpush1.msra.mxu0 0.0
        %912 = vmatprep.mubr.f32.mxu0 0.0
        %913 = vmatmul.mubr.f32.gmra.mrb[0].mxu0 %v846
        %v914 = vpop.f32.mrb[0].mxu0
        %v915 = vadd.f32 0.0, %v914
        %v916 = vpop.f32.mrb[0].mxu0
        %917 = vdwg.mxu0
        %v919 = vsel %vm421, %v842, 0
        %921 = vmatprep.subr.mxu0 0.0
        %922 = vmatpush1.msra.mxu0 %v483
        %923 = vmatprep.subr.mxu0 0.0
        %924 = vmatpush1.msra.mxu0 0.0
        %925 = vmatprep.subr.mxu0 0.0
        %926 = vmatpush1.msra.mxu0 0.0
        %927 = vmatprep.subr.mxu0 0.0
        %928 = vmatpush1.msra.mxu0 0.0
        %929 = vmatprep.subr.mxu0 0.0
        %930 = vmatpush1.msra.mxu0 0.0
        %931 = vmatprep.subr.mxu0 0.0
        %932 = vmatpush1.msra.mxu0 0.0
        %933 = vmatprep.subr.mxu0 0.0
        %934 = vmatpush1.msra.mxu0 0.0
        %935 = vmatprep.subr.mxu0 0.0
        %936 = vmatpush1.msra.mxu0 0.0
        %937 = vmatprep.subr.mxu0 0.0
        %938 = vmatpush1.msra.mxu0 0.0
        %939 = vmatprep.subr.mxu0 0.0
        %940 = vmatpush1.msra.mxu0 0.0
        %941 = vmatprep.subr.mxu0 0.0
        %942 = vmatpush1.msra.mxu0 0.0
        %943 = vmatprep.subr.mxu0 0.0
        %944 = vmatpush1.msra.mxu0 0.0
        %945 = vmatprep.subr.mxu0 0.0
        %946 = vmatpush1.msra.mxu0 0.0
        %947 = vmatprep.subr.mxu0 0.0
        %948 = vmatpush1.msra.mxu0 0.0
        %949 = vmatprep.subr.mxu0 0.0
        %950 = vmatpush1.msra.mxu0 0.0
        %951 = vmatprep.subr.mxu0 0.0
        %952 = vmatpush1.msra.mxu0 0.0
        %953 = vmatprep.subr.mxu0 0.0
        %954 = vmatpush1.msra.mxu0 0.0
        %955 = vmatprep.subr.mxu0 0.0
        %956 = vmatpush1.msra.mxu0 0.0
        %957 = vmatprep.subr.mxu0 0.0
        %958 = vmatpush1.msra.mxu0 0.0
        %959 = vmatprep.subr.mxu0 0.0
        %960 = vmatpush1.msra.mxu0 0.0
        %961 = vmatprep.subr.mxu0 0.0
        %962 = vmatpush1.msra.mxu0 0.0
        %963 = vmatprep.subr.mxu0 0.0
        %964 = vmatpush1.msra.mxu0 0.0
        %965 = vmatprep.subr.mxu0 0.0
        %966 = vmatpush1.msra.mxu0 0.0
        %967 = vmatprep.subr.mxu0 0.0
        %968 = vmatpush1.msra.mxu0 0.0
        %969 = vmatprep.subr.mxu0 0.0
        %970 = vmatpush1.msra.mxu0 0.0
        %971 = vmatprep.subr.mxu0 0.0
        %972 = vmatpush1.msra.mxu0 0.0
        %973 = vmatprep.subr.mxu0 0.0
        %974 = vmatpush1.msra.mxu0 0.0
        %975 = vmatprep.subr.mxu0 0.0
        %976 = vmatpush1.msra.mxu0 0.0
        %977 = vmatprep.subr.mxu0 0.0
        %978 = vmatpush1.msra.mxu0 0.0
        %979 = vmatprep.subr.mxu0 0.0
        %980 = vmatpush1.msra.mxu0 0.0
        %981 = vmatprep.subr.mxu0 0.0
        %982 = vmatpush1.msra.mxu0 0.0
        %983 = vmatprep.subr.mxu0 0.0
        %984 = vmatpush1.msra.mxu0 0.0
        %985 = vmatprep.mubr.f32.mxu0 0.0
        %986 = vmatmul.mubr.f32.gmra.mrb[0].mxu0 %v919
        %v987 = vpop.f32.mrb[0].mxu0
        %v988 = vadd.f32 0.0, %v987
        %v989 = vpop.f32.mrb[0].mxu0
        %990 = vdwg.mxu0
        %v992 = vsel %vm421, %v843, 0
        %994 = vmatprep.subr.mxu0 0.0
        %995 = vmatpush1.msra.mxu0 %v484
        %996 = vmatprep.subr.mxu0 0.0
        %997 = vmatpush1.msra.mxu0 0.0
        %998 = vmatprep.subr.mxu0 0.0
        %999 = vmatpush1.msra.mxu0 0.0
        %1000 = vmatprep.subr.mxu0 0.0
        %1001 = vmatpush1.msra.mxu0 0.0
        %1002 = vmatprep.subr.mxu0 0.0
        %1003 = vmatpush1.msra.mxu0 0.0
        %1004 = vmatprep.subr.mxu0 0.0
        %1005 = vmatpush1.msra.mxu0 0.0
        %1006 = vmatprep.subr.mxu0 0.0
        %1007 = vmatpush1.msra.mxu0 0.0
        %1008 = vmatprep.subr.mxu0 0.0
        %1009 = vmatpush1.msra.mxu0 0.0
        %1010 = vmatprep.subr.mxu0 0.0
        %1011 = vmatpush1.msra.mxu0 0.0
        %1012 = vmatprep.subr.mxu0 0.0
        %1013 = vmatpush1.msra.mxu0 0.0
        %1014 = vmatprep.subr.mxu0 0.0
        %1015 = vmatpush1.msra.mxu0 0.0
        %1016 = vmatprep.subr.mxu0 0.0
        %1017 = vmatpush1.msra.mxu0 0.0
        %1018 = vmatprep.subr.mxu0 0.0
        %1019 = vmatpush1.msra.mxu0 0.0
        %1020 = vmatprep.subr.mxu0 0.0
        %1021 = vmatpush1.msra.mxu0 0.0
        %1022 = vmatprep.subr.mxu0 0.0
        %1023 = vmatpush1.msra.mxu0 0.0
        %1024 = vmatprep.subr.mxu0 0.0
        %1025 = vmatpush1.msra.mxu0 0.0
        %1026 = vmatprep.subr.mxu0 0.0
        %1027 = vmatpush1.msra.mxu0 0.0
        %1028 = vmatprep.subr.mxu0 0.0
        %1029 = vmatpush1.msra.mxu0 0.0
        %1030 = vmatprep.subr.mxu0 0.0
        %1031 = vmatpush1.msra.mxu0 0.0
        %1032 = vmatprep.subr.mxu0 0.0
        %1033 = vmatpush1.msra.mxu0 0.0
        %1034 = vmatprep.subr.mxu0 0.0
        %1035 = vmatpush1.msra.mxu0 0.0
        %1036 = vmatprep.subr.mxu0 0.0
        %1037 = vmatpush1.msra.mxu0 0.0
        %1038 = vmatprep.subr.mxu0 0.0
        %1039 = vmatpush1.msra.mxu0 0.0
        %1040 = vmatprep.subr.mxu0 0.0
        %1041 = vmatpush1.msra.mxu0 0.0
        %1042 = vmatprep.subr.mxu0 0.0
        %1043 = vmatpush1.msra.mxu0 0.0
        %1044 = vmatprep.subr.mxu0 0.0
        %1045 = vmatpush1.msra.mxu0 0.0
        %1046 = vmatprep.subr.mxu0 0.0
        %1047 = vmatpush1.msra.mxu0 0.0
        %1048 = vmatprep.subr.mxu0 0.0
        %1049 = vmatpush1.msra.mxu0 0.0
        %1050 = vmatprep.subr.mxu0 0.0
        %1051 = vmatpush1.msra.mxu0 0.0
        %1052 = vmatprep.subr.mxu0 0.0
        %1053 = vmatpush1.msra.mxu0 0.0
        %1054 = vmatprep.subr.mxu0 0.0
        %1055 = vmatpush1.msra.mxu0 0.0
        %1056 = vmatprep.subr.mxu0 0.0
        %1057 = vmatpush1.msra.mxu0 0.0
        %1058 = vmatprep.mubr.f32.mxu0 0.0
        %1059 = vmatmul.mubr.f32.gmra.mrb[0].mxu0 %v992
        %v1060 = vpop.f32.mrb[0].mxu0
        %v1061 = vadd.f32 0.0, %v1060
        %v1062 = vpop.f32.mrb[0].mxu0
        %1063 = vdwg.mxu0
        %v1065 = vsel %vm421, %v844, 0
        %1067 = vmatprep.subr.mxu0 0.0
        %1068 = vmatpush1.msra.mxu0 %v485
        %1069 = vmatprep.subr.mxu0 0.0
        %1070 = vmatpush1.msra.mxu0 0.0
        %1071 = vmatprep.subr.mxu0 0.0
        %1072 = vmatpush1.msra.mxu0 0.0
        %1073 = vmatprep.subr.mxu0 0.0
        %1074 = vmatpush1.msra.mxu0 0.0
        %1075 = vmatprep.subr.mxu0 0.0
        %1076 = vmatpush1.msra.mxu0 0.0
        %1077 = vmatprep.subr.mxu0 0.0
        %1078 = vmatpush1.msra.mxu0 0.0
        %1079 = vmatprep.subr.mxu0 0.0
        %1080 = vmatpush1.msra.mxu0 0.0
        %1081 = vmatprep.subr.mxu0 0.0
        %1082 = vmatpush1.msra.mxu0 0.0
        %1083 = vmatprep.subr.mxu0 0.0
        %1084 = vmatpush1.msra.mxu0 0.0
        %1085 = vmatprep.subr.mxu0 0.0
        %1086 = vmatpush1.msra.mxu0 0.0
        %1087 = vmatprep.subr.mxu0 0.0
        %1088 = vmatpush1.msra.mxu0 0.0
        %1089 = vmatprep.subr.mxu0 0.0
        %1090 = vmatpush1.msra.mxu0 0.0
        %1091 = vmatprep.subr.mxu0 0.0
        %1092 = vmatpush1.msra.mxu0 0.0
        %1093 = vmatprep.subr.mxu0 0.0
        %1094 = vmatpush1.msra.mxu0 0.0
        %1095 = vmatprep.subr.mxu0 0.0
        %1096 = vmatpush1.msra.mxu0 0.0
        %1097 = vmatprep.subr.mxu0 0.0
        %1098 = vmatpush1.msra.mxu0 0.0
        %1099 = vmatprep.subr.mxu0 0.0
        %1100 = vmatpush1.msra.mxu0 0.0
        %1101 = vmatprep.subr.mxu0 0.0
        %1102 = vmatpush1.msra.mxu0 0.0
        %1103 = vmatprep.subr.mxu0 0.0
        %1104 = vmatpush1.msra.mxu0 0.0
        %1105 = vmatprep.subr.mxu0 0.0
        %1106 = vmatpush1.msra.mxu0 0.0
        %1107 = vmatprep.subr.mxu0 0.0
        %1108 = vmatpush1.msra.mxu0 0.0
        %1109 = vmatprep.subr.mxu0 0.0
        %1110 = vmatpush1.msra.mxu0 0.0
        %1111 = vmatprep.subr.mxu0 0.0
        %1112 = vmatpush1.msra.mxu0 0.0
        %1113 = vmatprep.subr.mxu0 0.0
        %1114 = vmatpush1.msra.mxu0 0.0
        %1115 = vmatprep.subr.mxu0 0.0
        %1116 = vmatpush1.msra.mxu0 0.0
        %1117 = vmatprep.subr.mxu0 0.0
        %1118 = vmatpush1.msra.mxu0 0.0
        %1119 = vmatprep.subr.mxu0 0.0
        %1120 = vmatpush1.msra.mxu0 0.0
        %1121 = vmatprep.subr.mxu0 0.0
        %1122 = vmatpush1.msra.mxu0 0.0
        %1123 = vmatprep.subr.mxu0 0.0
        %1124 = vmatpush1.msra.mxu0 0.0
        %1125 = vmatprep.subr.mxu0 0.0
        %1126 = vmatpush1.msra.mxu0 0.0
        %1127 = vmatprep.subr.mxu0 0.0
        %1128 = vmatpush1.msra.mxu0 0.0
        %1129 = vmatprep.subr.mxu0 0.0
        %1130 = vmatpush1.msra.mxu0 0.0
        %1131 = vmatprep.mubr.f32.mxu0 0.0
        %1132 = vmatmul.mubr.f32.gmra.mrb[0].mxu0 %v1065
        %v1133 = vpop.f32.mrb[0].mxu0
        %v1134 = vadd.f32 0.0, %v1133
        %v1135 = vpop.f32.mrb[0].mxu0
        %1136 = vdwg.mxu0
        %1137 = vst.msk [vmem:[%s379] sm:$0xff] %vm486, %v915
        %1138 = vst.msk [vmem:[%s379 + $0x8] sm:$0xff] %vm486, %v988
        %1139 = vst.msk [vmem:[%s379 + $0x10] sm:$0xff] %vm486, %v1061
        %1140 = vst.msk [vmem:[%s379 + $0x18] sm:$0xff] %vm486, %v1134
        %1141 = vst.msk [vmem:[%s386] sm:$0xff] %vm421, %v841
        %1142 = vst.msk [vmem:[%s386 + $0x8] sm:$0xff] %vm421, %v842
        %1143 = vst.msk [vmem:[%s386 + $0x10] sm:$0xff] %vm421, %v843
        %1144 = vst.msk [vmem:[%s386 + $0x18] sm:$0xff] %vm421, %v844
        %s1145 = sand.u32 %s161, 1
        %s1146 = scalar_lea.sflag [#allocation4], %s1145
        %s1147 = sand.u32 %s161, 1
        %s1148 = smul.addr %s1147, 32
        %s1149 = scalar_lea.vmem [#allocation10], %s1148
        %s1150 = sand.u32 %s31, 1
        %s1151 = scalar_lea.sflag [#allocation12], %s1150
        %s1152 = sand.u32 %s189, 1
        %s1153 = smul.addr %s1152, 32
        %s1154 = scalar_lea.vmem [#allocation11], %s1153
        %s1155 = sand.u32 %s31, 1
        %s1156 = scalar_lea.sflag [#allocation12], %s1155
        %s1157 = sand.u32 %s217, 1
        %s1158 = smul.addr %s1157, 32
        %s1159 = scalar_lea.vmem [#allocation13], %s1158
        // Predicated region
        $region53: #{tpu_custom_call.1} parent=35 // pred_check
          %p1160 = pneg %p171
        $region54: #{tpu_custom_call.1} parent=35 // pred_check_branch
          %1162 = sbr.rel (%p1160) target = $region56
        $region55: #{tpu_custom_call.1} parent=35 // pred_region
          %s1164 = ssub.s32 512, 512
          %1165 = vsyncadd %s1146, %s1164
          %s1166 = smul.addr %s35, 4
          %s1167 = sadd.s32 %s36, %s1166
          %s1168 = smul.addr %s1167, 128
          %s1169 = scalar_lea.hbm %s4, %s1168
          %s1170 = sshll.u32 %s1149, 4
          %s1171 = int_to_ptr.vmem [resolvable:$true] %s1170
          %1176 = dma.vmem_to_hbm [thread:$0]  %s1171, 512, %s1169, %s1146, 128, 128, 8
        $region56: #{tpu_custom_call.1} parent=35 // pred_fallthru
          _
        // Predicated region
        $region57: #{tpu_custom_call.1} parent=35 // pred_check
          %p1177 = pneg %p199
        $region58: #{tpu_custom_call.1} parent=35 // pred_check_branch
          %1179 = sbr.rel (%p1177) target = $region60
        $region59: #{tpu_custom_call.1} parent=35 // pred_region
          %s1181 = ssub.s32 512, 512
          %1182 = vsyncadd %s1151, %s1181
          %s1183 = smul.addr %s35, 4
          %s1184 = sadd.s32 %s36, %s1183
          %s1185 = smul.addr %s1184, 128
          %s1186 = scalar_lea.hbm %s5, %s1185
          %s1187 = sshll.u32 %s1154, 4
          %s1188 = int_to_ptr.vmem [resolvable:$true] %s1187
          %1193 = dma.vmem_to_hbm [thread:$0]  %s1188, 512, %s1186, %s1151, 128, 128, 8
        $region60: #{tpu_custom_call.1} parent=35 // pred_fallthru
          _
        // Predicated region
        $region61: #{tpu_custom_call.1} parent=35 // pred_check
          %p1194 = pneg %p227
        $region62: #{tpu_custom_call.1} parent=35 // pred_check_branch
          %1196 = sbr.rel (%p1194) target = $region64
        $region63: #{tpu_custom_call.1} parent=35 // pred_region
          %s1198 = ssub.s32 512, 512
          %1199 = vsyncadd %s1156, %s1198
          %s1200 = smul.addr %s35, 4
          %s1201 = sadd.s32 %s36, %s1200
          %s1202 = smul.addr %s1201, 128
          %s1203 = scalar_lea.hbm %s6, %s1202
          %s1204 = sshll.u32 %s1159, 4
          %s1205 = int_to_ptr.vmem [resolvable:$true] %s1204
          %1210 = dma.vmem_to_hbm [thread:$0]  %s1205, 512, %s1203, %s1156, 128, 128, 8
        $region64: #{tpu_custom_call.1} parent=35 // pred_fallthru
          _
      $region36: #{tpu_custom_call.1} parent=5 // pred_fallthru
        _
      %p1211 = scmp.le.s32.totalorder 2, %s26
      // Predicated region
      $region65: #{tpu_custom_call.1} parent=5 // pred_check
        %p1212 = pneg %p1211
      $region66: #{tpu_custom_call.1} parent=5 // pred_check_branch
        %1214 = sbr.rel (%p1212) target = $region68
      $region67: #{tpu_custom_call.1} parent=5 // pred_region
        %s1215 = ssub.s32 %s26, 2
        // Predicated region
        $region69: #{tpu_custom_call.1} parent=67 // pred_check
          %p1216 = pneg %p177
        $region70: #{tpu_custom_call.1} parent=67 // pred_check_branch
          %1218 = sbr.rel (%p1216) target = $region72
        $region71: #{tpu_custom_call.1} parent=67 // pred_region
          %s1219 = sand.u32 %s162, 1
          %s1220 = scalar_lea.sflag [#allocation4], %s1219
          %s1221 = sand.u32 %s162, 1
          %s1222 = smul.addr %s1221, 32
          %s1223 = scalar_lea.vmem [#allocation10], %s1222
          %1224 = dma.done %s1220, 512
        $region72: #{tpu_custom_call.1} parent=67 // pred_fallthru
          _
        // Predicated region
        $region73: #{tpu_custom_call.1} parent=67 // pred_check
          %p1225 = pneg %p205
        $region74: #{tpu_custom_call.1} parent=67 // pred_check_branch
          %1227 = sbr.rel (%p1225) target = $region76
        $region75: #{tpu_custom_call.1} parent=67 // pred_region
          %s1228 = sand.u32 %s32, 1
          %s1229 = scalar_lea.sflag [#allocation12], %s1228
          %s1230 = sand.u32 %s190, 1
          %s1231 = smul.addr %s1230, 32
          %s1232 = scalar_lea.vmem [#allocation11], %s1231
          %1233 = dma.done %s1229, 512
        $region76: #{tpu_custom_call.1} parent=67 // pred_fallthru
          _
        // Predicated region
        $region77: #{tpu_custom_call.1} parent=67 // pred_check
          %p1234 = pneg %p233
        $region78: #{tpu_custom_call.1} parent=67 // pred_check_branch
          %1236 = sbr.rel (%p1234) target = $region80
        $region79: #{tpu_custom_call.1} parent=67 // pred_region
          %s1237 = sand.u32 %s32, 1
          %s1238 = scalar_lea.sflag [#allocation12], %s1237
          %s1239 = sand.u32 %s218, 1
          %s1240 = smul.addr %s1239, 32
          %s1241 = scalar_lea.vmem [#allocation13], %s1240
          %1242 = dma.done %s1238, 512
        $region80: #{tpu_custom_call.1} parent=67 // pred_fallthru
          _
      $region68: #{tpu_custom_call.1} parent=5 // pred_fallthru
        _
    $region6: #{tpu_custom_call.1} parent=1 // loop_footer
      %s30 = sadd.s32 1, %s26
    $region7: #{tpu_custom_call.1} parent=1 // loop_footer_branch
      %25 = sbr.rel target = $region3
    $region8: #{tpu_custom_call.1} parent=1 // loop_exit
      _
    %1243 = vsyncpa [#allocation3], 1
    %s1244 = scalar_lea.sflag [#allocation3], 1
    %1245 = vsyncpa %s1244, 1
    %1246 = vsyncpa [#allocation6], 1
    %s1247 = scalar_lea.sflag [#allocation6], 1
    %1248 = vsyncpa %s1247, 1
    %1249 = vsyncpa [#allocation9], 1
    %1250 = vsyncpa [#allocation4], 1
    %s1251 = scalar_lea.sflag [#allocation4], 1
    %1252 = vsyncpa %s1251, 1
    %1253 = vsyncpa [#allocation12], 1
    %s1254 = scalar_lea.sflag [#allocation12], 1
    %1255 = vsyncpa %s1254, 1

// kernel: tpu_custom_call.1
$region0: #{tpu_custom_call.1}
  #allocation0 [shape = 'u32[]', space=smem, size = 0x4, offset = 0x4, fixed_abs, tag = 'smem constant byte address 0x4 - core index']
  #allocation1 [shape = 'u32[144,128]{1,0:T(1,128)}', space=vmem, size = 0x12000, scoped, tag = 'internal scratch']
  %s0 = inlined_call_operand.hbm [shape: f32[2,4,8], index: 0, kind: input, shape index: {}]
  %s1 = inlined_call_operand.hbm [shape: f32[2,4,8,32], index: 1, kind: input, shape index: {}]
  %s2 = inlined_call_operand.hbm [shape: f32[2,4,8,32], index: 2, kind: input, shape index: {}]
  %s3 = inlined_call_operand.hbm [shape: f32[2,4,8,32], index: 3, kind: input, shape index: {}]
  %s4 = inlined_call_operand.hbm [shape: f32[2,4,8,32], index: 4, kind: output, shape index: {0}]
  %s5 = inlined_call_operand.hbm [shape: f32[2,4,8,8], index: 5, kind: output, shape index: {1}]
  %s6 = inlined_call_operand.hbm [shape: f32[2,4,8,8], index: 6, kind: output, shape index: {2}]
  %7 = xla_tuple %s4, %s5, %s6
  %s8 = sld [smem:[#allocation0]]
  $region81: #{tpu_custom_call.1} parent=0
    _
  %s10 = ssub.s32 1, %s8
  %s11 = scalar_select 0, %s10, %s8
  $region1: #{tpu_custom_call.1} parent=0
    #allocation2 [shape = 'u8[4096]{0}', space=vmem, size = 0x1000, scoped, tag = 'input window, operand 0']
    #allocation3 [shape = 's32[2]{0}', space=sflag, size = 0x8, scoped, tag = 'scoped memory for tpu_custom_call.1']
    #allocation4 [shape = 's32[2]{0}', space=sflag, size = 0x8, scoped, tag = 'scoped memory for tpu_custom_call.1']
    #allocation5 [shape = 'u8[32768]{0}', space=vmem, size = 0x8000, scoped, tag = 'input window, operand 1']
    #allocation6 [shape = 's32[2]{0}', space=sflag, size = 0x8, scoped, tag = 'scoped memory for tpu_custom_call.1']
    #allocation7 [shape = 'u8[32768]{0}', space=vmem, size = 0x8000, scoped, tag = 'input window, operand 2']
    #allocation8 [shape = 'u8[32768]{0}', space=vmem, size = 0x8000, scoped, tag = 'input window, operand 3']
    #allocation9 [shape = 's32[2]{0}', space=sflag, size = 0x8, scoped, tag = 'scoped memory for tpu_custom_call.1']
    #allocation10 [shape = 'u8[32768]{0}', space=vmem, size = 0x8000, scoped, tag = 'output window, operand 0']
    #allocation11 [shape = 'u8[32768]{0}', space=vmem, size = 0x8000, scoped, tag = 'output window, operand 1']
    #allocation12 [shape = 's32[2]{0}', space=sflag, size = 0x8, scoped, tag = 'scoped memory for tpu_custom_call.1']
    #allocation13 [shape = 'u8[32768]{0}', space=vmem, size = 0x8000, scoped, tag = 'output window, operand 2']
    %12 = vsyncpa [#allocation3], 0
    %s13 = scalar_lea.sflag [#allocation3], 1
    %14 = vsyncpa %s13, 0
    %15 = vsyncpa [#allocation6], 0
    %s16 = scalar_lea.sflag [#allocation6], 1
    %17 = vsyncpa %s16, 0
    %18 = vsyncpa [#allocation9], 0
    %s19 = scalar_lea.sflag [#allocation9], 1
    %20 = vsyncpa %s19, 0
    %21 = vsyncpa [#allocation4], 0
    %s22 = scalar_lea.sflag [#allocation4], 1
    %23 = vsyncpa %s22, 0
    %24 = vsyncpa [#allocation12], 0
    %s25 = scalar_lea.sflag [#allocation12], 1
    %26 = vsyncpa %s25, 0
    loop: start=0, step=1, limit=4
    $region2: #{tpu_custom_call.1} parent=1 // loop_pre_header
      _
    $region3: #{tpu_custom_call.1} parent=1 // loop_header
      %s28 = sphi 0, %s32
      %p29 = scmp.ge.s32.totalorder %s28, 4
      %s35 = sphi 0, %s47
      %s36 = sphi 0, %s43
      %s37 = sphi 0, %s35
      %s38 = sphi 0, %s36
      %s39 = sphi 0, %s37
      %s40 = sphi 0, %s38
      %s52 = sphi 0, %s54
      %s55 = sphi 0, %s52
      %s56 = sphi 0, %s55
      %s72 = sphi 0, %s56
      %s80 = sphi 0, %s82
      %s83 = sphi 0, %s80
      %s84 = sphi 0, %s83
      %s100 = sphi 0, %s84
      %s106 = sphi 0, %s108
      %s109 = sphi 0, %s106
      %s110 = sphi 0, %s109
      %s126 = sphi 0, %s110
      %s132 = sphi 0, %s134
      %s135 = sphi 0, %s132
      %s136 = sphi 0, %s135
      %s152 = sphi 0, %s136
      %s160 = sphi 0, %s162
      %s163 = sphi 0, %s160
      %s164 = sphi 0, %s163
      %s180 = sphi 0, %s164
      %s188 = sphi 0, %s190
      %s191 = sphi 0, %s188
      %s192 = sphi 0, %s191
      %s208 = sphi 0, %s192
      %s216 = sphi 0, %s218
      %s219 = sphi 0, %s216
      %s220 = sphi 0, %s219
      %s236 = sphi 0, %s220
    $region4: #{tpu_custom_call.1} parent=1 // loop_header_branch
      %31 = sbr.rel (%p29) target = $region8
    $region5: #{tpu_custom_call.1} parent=1 // loop_body
      %s33 = ssub.s32 %s28, 1
      %s34 = ssub.s32 %s28, 2
      %s41 = sadd.s32 1, %s36
      %p42 = scmp.ge.s32.totalorder %s41, 1
      %s43 = scalar_select %p42, 0, %s41
      %s44 = sadd.s32 1, %s35
      %s45 = scalar_select %p42, %s44, %s35
      %p46 = scmp.ge.s32.totalorder %s45, 2
      %s47 = scalar_select %p46, 0, %s45
      %s48 = ssub.s32 %s35, %s47
      %s49 = ssub.s32 %s36, %s43
      %s50 = sor.u32 %s48, %s49
      %p51 = scmp.eq.s32.totalorder %s50, 0
      %s53 = sadd.s32 %s52, 1
      %s54 = scalar_select %p51, %s52, %s53
      %p57 = pneg %p51
      %p58 = scmp.eq.s32.totalorder %s28, 1
      %p59 = por %p57, %p58
      %p60 = scmp.ne.s32.totalorder %s52, %s55
      %p61 = scmp.eq.s32.totalorder %s28, 0
      %p62 = por %p60, %p61
      %p63 = scmp.ne.s32.totalorder %s52, %s55
      %p64 = scmp.eq.s32.totalorder %s33, 1
      %p65 = por %p63, %p64
      %p66 = scmp.ne.s32.totalorder %s55, %s56
      %p67 = scmp.eq.s32.totalorder %s33, 0
      %p68 = por %p66, %p67
      %p69 = scmp.ne.s32.totalorder %s55, %s56
      %p70 = scmp.eq.s32.totalorder %s34, 1
      %p71 = por %p69, %p70
      %p73 = scmp.ne.s32.totalorder %s56, %s72
      %p74 = scmp.eq.s32.totalorder %s34, 0
      %p75 = por %p73, %p74
      %s76 = ssub.s32 %s35, %s47
      %s77 = ssub.s32 %s36, %s43
      %s78 = sor.u32 %s76, %s77
      %p79 = scmp.eq.s32.totalorder %s78, 0
      %s81 = sadd.s32 %s80, 1
      %s82 = scalar_select %p79, %s80, %s81
      %p85 = pneg %p79
      %p86 = scmp.eq.s32.totalorder %s28, 1
      %p87 = por %p85, %p86
      %p88 = scmp.ne.s32.totalorder %s80, %s83
      %p89 = scmp.eq.s32.totalorder %s28, 0
      %p90 = por %p88, %p89
      %p91 = scmp.ne.s32.totalorder %s80, %s83
      %p92 = scmp.eq.s32.totalorder %s33, 1
      %p93 = por %p91, %p92
      %p94 = scmp.ne.s32.totalorder %s83, %s84
      %p95 = scmp.eq.s32.totalorder %s33, 0
      %p96 = por %p94, %p95
      %p97 = scmp.ne.s32.totalorder %s83, %s84
      %p98 = scmp.eq.s32.totalorder %s34, 1
      %p99 = por %p97, %p98
      %p101 = scmp.ne.s32.totalorder %s84, %s100
      %p102 = scmp.eq.s32.totalorder %s34, 0
      %p103 = por %p101, %p102
      %s104 = ssub.s32 %s35, %s47
      %p105 = scmp.eq.s32.totalorder %s104, 0
      %s107 = sadd.s32 %s106, 1
      %s108 = scalar_select %p105, %s106, %s107
      %p111 = pneg %p105
      %p112 = scmp.eq.s32.totalorder %s28, 1
      %p113 = por %p111, %p112
      %p114 = scmp.ne.s32.totalorder %s106, %s109
      %p115 = scmp.eq.s32.totalorder %s28, 0
      %p116 = por %p114, %p115
      %p117 = scmp.ne.s32.totalorder %s106, %s109
      %p118 = scmp.eq.s32.totalorder %s33, 1
      %p119 = por %p117, %p118
      %p120 = scmp.ne.s32.totalorder %s109, %s110
      %p121 = scmp.eq.s32.totalorder %s33, 0
      %p122 = por %p120, %p121
      %p123 = scmp.ne.s32.totalorder %s109, %s110
      %p124 = scmp.eq.s32.totalorder %s34, 1
      %p125 = por %p123, %p124
      %p127 = scmp.ne.s32.totalorder %s110, %s126
      %p128 = scmp.eq.s32.totalorder %s34, 0
      %p129 = por %p127, %p128
      %s130 = ssub.s32 %s35, %s47
      %p131 = scmp.eq.s32.totalorder %s130, 0
      %s133 = sadd.s32 %s132, 1
      %s134 = scalar_select %p131, %s132, %s133
      %p137 = pneg %p131
      %p138 = scmp.eq.s32.totalorder %s28, 1
      %p139 = por %p137, %p138
      %p140 = scmp.ne.s32.totalorder %s132, %s135
      %p141 = scmp.eq.s32.totalorder %s28, 0
      %p142 = por %p140, %p141
      %p143 = scmp.ne.s32.totalorder %s132, %s135
      %p144 = scmp.eq.s32.totalorder %s33, 1
      %p145 = por %p143, %p144
      %p146 = scmp.ne.s32.totalorder %s135, %s136
      %p147 = scmp.eq.s32.totalorder %s33, 0
      %p148 = por %p146, %p147
      %p149 = scmp.ne.s32.totalorder %s135, %s136
      %p150 = scmp.eq.s32.totalorder %s34, 1
      %p151 = por %p149, %p150
      %p153 = scmp.ne.s32.totalorder %s136, %s152
      %p154 = scmp.eq.s32.totalorder %s34, 0
      %p155 = por %p153, %p154
      %s156 = ssub.s32 %s35, %s47
      %s157 = ssub.s32 %s36, %s43
      %s158 = sor.u32 %s156, %s157
      %p159 = scmp.eq.s32.totalorder %s158, 0
      %s161 = sadd.s32 %s160, 1
      %s162 = scalar_select %p159, %s160, %s161
      %p165 = pneg %p159
      %p166 = scmp.eq.s32.totalorder %s28, 1
      %p167 = por %p165, %p166
      %p168 = scmp.ne.s32.totalorder %s160, %s163
      %p169 = scmp.eq.s32.totalorder %s28, 0
      %p170 = por %p168, %p169
      %p171 = scmp.ne.s32.totalorder %s160, %s163
      %p172 = scmp.eq.s32.totalorder %s33, 1
      %p173 = por %p171, %p172
      %p174 = scmp.ne.s32.totalorder %s163, %s164
      %p175 = scmp.eq.s32.totalorder %s33, 0
      %p176 = por %p174, %p175
      %p177 = scmp.ne.s32.totalorder %s163, %s164
      %p178 = scmp.eq.s32.totalorder %s34, 1
      %p179 = por %p177, %p178
      %p181 = scmp.ne.s32.totalorder %s164, %s180
      %p182 = scmp.eq.s32.totalorder %s34, 0
      %p183 = por %p181, %p182
      %s184 = ssub.s32 %s35, %s47
      %s185 = ssub.s32 %s36, %s43
      %s186 = sor.u32 %s184, %s185
      %p187 = scmp.eq.s32.totalorder %s186, 0
      %s189 = sadd.s32 %s188, 1
      %s190 = scalar_select %p187, %s188, %s189
      %p193 = pneg %p187
      %p194 = scmp.eq.s32.totalorder %s28, 1
      %p195 = por %p193, %p194
      %p196 = scmp.ne.s32.totalorder %s188, %s191
      %p197 = scmp.eq.s32.totalorder %s28, 0
      %p198 = por %p196, %p197
      %p199 = scmp.ne.s32.totalorder %s188, %s191
      %p200 = scmp.eq.s32.totalorder %s33, 1
      %p201 = por %p199, %p200
      %p202 = scmp.ne.s32.totalorder %s191, %s192
      %p203 = scmp.eq.s32.totalorder %s33, 0
      %p204 = por %p202, %p203
      %p205 = scmp.ne.s32.totalorder %s191, %s192
      %p206 = scmp.eq.s32.totalorder %s34, 1
      %p207 = por %p205, %p206
      %p209 = scmp.ne.s32.totalorder %s192, %s208
      %p210 = scmp.eq.s32.totalorder %s34, 0
      %p211 = por %p209, %p210
      %s212 = ssub.s32 %s35, %s47
      %s213 = ssub.s32 %s36, %s43
      %s214 = sor.u32 %s212, %s213
      %p215 = scmp.eq.s32.totalorder %s214, 0
      %s217 = sadd.s32 %s216, 1
      %s218 = scalar_select %p215, %s216, %s217
      %p221 = pneg %p215
      %p222 = scmp.eq.s32.totalorder %s28, 1
      %p223 = por %p221, %p222
      %p224 = scmp.ne.s32.totalorder %s216, %s219
      %p225 = scmp.eq.s32.totalorder %s28, 0
      %p226 = por %p224, %p225
      %p227 = scmp.ne.s32.totalorder %s216, %s219
      %p228 = scmp.eq.s32.totalorder %s33, 1
      %p229 = por %p227, %p228
      %p230 = scmp.ne.s32.totalorder %s219, %s220
      %p231 = scmp.eq.s32.totalorder %s33, 0
      %p232 = por %p230, %p231
      %p233 = scmp.ne.s32.totalorder %s219, %s220
      %p234 = scmp.eq.s32.totalorder %s34, 1
      %p235 = por %p233, %p234
      %p237 = scmp.ne.s32.totalorder %s220, %s236
      %p238 = scmp.eq.s32.totalorder %s34, 0
      %p239 = por %p237, %p238
      %p240 = scmp.le.s32.totalorder 1, %s28
      %p241 = scmp.lt.s32.totalorder %s28, 3
      %p242 = pnand %p240, %p241
      %p243 = pneg %p242
      // Predicated region
      $region9: #{tpu_custom_call.1} parent=5 // pred_check
        _
      $region10: #{tpu_custom_call.1} parent=5 // pred_check_branch
        %245 = sbr.rel (%p242) target = $region12
      $region11: #{tpu_custom_call.1} parent=5 // pred_region
        %s246 = ssub.s32 %s28, 1
      $region12: #{tpu_custom_call.1} parent=5 // pred_fallthru
        _
      %p247 = scmp.lt.s32.totalorder %s28, 2
      // Predicated region
      $region13: #{tpu_custom_call.1} parent=5 // pred_check
        %p248 = pneg %p247
      $region14: #{tpu_custom_call.1} parent=5 // pred_check_branch
        %250 = sbr.rel (%p248) target = $region16
      $region15: #{tpu_custom_call.1} parent=5 // pred_region
        // Predicated region
        $region17: #{tpu_custom_call.1} parent=15 // pred_check
          %p251 = pneg %p62
        $region18: #{tpu_custom_call.1} parent=15 // pred_check_branch
          %253 = sbr.rel (%p251) target = $region20
        $region19: #{tpu_custom_call.1} parent=15 // pred_region
          %s254 = sand.u32 %s52, 1
          %s255 = scalar_lea.sflag [#allocation3], %s254
          %s256 = sand.u32 %s52, 1
          %s257 = smul.addr %s256, 4
          %s258 = scalar_lea.vmem [#allocation2], %s257
          %s260 = ssub.s32 64, 64
          %261 = vsyncadd %s255, %s260
          %s262 = sadd.s32 %s36, %s35
          %s263 = smul.addr %s262, 64
          %s264 = scalar_lea.hbm %s0, %s263
          %s266 = sshll.u32 %s258, 4
          %s267 = int_to_ptr.vmem [resolvable:$true] %s266
          %269 = dma.hbm_to_vmem [thread:$0]  %s264, 64, %s267, %s255
        $region20: #{tpu_custom_call.1} parent=15 // pred_fallthru
          _
        // Predicated region
        $region21: #{tpu_custom_call.1} parent=15 // pred_check
          %p270 = pneg %p90
        $region22: #{tpu_custom_call.1} parent=15 // pred_check_branch
          %272 = sbr.rel (%p270) target = $region24
        $region23: #{tpu_custom_call.1} parent=15 // pred_region
          %s273 = sand.u32 %s28, 1
          %s274 = scalar_lea.sflag [#allocation6], %s273
          %s275 = sand.u32 %s80, 1
          %s276 = smul.addr %s275, 32
          %s277 = scalar_lea.vmem [#allocation5], %s276
          %s279 = ssub.s32 512, 512
          %280 = vsyncadd %s274, %s279
          %s281 = smul.addr %s35, 4
          %s282 = sadd.s32 %s36, %s281
          %s283 = smul.addr %s282, 128
          %s284 = scalar_lea.hbm %s1, %s283
          %s285 = sshll.u32 %s277, 4
          %s286 = int_to_ptr.vmem [resolvable:$true] %s285
          %291 = dma.hbm_to_vmem [thread:$0]  %s284, 512, %s286, %s274, 128, 128, 8
        $region24: #{tpu_custom_call.1} parent=15 // pred_fallthru
          _
        // Predicated region
        $region25: #{tpu_custom_call.1} parent=15 // pred_check
          %p292 = pneg %p116
        $region26: #{tpu_custom_call.1} parent=15 // pred_check_branch
          %294 = sbr.rel (%p292) target = $region28
        $region27: #{tpu_custom_call.1} parent=15 // pred_region
          %s295 = sand.u32 %s28, 1
          %s296 = scalar_lea.sflag [#allocation6], %s295
          %s297 = sand.u32 %s106, 1
          %s298 = smul.addr %s297, 32
          %s299 = scalar_lea.vmem [#allocation7], %s298
          %s301 = ssub.s32 512, 512
          %302 = vsyncadd %s296, %s301
          %s303 = smul.addr %s35, 4
          %s304 = smul.addr %s303, 128
          %s305 = scalar_lea.hbm %s2, %s304
          %s306 = sshll.u32 %s299, 4
          %s307 = int_to_ptr.vmem [resolvable:$true] %s306
          %312 = dma.hbm_to_vmem [thread:$0]  %s305, 512, %s307, %s296, 128, 128, 8
        $region28: #{tpu_custom_call.1} parent=15 // pred_fallthru
          _
        // Predicated region
        $region29: #{tpu_custom_call.1} parent=15 // pred_check
          %p313 = pneg %p142
        $region30: #{tpu_custom_call.1} parent=15 // pred_check_branch
          %315 = sbr.rel (%p313) target = $region32
        $region31: #{tpu_custom_call.1} parent=15 // pred_region
          %s316 = sand.u32 %s132, 1
          %s317 = scalar_lea.sflag [#allocation9], %s316
          %s318 = sand.u32 %s132, 1
          %s319 = smul.addr %s318, 32
          %s320 = scalar_lea.vmem [#allocation8], %s319
          %s322 = ssub.s32 512, 512
          %323 = vsyncadd %s317, %s322
          %s324 = smul.addr %s35, 4
          %s325 = smul.addr %s324, 128
          %s326 = scalar_lea.hbm %s3, %s325
          %s327 = sshll.u32 %s320, 4
          %s328 = int_to_ptr.vmem [resolvable:$true] %s327
          %333 = dma.hbm_to_vmem [thread:$0]  %s326, 512, %s328, %s317, 128, 128, 8
        $region32: #{tpu_custom_call.1} parent=15 // pred_fallthru
          _
      $region16: #{tpu_custom_call.1} parent=5 // pred_fallthru
        _
      %p334 = scmp.le.s32.totalorder 1, %s28
      %p335 = scmp.lt.s32.totalorder %s28, 3
      %p336 = pnand %p334, %p335
      %p337 = pneg %p336
      // Predicated region
      $region33: #{tpu_custom_call.1} parent=5 // pred_check
        _
      $region34: #{tpu_custom_call.1} parent=5 // pred_check_branch
        %339 = sbr.rel (%p336) target = $region36
      $region35: #{tpu_custom_call.1} parent=5 // pred_region
        %s340 = ssub.s32 %s28, 1
        %s341 = sand.u32 %s55, 1
        %s342 = scalar_lea.sflag [#allocation3], %s341
        %s343 = sand.u32 %s55, 1
        %s344 = smul.addr %s343, 4
        %s345 = scalar_lea.vmem [#allocation2], %s344
        // Predicated region
        $region37: #{tpu_custom_call.1} parent=35 // pred_check
          %p346 = pneg %p68
        $region38: #{tpu_custom_call.1} parent=35 // pred_check_branch
          %348 = sbr.rel (%p346) target = $region40
        $region39: #{tpu_custom_call.1} parent=35 // pred_region
          %349 = dma.done %s342, 64
        $region40: #{tpu_custom_call.1} parent=35 // pred_fallthru
          _
        %s350 = sand.u32 %s33, 1
        %s351 = scalar_lea.sflag [#allocation6], %s350
        %s352 = sand.u32 %s83, 1
        %s353 = smul.addr %s352, 32
        %s354 = scalar_lea.vmem [#allocation5], %s353
        // Predicated region
        $region41: #{tpu_custom_call.1} parent=35 // pred_check
          %p355 = pneg %p96
        $region42: #{tpu_custom_call.1} parent=35 // pred_check_branch
          %357 = sbr.rel (%p355) target = $region44
        $region43: #{tpu_custom_call.1} parent=35 // pred_region
          %358 = dma.done %s351, 512
        $region44: #{tpu_custom_call.1} parent=35 // pred_fallthru
          _
        %s359 = sand.u32 %s33, 1
        %s360 = scalar_lea.sflag [#allocation6], %s359
        %s361 = sand.u32 %s109, 1
        %s362 = smul.addr %s361, 32
        %s363 = scalar_lea.vmem [#allocation7], %s362
        // Predicated region
        $region45: #{tpu_custom_call.1} parent=35 // pred_check
          %p364 = pneg %p122
        $region46: #{tpu_custom_call.1} parent=35 // pred_check_branch
          %366 = sbr.rel (%p364) target = $region48
        $region47: #{tpu_custom_call.1} parent=35 // pred_region
          %367 = dma.done %s360, 512
        $region48: #{tpu_custom_call.1} parent=35 // pred_fallthru
          _
        %s368 = sand.u32 %s135, 1
        %s369 = scalar_lea.sflag [#allocation9], %s368
        %s370 = sand.u32 %s135, 1
        %s371 = smul.addr %s370, 32
        %s372 = scalar_lea.vmem [#allocation8], %s371
        // Predicated region
        $region49: #{tpu_custom_call.1} parent=35 // pred_check
          %p373 = pneg %p148
        $region50: #{tpu_custom_call.1} parent=35 // pred_check_branch
          %375 = sbr.rel (%p373) target = $region52
        $region51: #{tpu_custom_call.1} parent=35 // pred_region
          %376 = dma.done %s369, 512
        $region52: #{tpu_custom_call.1} parent=35 // pred_fallthru
          _
        %s377 = sand.u32 %s55, 1
        %s378 = scalar_lea.sflag [#allocation3], %s377
        %s379 = sand.u32 %s55, 1
        %s380 = smul.addr %s379, 4
        %s381 = scalar_lea.vmem [#allocation2], %s380
        %p382 = pneg %p68
        %p383 = pneg %p65
        %s384 = sand.u32 %s33, 1
        %s385 = scalar_lea.sflag [#allocation6], %s384
        %s386 = sand.u32 %s83, 1
        %s387 = smul.addr %s386, 32
        %s388 = scalar_lea.vmem [#allocation5], %s387
        %p389 = pneg %p96
        %p390 = pneg %p93
        %s391 = sand.u32 %s33, 1
        %s392 = scalar_lea.sflag [#allocation6], %s391
        %s393 = sand.u32 %s109, 1
        %s394 = smul.addr %s393, 32
        %s395 = scalar_lea.vmem [#allocation7], %s394
        %p396 = pneg %p122
        %p397 = pneg %p119
        %s398 = sand.u32 %s135, 1
        %s399 = scalar_lea.sflag [#allocation9], %s398
        %s400 = sand.u32 %s135, 1
        %s401 = smul.addr %s400, 32
        %s402 = scalar_lea.vmem [#allocation8], %s401
        %p403 = pneg %p148
        %p404 = pneg %p145
        %p405 = pneg %p176
        %p406 = pneg %p173
        %s407 = sand.u32 %s163, 1
        %s408 = scalar_lea.sflag [#allocation4], %s407
        %s409 = sand.u32 %s163, 1
        %s410 = smul.addr %s409, 32
        %s411 = scalar_lea.vmem [#allocation10], %s410
        %p412 = pneg %p204
        %p413 = pneg %p201
        %s414 = sand.u32 %s33, 1
        %s415 = scalar_lea.sflag [#allocation12], %s414
        %s416 = sand.u32 %s191, 1
        %s417 = smul.addr %s416, 32
        %s418 = scalar_lea.vmem [#allocation11], %s417
        %p419 = pneg %p232
        %p420 = pneg %p229
        %s421 = sand.u32 %s33, 1
        %s422 = scalar_lea.sflag [#allocation12], %s421
        %s423 = sand.u32 %s219, 1
        %s424 = smul.addr %s423, 32
        %s425 = scalar_lea.vmem [#allocation13], %s424
        %s426 = smul.u32 %s38, 8
        %v427 = vlaneseq
        %v428 = vshrl.u32 %v427, 7
        %v429 = vstv %s426
        %v430 = vadd.s32 %v429, %v428
        %v431 = vlaneseq
        %v432 = vand.u32 %v431, 127
        %vm433 = vcmp.gt.s32.totalorder %v432, %v430
        %v434 = vsub.s32 %v430, %v432
        %v435 = vcvt.s32.f32 %v434
        %v436 = vmul.f32 %v435, -0.5
        %v437 = vmul.f32 %v436, %v435
        %v438 = vld [vmem:[%s345] sm:$0x1]
        %v439 = vrcp.pop %v438
        %v440 = vlaneseq
        %v441 = vshrl.u32 %v440, 7
        %v442 = vsub.s32 0, %v441
        %v443 = vrot.slane %v439, %v442
        %445 = vbcast.lane.b32.xlu0 %v443, 256
        %v446 = vpop.permute.xlu0 %445
        %v447 = vmul.f32 %v446, 0.3989423
        %v448 = vmul.f32 %v446, %v446
        %v449 = vmul.f32 %v437, %v448
        %v450 = vmul.f32 %v449, 1.442695
        %v451 = vpow.pop %v450
        %v452 = vmul.f32 %v447, %v451
        %vm453 = vcmask 64512
        %454 = vst.msk [vmem:[%s425] sm:$0xff] %vm453, %v452
        %v455 = vld [vmem:[%s345 + $0x1] sm:$0x1]
        %v456 = vrcp.pop %v455
        %v457 = vlaneseq
        %v458 = vshrl.u32 %v457, 7
        %v459 = vsub.s32 0, %v458
        %v460 = vrot.slane %v456, %v459
        %462 = vbcast.lane.b32.xlu0 %v460, 256
        %v463 = vpop.permute.xlu0 %462
        %v464 = vmul.f32 %v463, 0.3989423
        %v465 = vmul.f32 %v463, %v463
        %v466 = vmul.f32 %v437, %v465
        %v467 = vmul.f32 %v466, 1.442695
        %v468 = vpow.pop %v467
        %v469 = vmul.f32 %v464, %v468
        %s470 = scalar_lea.vmem %s425, 8 [#allocation13]
        %471 = vst.msk [vmem:[%s470] sm:$0xff] %vm453, %v469
        %v472 = vld [vmem:[%s345 + $0x2] sm:$0x1]
        %v473 = vrcp.pop %v472
        %v474 = vlaneseq
        %v475 = vshrl.u32 %v474, 7
        %v476 = vsub.s32 0, %v475
        %v477 = vrot.slane %v473, %v476
        %479 = vbcast.lane.b32.xlu0 %v477, 256
        %v480 = vpop.permute.xlu0 %479
        %v481 = vmul.f32 %v480, 0.3989423
        %v482 = vmul.f32 %v480, %v480
        %v483 = vmul.f32 %v437, %v482
        %v484 = vmul.f32 %v483, 1.442695
        %v485 = vpow.pop %v484
        %v486 = vmul.f32 %v481, %v485
        %s487 = scalar_lea.vmem %s425, 16 [#allocation13]
        %488 = vst.msk [vmem:[%s487] sm:$0xff] %vm453, %v486
        %v489 = vld [vmem:[%s345 + $0x3] sm:$0x1]
        %v490 = vrcp.pop %v489
        %v491 = vlaneseq
        %v492 = vshrl.u32 %v491, 7
        %v493 = vsub.s32 0, %v492
        %v494 = vrot.slane %v490, %v493
        %496 = vbcast.lane.b32.xlu0 %v494, 256
        %v497 = vpop.permute.xlu0 %496
        %v498 = vmul.f32 %v497, 0.3989423
        %v499 = vmul.f32 %v497, %v497
        %v500 = vmul.f32 %v437, %v499
        %v501 = vmul.f32 %v500, 1.442695
        %v502 = vpow.pop %v501
        %v503 = vmul.f32 %v498, %v502
        %s504 = scalar_lea.vmem %s425, 24 [#allocation13]
        %505 = vst.msk [vmem:[%s504] sm:$0xff] %vm453, %v503
        %v506 = vld [vmem:[%s354] sm:$0xff]
        %v507 = vld [vmem:[%s354 + $0x8] sm:$0xff]
        %v508 = vld [vmem:[%s354 + $0x10] sm:$0xff]
        %v509 = vld [vmem:[%s354 + $0x18] sm:$0xff]
        %v510 = vld [vmem:[%s363] sm:$0xff]
        %v511 = vld [vmem:[%s363 + $0x8] sm:$0xff]
        %v512 = vld [vmem:[%s363 + $0x10] sm:$0xff]
        %v513 = vld [vmem:[%s363 + $0x18] sm:$0xff]
        %v514 = vld [vmem:[%s372] sm:$0xff]
        %v515 = vld [vmem:[%s372 + $0x8] sm:$0xff]
        %v516 = vld [vmem:[%s372 + $0x10] sm:$0xff]
        %v517 = vld [vmem:[%s372 + $0x18] sm:$0xff]
        %vm518 = vcmask 261120
        %v520 = vsel %vm518, %v506, 0
        %v523 = vsel %vm518, %v510, 0
        %525 = vmatprep.subr.mxu0 0.0
        %526 = vmatpush1.xpose.msra.mxu0 %v523
        %527 = vmatprep.subr.mxu0 0.0
        %528 = vmatpush1.xpose.msra.mxu0 0.0
        %529 = vmatprep.subr.mxu0 0.0
        %530 = vmatpush1.xpose.msra.mxu0 0.0
        %531 = vmatprep.subr.mxu0 0.0
        %532 = vmatpush1.xpose.msra.mxu0 0.0
        %533 = vmatprep.subr.mxu0 0.0
        %534 = vmatpush1.xpose.msra.mxu0 0.0
        %535 = vmatprep.subr.mxu0 0.0
        %536 = vmatpush1.xpose.msra.mxu0 0.0
        %537 = vmatprep.subr.mxu0 0.0
        %538 = vmatpush1.xpose.msra.mxu0 0.0
        %539 = vmatprep.subr.mxu0 0.0
        %540 = vmatpush1.xpose.msra.mxu0 0.0
        %541 = vmatprep.subr.mxu0 0.0
        %542 = vmatpush1.xpose.msra.mxu0 0.0
        %543 = vmatprep.subr.mxu0 0.0
        %544 = vmatpush1.xpose.msra.mxu0 0.0
        %545 = vmatprep.subr.mxu0 0.0
        %546 = vmatpush1.xpose.msra.mxu0 0.0
        %547 = vmatprep.subr.mxu0 0.0
        %548 = vmatpush1.xpose.msra.mxu0 0.0
        %549 = vmatprep.subr.mxu0 0.0
        %550 = vmatpush1.xpose.msra.mxu0 0.0
        %551 = vmatprep.subr.mxu0 0.0
        %552 = vmatpush1.xpose.msra.mxu0 0.0
        %553 = vmatprep.subr.mxu0 0.0
        %554 = vmatpush1.xpose.msra.mxu0 0.0
        %555 = vmatprep.subr.mxu0 0.0
        %556 = vmatpush1.xpose.msra.mxu0 0.0
        %557 = vmatprep.subr.mxu0 0.0
        %558 = vmatpush1.xpose.msra.mxu0 0.0
        %559 = vmatprep.subr.mxu0 0.0
        %560 = vmatpush1.xpose.msra.mxu0 0.0
        %561 = vmatprep.subr.mxu0 0.0
        %562 = vmatpush1.xpose.msra.mxu0 0.0
        %563 = vmatprep.subr.mxu0 0.0
        %564 = vmatpush1.xpose.msra.mxu0 0.0
        %565 = vmatprep.subr.mxu0 0.0
        %566 = vmatpush1.xpose.msra.mxu0 0.0
        %567 = vmatprep.subr.mxu0 0.0
        %568 = vmatpush1.xpose.msra.mxu0 0.0
        %569 = vmatprep.subr.mxu0 0.0
        %570 = vmatpush1.xpose.msra.mxu0 0.0
        %571 = vmatprep.subr.mxu0 0.0
        %572 = vmatpush1.xpose.msra.mxu0 0.0
        %573 = vmatprep.subr.mxu0 0.0
        %574 = vmatpush1.xpose.msra.mxu0 0.0
        %575 = vmatprep.subr.mxu0 0.0
        %576 = vmatpush1.xpose.msra.mxu0 0.0
        %577 = vmatprep.subr.mxu0 0.0
        %578 = vmatpush1.xpose.msra.mxu0 0.0
        %579 = vmatprep.subr.mxu0 0.0
        %580 = vmatpush1.xpose.msra.mxu0 0.0
        %581 = vmatprep.subr.mxu0 0.0
        %582 = vmatpush1.xpose.msra.mxu0 0.0
        %583 = vmatprep.subr.mxu0 0.0
        %584 = vmatpush1.xpose.msra.mxu0 0.0
        %585 = vmatprep.subr.mxu0 0.0
        %586 = vmatpush1.xpose.msra.mxu0 0.0
        %587 = vmatprep.subr.mxu0 0.0
        %588 = vmatpush1.xpose.msra.mxu0 0.0
        %589 = vmatprep.mubr.f32.mxu0 0.0
        %590 = vmatmul.mubr.f32.gmra.mrb[0].mxu0 %v520
        %v591 = vpop.f32.mrb[0].mxu0
        %v592 = vadd.f32 0.0, %v591
        %v593 = vpop.f32.mrb[0].mxu0
        %594 = vdwg.mxu0
        %v596 = vsel %vm518, %v507, 0
        %v599 = vsel %vm518, %v511, 0
        %601 = vmatprep.subr.mxu0 0.0
        %602 = vmatpush1.xpose.msra.mxu0 %v599
        %603 = vmatprep.subr.mxu0 0.0
        %604 = vmatpush1.xpose.msra.mxu0 0.0
        %605 = vmatprep.subr.mxu0 0.0
        %606 = vmatpush1.xpose.msra.mxu0 0.0
        %607 = vmatprep.subr.mxu0 0.0
        %608 = vmatpush1.xpose.msra.mxu0 0.0
        %609 = vmatprep.subr.mxu0 0.0
        %610 = vmatpush1.xpose.msra.mxu0 0.0
        %611 = vmatprep.subr.mxu0 0.0
        %612 = vmatpush1.xpose.msra.mxu0 0.0
        %613 = vmatprep.subr.mxu0 0.0
        %614 = vmatpush1.xpose.msra.mxu0 0.0
        %615 = vmatprep.subr.mxu0 0.0
        %616 = vmatpush1.xpose.msra.mxu0 0.0
        %617 = vmatprep.subr.mxu0 0.0
        %618 = vmatpush1.xpose.msra.mxu0 0.0
        %619 = vmatprep.subr.mxu0 0.0
        %620 = vmatpush1.xpose.msra.mxu0 0.0
        %621 = vmatprep.subr.mxu0 0.0
        %622 = vmatpush1.xpose.msra.mxu0 0.0
        %623 = vmatprep.subr.mxu0 0.0
        %624 = vmatpush1.xpose.msra.mxu0 0.0
        %625 = vmatprep.subr.mxu0 0.0
        %626 = vmatpush1.xpose.msra.mxu0 0.0
        %627 = vmatprep.subr.mxu0 0.0
        %628 = vmatpush1.xpose.msra.mxu0 0.0
        %629 = vmatprep.subr.mxu0 0.0
        %630 = vmatpush1.xpose.msra.mxu0 0.0
        %631 = vmatprep.subr.mxu0 0.0
        %632 = vmatpush1.xpose.msra.mxu0 0.0
        %633 = vmatprep.subr.mxu0 0.0
        %634 = vmatpush1.xpose.msra.mxu0 0.0
        %635 = vmatprep.subr.mxu0 0.0
        %636 = vmatpush1.xpose.msra.mxu0 0.0
        %637 = vmatprep.subr.mxu0 0.0
        %638 = vmatpush1.xpose.msra.mxu0 0.0
        %639 = vmatprep.subr.mxu0 0.0
        %640 = vmatpush1.xpose.msra.mxu0 0.0
        %641 = vmatprep.subr.mxu0 0.0
        %642 = vmatpush1.xpose.msra.mxu0 0.0
        %643 = vmatprep.subr.mxu0 0.0
        %644 = vmatpush1.xpose.msra.mxu0 0.0
        %645 = vmatprep.subr.mxu0 0.0
        %646 = vmatpush1.xpose.msra.mxu0 0.0
        %647 = vmatprep.subr.mxu0 0.0
        %648 = vmatpush1.xpose.msra.mxu0 0.0
        %649 = vmatprep.subr.mxu0 0.0
        %650 = vmatpush1.xpose.msra.mxu0 0.0
        %651 = vmatprep.subr.mxu0 0.0
        %652 = vmatpush1.xpose.msra.mxu0 0.0
        %653 = vmatprep.subr.mxu0 0.0
        %654 = vmatpush1.xpose.msra.mxu0 0.0
        %655 = vmatprep.subr.mxu0 0.0
        %656 = vmatpush1.xpose.msra.mxu0 0.0
        %657 = vmatprep.subr.mxu0 0.0
        %658 = vmatpush1.xpose.msra.mxu0 0.0
        %659 = vmatprep.subr.mxu0 0.0
        %660 = vmatpush1.xpose.msra.mxu0 0.0
        %661 = vmatprep.subr.mxu0 0.0
        %662 = vmatpush1.xpose.msra.mxu0 0.0
        %663 = vmatprep.subr.mxu0 0.0
        %664 = vmatpush1.xpose.msra.mxu0 0.0
        %665 = vmatprep.mubr.f32.mxu0 0.0
        %666 = vmatmul.mubr.f32.gmra.mrb[0].mxu0 %v596
        %v667 = vpop.f32.mrb[0].mxu0
        %v668 = vadd.f32 0.0, %v667
        %v669 = vpop.f32.mrb[0].mxu0
        %670 = vdwg.mxu0
        %v672 = vsel %vm518, %v508, 0
        %v675 = vsel %vm518, %v512, 0
        %677 = vmatprep.subr.mxu0 0.0
        %678 = vmatpush1.xpose.msra.mxu0 %v675
        %679 = vmatprep.subr.mxu0 0.0
        %680 = vmatpush1.xpose.msra.mxu0 0.0
        %681 = vmatprep.subr.mxu0 0.0
        %682 = vmatpush1.xpose.msra.mxu0 0.0
        %683 = vmatprep.subr.mxu0 0.0
        %684 = vmatpush1.xpose.msra.mxu0 0.0
        %685 = vmatprep.subr.mxu0 0.0
        %686 = vmatpush1.xpose.msra.mxu0 0.0
        %687 = vmatprep.subr.mxu0 0.0
        %688 = vmatpush1.xpose.msra.mxu0 0.0
        %689 = vmatprep.subr.mxu0 0.0
        %690 = vmatpush1.xpose.msra.mxu0 0.0
        %691 = vmatprep.subr.mxu0 0.0
        %692 = vmatpush1.xpose.msra.mxu0 0.0
        %693 = vmatprep.subr.mxu0 0.0
        %694 = vmatpush1.xpose.msra.mxu0 0.0
        %695 = vmatprep.subr.mxu0 0.0
        %696 = vmatpush1.xpose.msra.mxu0 0.0
        %697 = vmatprep.subr.mxu0 0.0
        %698 = vmatpush1.xpose.msra.mxu0 0.0
        %699 = vmatprep.subr.mxu0 0.0
        %700 = vmatpush1.xpose.msra.mxu0 0.0
        %701 = vmatprep.subr.mxu0 0.0
        %702 = vmatpush1.xpose.msra.mxu0 0.0
        %703 = vmatprep.subr.mxu0 0.0
        %704 = vmatpush1.xpose.msra.mxu0 0.0
        %705 = vmatprep.subr.mxu0 0.0
        %706 = vmatpush1.xpose.msra.mxu0 0.0
        %707 = vmatprep.subr.mxu0 0.0
        %708 = vmatpush1.xpose.msra.mxu0 0.0
        %709 = vmatprep.subr.mxu0 0.0
        %710 = vmatpush1.xpose.msra.mxu0 0.0
        %711 = vmatprep.subr.mxu0 0.0
        %712 = vmatpush1.xpose.msra.mxu0 0.0
        %713 = vmatprep.subr.mxu0 0.0
        %714 = vmatpush1.xpose.msra.mxu0 0.0
        %715 = vmatprep.subr.mxu0 0.0
        %716 = vmatpush1.xpose.msra.mxu0 0.0
        %717 = vmatprep.subr.mxu0 0.0
        %718 = vmatpush1.xpose.msra.mxu0 0.0
        %719 = vmatprep.subr.mxu0 0.0
        %720 = vmatpush1.xpose.msra.mxu0 0.0
        %721 = vmatprep.subr.mxu0 0.0
        %722 = vmatpush1.xpose.msra.mxu0 0.0
        %723 = vmatprep.subr.mxu0 0.0
        %724 = vmatpush1.xpose.msra.mxu0 0.0
        %725 = vmatprep.subr.mxu0 0.0
        %726 = vmatpush1.xpose.msra.mxu0 0.0
        %727 = vmatprep.subr.mxu0 0.0
        %728 = vmatpush1.xpose.msra.mxu0 0.0
        %729 = vmatprep.subr.mxu0 0.0
        %730 = vmatpush1.xpose.msra.mxu0 0.0
        %731 = vmatprep.subr.mxu0 0.0
        %732 = vmatpush1.xpose.msra.mxu0 0.0
        %733 = vmatprep.subr.mxu0 0.0
        %734 = vmatpush1.xpose.msra.mxu0 0.0
        %735 = vmatprep.subr.mxu0 0.0
        %736 = vmatpush1.xpose.msra.mxu0 0.0
        %737 = vmatprep.subr.mxu0 0.0
        %738 = vmatpush1.xpose.msra.mxu0 0.0
        %739 = vmatprep.subr.mxu0 0.0
        %740 = vmatpush1.xpose.msra.mxu0 0.0
        %741 = vmatprep.mubr.f32.mxu0 0.0
        %742 = vmatmul.mubr.f32.gmra.mrb[0].mxu0 %v672
        %v743 = vpop.f32.mrb[0].mxu0
        %v744 = vadd.f32 0.0, %v743
        %v745 = vpop.f32.mrb[0].mxu0
        %746 = vdwg.mxu0
        %v748 = vsel %vm518, %v509, 0
        %v751 = vsel %vm518, %v513, 0
        %753 = vmatprep.subr.mxu0 0.0
        %754 = vmatpush1.xpose.msra.mxu0 %v751
        %755 = vmatprep.subr.mxu0 0.0
        %756 = vmatpush1.xpose.msra.mxu0 0.0
        %757 = vmatprep.subr.mxu0 0.0
        %758 = vmatpush1.xpose.msra.mxu0 0.0
        %759 = vmatprep.subr.mxu0 0.0
        %760 = vmatpush1.xpose.msra.mxu0 0.0
        %761 = vmatprep.subr.mxu0 0.0
        %762 = vmatpush1.xpose.msra.mxu0 0.0
        %763 = vmatprep.subr.mxu0 0.0
        %764 = vmatpush1.xpose.msra.mxu0 0.0
        %765 = vmatprep.subr.mxu0 0.0
        %766 = vmatpush1.xpose.msra.mxu0 0.0
        %767 = vmatprep.subr.mxu0 0.0
        %768 = vmatpush1.xpose.msra.mxu0 0.0
        %769 = vmatprep.subr.mxu0 0.0
        %770 = vmatpush1.xpose.msra.mxu0 0.0
        %771 = vmatprep.subr.mxu0 0.0
        %772 = vmatpush1.xpose.msra.mxu0 0.0
        %773 = vmatprep.subr.mxu0 0.0
        %774 = vmatpush1.xpose.msra.mxu0 0.0
        %775 = vmatprep.subr.mxu0 0.0
        %776 = vmatpush1.xpose.msra.mxu0 0.0
        %777 = vmatprep.subr.mxu0 0.0
        %778 = vmatpush1.xpose.msra.mxu0 0.0
        %779 = vmatprep.subr.mxu0 0.0
        %780 = vmatpush1.xpose.msra.mxu0 0.0
        %781 = vmatprep.subr.mxu0 0.0
        %782 = vmatpush1.xpose.msra.mxu0 0.0
        %783 = vmatprep.subr.mxu0 0.0
        %784 = vmatpush1.xpose.msra.mxu0 0.0
        %785 = vmatprep.subr.mxu0 0.0
        %786 = vmatpush1.xpose.msra.mxu0 0.0
        %787 = vmatprep.subr.mxu0 0.0
        %788 = vmatpush1.xpose.msra.mxu0 0.0
        %789 = vmatprep.subr.mxu0 0.0
        %790 = vmatpush1.xpose.msra.mxu0 0.0
        %791 = vmatprep.subr.mxu0 0.0
        %792 = vmatpush1.xpose.msra.mxu0 0.0
        %793 = vmatprep.subr.mxu0 0.0
        %794 = vmatpush1.xpose.msra.mxu0 0.0
        %795 = vmatprep.subr.mxu0 0.0
        %796 = vmatpush1.xpose.msra.mxu0 0.0
        %797 = vmatprep.subr.mxu0 0.0
        %798 = vmatpush1.xpose.msra.mxu0 0.0
        %799 = vmatprep.subr.mxu0 0.0
        %800 = vmatpush1.xpose.msra.mxu0 0.0
        %801 = vmatprep.subr.mxu0 0.0
        %802 = vmatpush1.xpose.msra.mxu0 0.0
        %803 = vmatprep.subr.mxu0 0.0
        %804 = vmatpush1.xpose.msra.mxu0 0.0
        %805 = vmatprep.subr.mxu0 0.0
        %806 = vmatpush1.xpose.msra.mxu0 0.0
        %807 = vmatprep.subr.mxu0 0.0
        %808 = vmatpush1.xpose.msra.mxu0 0.0
        %809 = vmatprep.subr.mxu0 0.0
        %810 = vmatpush1.xpose.msra.mxu0 0.0
        %811 = vmatprep.subr.mxu0 0.0
        %812 = vmatpush1.xpose.msra.mxu0 0.0
        %813 = vmatprep.subr.mxu0 0.0
        %814 = vmatpush1.xpose.msra.mxu0 0.0
        %815 = vmatprep.subr.mxu0 0.0
        %816 = vmatpush1.xpose.msra.mxu0 0.0
        %817 = vmatprep.mubr.f32.mxu0 0.0
        %818 = vmatmul.mubr.f32.gmra.mrb[0].mxu0 %v748
        %v819 = vpop.f32.mrb[0].mxu0
        %v820 = vadd.f32 0.0, %v819
        %v821 = vpop.f32.mrb[0].mxu0
        %822 = vdwg.mxu0
        %v823 = vmul.f32 %v592, 0.17677669
        %v824 = vmul.f32 %v668, 0.17677669
        %v825 = vmul.f32 %v744, 0.17677669
        %v826 = vmul.f32 %v820, 0.17677669
        %v827 = vsel %vm433, 1, 0
        %vm828 = vcmp.eq.s32.totalorder %v827, 1
        %v829 = vsel %vm828, -inf, %v823
        %v830 = vsel %vm828, -inf, %v824
        %v831 = vsel %vm828, -inf, %v825
        %v832 = vsel %vm828, -inf, %v826
        %v833 = vsel %vm453, %v829, -inf
        %834 = vmax.xlane.f32.xlu0 %v833
        %v835 = vpop.xlane.xlu0 %834
        %v836 = vsel %vm453, %v830, -inf
        %837 = vmax.xlane.f32.xlu0 %v836
        %v838 = vpop.xlane.xlu0 %837
        %v839 = vsel %vm453, %v831, -inf
        %840 = vmax.xlane.f32.xlu0 %v839
        %v841 = vpop.xlane.xlu0 %840
        %v842 = vsel %vm453, %v832, -inf
        %843 = vmax.xlane.f32.xlu0 %v842
        %v844 = vpop.xlane.xlu0 %843
        %v845 = vsub.f32 %v829, %v835
        %v846 = vsub.f32 %v830, %v838
        %v847 = vsub.f32 %v831, %v841
        %v848 = vsub.f32 %v832, %v844
        %v849 = vmul.f32 %v845, 1.442695
        %v850 = vpow.pop %v849
        %v851 = vmul.f32 %v846, 1.442695
        %v852 = vpow.pop %v851
        %v853 = vmul.f32 %v847, 1.442695
        %v854 = vpow.pop %v853
        %v855 = vmul.f32 %v848, 1.442695
        %v856 = vpow.pop %v855
        %v857 = vsel %vm453, %v850, 0.0
        %858 = vadd.xlane.f32.xlu0 %v857
        %v859 = vpop.xlane.xlu0 %858
        %v860 = vsel %vm453, %v852, 0.0
        %861 = vadd.xlane.f32.xlu0 %v860
        %v862 = vpop.xlane.xlu0 %861
        %v863 = vsel %vm453, %v854, 0.0
        %864 = vadd.xlane.f32.xlu0 %v863
        %v865 = vpop.xlane.xlu0 %864
        %v866 = vsel %vm453, %v856, 0.0
        %867 = vadd.xlane.f32.xlu0 %v866
        %v868 = vpop.xlane.xlu0 %867
        %v869 = vrcp.pop %v859
        %v870 = vrcp.pop %v862
        %v871 = vrcp.pop %v865
        %v872 = vrcp.pop %v868
        %v873 = vmul.f32 %v850, %v869
        %v874 = vmul.f32 %v852, %v870
        %v875 = vmul.f32 %v854, %v871
        %v876 = vmul.f32 %v856, %v872
        %v878 = vsel %vm453, %v873, 0
        %880 = vmatprep.subr.mxu0 0.0
        %881 = vmatpush1.msra.mxu0 %v514
        %882 = vmatprep.subr.mxu0 0.0
        %883 = vmatpush1.msra.mxu0 0.0
        %884 = vmatprep.subr.mxu0 0.0
        %885 = vmatpush1.msra.mxu0 0.0
        %886 = vmatprep.subr.mxu0 0.0
        %887 = vmatpush1.msra.mxu0 0.0
        %888 = vmatprep.subr.mxu0 0.0
        %889 = vmatpush1.msra.mxu0 0.0
        %890 = vmatprep.subr.mxu0 0.0
        %891 = vmatpush1.msra.mxu0 0.0
        %892 = vmatprep.subr.mxu0 0.0
        %893 = vmatpush1.msra.mxu0 0.0
        %894 = vmatprep.subr.mxu0 0.0
        %895 = vmatpush1.msra.mxu0 0.0
        %896 = vmatprep.subr.mxu0 0.0
        %897 = vmatpush1.msra.mxu0 0.0
        %898 = vmatprep.subr.mxu0 0.0
        %899 = vmatpush1.msra.mxu0 0.0
        %900 = vmatprep.subr.mxu0 0.0
        %901 = vmatpush1.msra.mxu0 0.0
        %902 = vmatprep.subr.mxu0 0.0
        %903 = vmatpush1.msra.mxu0 0.0
        %904 = vmatprep.subr.mxu0 0.0
        %905 = vmatpush1.msra.mxu0 0.0
        %906 = vmatprep.subr.mxu0 0.0
        %907 = vmatpush1.msra.mxu0 0.0
        %908 = vmatprep.subr.mxu0 0.0
        %909 = vmatpush1.msra.mxu0 0.0
        %910 = vmatprep.subr.mxu0 0.0
        %911 = vmatpush1.msra.mxu0 0.0
        %912 = vmatprep.subr.mxu0 0.0
        %913 = vmatpush1.msra.mxu0 0.0
        %914 = vmatprep.subr.mxu0 0.0
        %915 = vmatpush1.msra.mxu0 0.0
        %916 = vmatprep.subr.mxu0 0.0
        %917 = vmatpush1.msra.mxu0 0.0
        %918 = vmatprep.subr.mxu0 0.0
        %919 = vmatpush1.msra.mxu0 0.0
        %920 = vmatprep.subr.mxu0 0.0
        %921 = vmatpush1.msra.mxu0 0.0
        %922 = vmatprep.subr.mxu0 0.0
        %923 = vmatpush1.msra.mxu0 0.0
        %924 = vmatprep.subr.mxu0 0.0
        %925 = vmatpush1.msra.mxu0 0.0
        %926 = vmatprep.subr.mxu0 0.0
        %927 = vmatpush1.msra.mxu0 0.0
        %928 = vmatprep.subr.mxu0 0.0
        %929 = vmatpush1.msra.mxu0 0.0
        %930 = vmatprep.subr.mxu0 0.0
        %931 = vmatpush1.msra.mxu0 0.0
        %932 = vmatprep.subr.mxu0 0.0
        %933 = vmatpush1.msra.mxu0 0.0
        %934 = vmatprep.subr.mxu0 0.0
        %935 = vmatpush1.msra.mxu0 0.0
        %936 = vmatprep.subr.mxu0 0.0
        %937 = vmatpush1.msra.mxu0 0.0
        %938 = vmatprep.subr.mxu0 0.0
        %939 = vmatpush1.msra.mxu0 0.0
        %940 = vmatprep.subr.mxu0 0.0
        %941 = vmatpush1.msra.mxu0 0.0
        %942 = vmatprep.subr.mxu0 0.0
        %943 = vmatpush1.msra.mxu0 0.0
        %944 = vmatprep.mubr.f32.mxu0 0.0
        %945 = vmatmul.mubr.f32.gmra.mrb[0].mxu0 %v878
        %v946 = vpop.f32.mrb[0].mxu0
        %v947 = vadd.f32 0.0, %v946
        %v948 = vpop.f32.mrb[0].mxu0
        %949 = vdwg.mxu0
        %v951 = vsel %vm453, %v874, 0
        %953 = vmatprep.subr.mxu0 0.0
        %954 = vmatpush1.msra.mxu0 %v515
        %955 = vmatprep.subr.mxu0 0.0
        %956 = vmatpush1.msra.mxu0 0.0
        %957 = vmatprep.subr.mxu0 0.0
        %958 = vmatpush1.msra.mxu0 0.0
        %959 = vmatprep.subr.mxu0 0.0
        %960 = vmatpush1.msra.mxu0 0.0
        %961 = vmatprep.subr.mxu0 0.0
        %962 = vmatpush1.msra.mxu0 0.0
        %963 = vmatprep.subr.mxu0 0.0
        %964 = vmatpush1.msra.mxu0 0.0
        %965 = vmatprep.subr.mxu0 0.0
        %966 = vmatpush1.msra.mxu0 0.0
        %967 = vmatprep.subr.mxu0 0.0
        %968 = vmatpush1.msra.mxu0 0.0
        %969 = vmatprep.subr.mxu0 0.0
        %970 = vmatpush1.msra.mxu0 0.0
        %971 = vmatprep.subr.mxu0 0.0
        %972 = vmatpush1.msra.mxu0 0.0
        %973 = vmatprep.subr.mxu0 0.0
        %974 = vmatpush1.msra.mxu0 0.0
        %975 = vmatprep.subr.mxu0 0.0
        %976 = vmatpush1.msra.mxu0 0.0
        %977 = vmatprep.subr.mxu0 0.0
        %978 = vmatpush1.msra.mxu0 0.0
        %979 = vmatprep.subr.mxu0 0.0
        %980 = vmatpush1.msra.mxu0 0.0
        %981 = vmatprep.subr.mxu0 0.0
        %982 = vmatpush1.msra.mxu0 0.0
        %983 = vmatprep.subr.mxu0 0.0
        %984 = vmatpush1.msra.mxu0 0.0
        %985 = vmatprep.subr.mxu0 0.0
        %986 = vmatpush1.msra.mxu0 0.0
        %987 = vmatprep.subr.mxu0 0.0
        %988 = vmatpush1.msra.mxu0 0.0
        %989 = vmatprep.subr.mxu0 0.0
        %990 = vmatpush1.msra.mxu0 0.0
        %991 = vmatprep.subr.mxu0 0.0
        %992 = vmatpush1.msra.mxu0 0.0
        %993 = vmatprep.subr.mxu0 0.0
        %994 = vmatpush1.msra.mxu0 0.0
        %995 = vmatprep.subr.mxu0 0.0
        %996 = vmatpush1.msra.mxu0 0.0
        %997 = vmatprep.subr.mxu0 0.0
        %998 = vmatpush1.msra.mxu0 0.0
        %999 = vmatprep.subr.mxu0 0.0
        %1000 = vmatpush1.msra.mxu0 0.0
        %1001 = vmatprep.subr.mxu0 0.0
        %1002 = vmatpush1.msra.mxu0 0.0
        %1003 = vmatprep.subr.mxu0 0.0
        %1004 = vmatpush1.msra.mxu0 0.0
        %1005 = vmatprep.subr.mxu0 0.0
        %1006 = vmatpush1.msra.mxu0 0.0
        %1007 = vmatprep.subr.mxu0 0.0
        %1008 = vmatpush1.msra.mxu0 0.0
        %1009 = vmatprep.subr.mxu0 0.0
        %1010 = vmatpush1.msra.mxu0 0.0
        %1011 = vmatprep.subr.mxu0 0.0
        %1012 = vmatpush1.msra.mxu0 0.0
        %1013 = vmatprep.subr.mxu0 0.0
        %1014 = vmatpush1.msra.mxu0 0.0
        %1015 = vmatprep.subr.mxu0 0.0
        %1016 = vmatpush1.msra.mxu0 0.0
        %1017 = vmatprep.mubr.f32.mxu0 0.0
        %1018 = vmatmul.mubr.f32.gmra.mrb[0].mxu0 %v951
        %v1019 = vpop.f32.mrb[0].mxu0
        %v1020 = vadd.f32 0.0, %v1019
        %v1021 = vpop.f32.mrb[0].mxu0
        %1022 = vdwg.mxu0
        %v1024 = vsel %vm453, %v875, 0
        %1026 = vmatprep.subr.mxu0 0.0
        %1027 = vmatpush1.msra.mxu0 %v516
        %1028 = vmatprep.subr.mxu0 0.0
        %1029 = vmatpush1.msra.mxu0 0.0
        %1030 = vmatprep.subr.mxu0 0.0
        %1031 = vmatpush1.msra.mxu0 0.0
        %1032 = vmatprep.subr.mxu0 0.0
        %1033 = vmatpush1.msra.mxu0 0.0
        %1034 = vmatprep.subr.mxu0 0.0
        %1035 = vmatpush1.msra.mxu0 0.0
        %1036 = vmatprep.subr.mxu0 0.0
        %1037 = vmatpush1.msra.mxu0 0.0
        %1038 = vmatprep.subr.mxu0 0.0
        %1039 = vmatpush1.msra.mxu0 0.0
        %1040 = vmatprep.subr.mxu0 0.0
        %1041 = vmatpush1.msra.mxu0 0.0
        %1042 = vmatprep.subr.mxu0 0.0
        %1043 = vmatpush1.msra.mxu0 0.0
        %1044 = vmatprep.subr.mxu0 0.0
        %1045 = vmatpush1.msra.mxu0 0.0
        %1046 = vmatprep.subr.mxu0 0.0
        %1047 = vmatpush1.msra.mxu0 0.0
        %1048 = vmatprep.subr.mxu0 0.0
        %1049 = vmatpush1.msra.mxu0 0.0
        %1050 = vmatprep.subr.mxu0 0.0
        %1051 = vmatpush1.msra.mxu0 0.0
        %1052 = vmatprep.subr.mxu0 0.0
        %1053 = vmatpush1.msra.mxu0 0.0
        %1054 = vmatprep.subr.mxu0 0.0
        %1055 = vmatpush1.msra.mxu0 0.0
        %1056 = vmatprep.subr.mxu0 0.0
        %1057 = vmatpush1.msra.mxu0 0.0
        %1058 = vmatprep.subr.mxu0 0.0
        %1059 = vmatpush1.msra.mxu0 0.0
        %1060 = vmatprep.subr.mxu0 0.0
        %1061 = vmatpush1.msra.mxu0 0.0
        %1062 = vmatprep.subr.mxu0 0.0
        %1063 = vmatpush1.msra.mxu0 0.0
        %1064 = vmatprep.subr.mxu0 0.0
        %1065 = vmatpush1.msra.mxu0 0.0
        %1066 = vmatprep.subr.mxu0 0.0
        %1067 = vmatpush1.msra.mxu0 0.0
        %1068 = vmatprep.subr.mxu0 0.0
        %1069 = vmatpush1.msra.mxu0 0.0
        %1070 = vmatprep.subr.mxu0 0.0
        %1071 = vmatpush1.msra.mxu0 0.0
        %1072 = vmatprep.subr.mxu0 0.0
        %1073 = vmatpush1.msra.mxu0 0.0
        %1074 = vmatprep.subr.mxu0 0.0
        %1075 = vmatpush1.msra.mxu0 0.0
        %1076 = vmatprep.subr.mxu0 0.0
        %1077 = vmatpush1.msra.mxu0 0.0
        %1078 = vmatprep.subr.mxu0 0.0
        %1079 = vmatpush1.msra.mxu0 0.0
        %1080 = vmatprep.subr.mxu0 0.0
        %1081 = vmatpush1.msra.mxu0 0.0
        %1082 = vmatprep.subr.mxu0 0.0
        %1083 = vmatpush1.msra.mxu0 0.0
        %1084 = vmatprep.subr.mxu0 0.0
        %1085 = vmatpush1.msra.mxu0 0.0
        %1086 = vmatprep.subr.mxu0 0.0
        %1087 = vmatpush1.msra.mxu0 0.0
        %1088 = vmatprep.subr.mxu0 0.0
        %1089 = vmatpush1.msra.mxu0 0.0
        %1090 = vmatprep.mubr.f32.mxu0 0.0
        %1091 = vmatmul.mubr.f32.gmra.mrb[0].mxu0 %v1024
        %v1092 = vpop.f32.mrb[0].mxu0
        %v1093 = vadd.f32 0.0, %v1092
        %v1094 = vpop.f32.mrb[0].mxu0
        %1095 = vdwg.mxu0
        %v1097 = vsel %vm453, %v876, 0
        %1099 = vmatprep.subr.mxu0 0.0
        %1100 = vmatpush1.msra.mxu0 %v517
        %1101 = vmatprep.subr.mxu0 0.0
        %1102 = vmatpush1.msra.mxu0 0.0
        %1103 = vmatprep.subr.mxu0 0.0
        %1104 = vmatpush1.msra.mxu0 0.0
        %1105 = vmatprep.subr.mxu0 0.0
        %1106 = vmatpush1.msra.mxu0 0.0
        %1107 = vmatprep.subr.mxu0 0.0
        %1108 = vmatpush1.msra.mxu0 0.0
        %1109 = vmatprep.subr.mxu0 0.0
        %1110 = vmatpush1.msra.mxu0 0.0
        %1111 = vmatprep.subr.mxu0 0.0
        %1112 = vmatpush1.msra.mxu0 0.0
        %1113 = vmatprep.subr.mxu0 0.0
        %1114 = vmatpush1.msra.mxu0 0.0
        %1115 = vmatprep.subr.mxu0 0.0
        %1116 = vmatpush1.msra.mxu0 0.0
        %1117 = vmatprep.subr.mxu0 0.0
        %1118 = vmatpush1.msra.mxu0 0.0
        %1119 = vmatprep.subr.mxu0 0.0
        %1120 = vmatpush1.msra.mxu0 0.0
        %1121 = vmatprep.subr.mxu0 0.0
        %1122 = vmatpush1.msra.mxu0 0.0
        %1123 = vmatprep.subr.mxu0 0.0
        %1124 = vmatpush1.msra.mxu0 0.0
        %1125 = vmatprep.subr.mxu0 0.0
        %1126 = vmatpush1.msra.mxu0 0.0
        %1127 = vmatprep.subr.mxu0 0.0
        %1128 = vmatpush1.msra.mxu0 0.0
        %1129 = vmatprep.subr.mxu0 0.0
        %1130 = vmatpush1.msra.mxu0 0.0
        %1131 = vmatprep.subr.mxu0 0.0
        %1132 = vmatpush1.msra.mxu0 0.0
        %1133 = vmatprep.subr.mxu0 0.0
        %1134 = vmatpush1.msra.mxu0 0.0
        %1135 = vmatprep.subr.mxu0 0.0
        %1136 = vmatpush1.msra.mxu0 0.0
        %1137 = vmatprep.subr.mxu0 0.0
        %1138 = vmatpush1.msra.mxu0 0.0
        %1139 = vmatprep.subr.mxu0 0.0
        %1140 = vmatpush1.msra.mxu0 0.0
        %1141 = vmatprep.subr.mxu0 0.0
        %1142 = vmatpush1.msra.mxu0 0.0
        %1143 = vmatprep.subr.mxu0 0.0
        %1144 = vmatpush1.msra.mxu0 0.0
        %1145 = vmatprep.subr.mxu0 0.0
        %1146 = vmatpush1.msra.mxu0 0.0
        %1147 = vmatprep.subr.mxu0 0.0
        %1148 = vmatpush1.msra.mxu0 0.0
        %1149 = vmatprep.subr.mxu0 0.0
        %1150 = vmatpush1.msra.mxu0 0.0
        %1151 = vmatprep.subr.mxu0 0.0
        %1152 = vmatpush1.msra.mxu0 0.0
        %1153 = vmatprep.subr.mxu0 0.0
        %1154 = vmatpush1.msra.mxu0 0.0
        %1155 = vmatprep.subr.mxu0 0.0
        %1156 = vmatpush1.msra.mxu0 0.0
        %1157 = vmatprep.subr.mxu0 0.0
        %1158 = vmatpush1.msra.mxu0 0.0
        %1159 = vmatprep.subr.mxu0 0.0
        %1160 = vmatpush1.msra.mxu0 0.0
        %1161 = vmatprep.subr.mxu0 0.0
        %1162 = vmatpush1.msra.mxu0 0.0
        %1163 = vmatprep.mubr.f32.mxu0 0.0
        %1164 = vmatmul.mubr.f32.gmra.mrb[0].mxu0 %v1097
        %v1165 = vpop.f32.mrb[0].mxu0
        %v1166 = vadd.f32 0.0, %v1165
        %v1167 = vpop.f32.mrb[0].mxu0
        %1168 = vdwg.mxu0
        %1169 = vst.msk [vmem:[%s411] sm:$0xff] %vm518, %v947
        %1170 = vst.msk [vmem:[%s411 + $0x8] sm:$0xff] %vm518, %v1020
        %1171 = vst.msk [vmem:[%s411 + $0x10] sm:$0xff] %vm518, %v1093
        %1172 = vst.msk [vmem:[%s411 + $0x18] sm:$0xff] %vm518, %v1166
        %1173 = vst.msk [vmem:[%s418] sm:$0xff] %vm453, %v873
        %1174 = vst.msk [vmem:[%s418 + $0x8] sm:$0xff] %vm453, %v874
        %1175 = vst.msk [vmem:[%s418 + $0x10] sm:$0xff] %vm453, %v875
        %1176 = vst.msk [vmem:[%s418 + $0x18] sm:$0xff] %vm453, %v876
        %s1177 = sand.u32 %s163, 1
        %s1178 = scalar_lea.sflag [#allocation4], %s1177
        %s1179 = sand.u32 %s163, 1
        %s1180 = smul.addr %s1179, 32
        %s1181 = scalar_lea.vmem [#allocation10], %s1180
        %s1182 = sand.u32 %s33, 1
        %s1183 = scalar_lea.sflag [#allocation12], %s1182
        %s1184 = sand.u32 %s191, 1
        %s1185 = smul.addr %s1184, 32
        %s1186 = scalar_lea.vmem [#allocation11], %s1185
        %s1187 = sand.u32 %s33, 1
        %s1188 = scalar_lea.sflag [#allocation12], %s1187
        %s1189 = sand.u32 %s219, 1
        %s1190 = smul.addr %s1189, 32
        %s1191 = scalar_lea.vmem [#allocation13], %s1190
        // Predicated region
        $region53: #{tpu_custom_call.1} parent=35 // pred_check
          %p1192 = pneg %p173
        $region54: #{tpu_custom_call.1} parent=35 // pred_check_branch
          %1194 = sbr.rel (%p1192) target = $region56
        $region55: #{tpu_custom_call.1} parent=35 // pred_region
          %s1196 = ssub.s32 512, 512
          %1197 = vsyncadd %s1178, %s1196
          %s1198 = smul.addr %s37, 4
          %s1199 = sadd.s32 %s38, %s1198
          %s1200 = smul.addr %s1199, 128
          %s1201 = scalar_lea.hbm %s4, %s1200
          %s1202 = sshll.u32 %s1181, 4
          %s1203 = int_to_ptr.vmem [resolvable:$true] %s1202
          %1208 = dma.vmem_to_hbm [thread:$0]  %s1203, 512, %s1201, %s1178, 128, 128, 8
        $region56: #{tpu_custom_call.1} parent=35 // pred_fallthru
          _
        // Predicated region
        $region57: #{tpu_custom_call.1} parent=35 // pred_check
          %p1209 = pneg %p201
        $region58: #{tpu_custom_call.1} parent=35 // pred_check_branch
          %1211 = sbr.rel (%p1209) target = $region60
        $region59: #{tpu_custom_call.1} parent=35 // pred_region
          %s1213 = ssub.s32 512, 512
          %1214 = vsyncadd %s1183, %s1213
          %s1215 = smul.addr %s37, 4
          %s1216 = sadd.s32 %s38, %s1215
          %s1217 = smul.addr %s1216, 128
          %s1218 = scalar_lea.hbm %s5, %s1217
          %s1219 = sshll.u32 %s1186, 4
          %s1220 = int_to_ptr.vmem [resolvable:$true] %s1219
          %1225 = dma.vmem_to_hbm [thread:$0]  %s1220, 512, %s1218, %s1183, 128, 128, 8
        $region60: #{tpu_custom_call.1} parent=35 // pred_fallthru
          _
        // Predicated region
        $region61: #{tpu_custom_call.1} parent=35 // pred_check
          %p1226 = pneg %p229
        $region62: #{tpu_custom_call.1} parent=35 // pred_check_branch
          %1228 = sbr.rel (%p1226) target = $region64
        $region63: #{tpu_custom_call.1} parent=35 // pred_region
          %s1230 = ssub.s32 512, 512
          %1231 = vsyncadd %s1188, %s1230
          %s1232 = smul.addr %s37, 4
          %s1233 = sadd.s32 %s38, %s1232
          %s1234 = smul.addr %s1233, 128
          %s1235 = scalar_lea.hbm %s6, %s1234
          %s1236 = sshll.u32 %s1191, 4
          %s1237 = int_to_ptr.vmem [resolvable:$true] %s1236
          %1242 = dma.vmem_to_hbm [thread:$0]  %s1237, 512, %s1235, %s1188, 128, 128, 8
        $region64: #{tpu_custom_call.1} parent=35 // pred_fallthru
          _
      $region36: #{tpu_custom_call.1} parent=5 // pred_fallthru
        _
      %p1243 = scmp.le.s32.totalorder 2, %s28
      // Predicated region
      $region65: #{tpu_custom_call.1} parent=5 // pred_check
        %p1244 = pneg %p1243
      $region66: #{tpu_custom_call.1} parent=5 // pred_check_branch
        %1246 = sbr.rel (%p1244) target = $region68
      $region67: #{tpu_custom_call.1} parent=5 // pred_region
        %s1247 = ssub.s32 %s28, 2
        // Predicated region
        $region69: #{tpu_custom_call.1} parent=67 // pred_check
          %p1248 = pneg %p179
        $region70: #{tpu_custom_call.1} parent=67 // pred_check_branch
          %1250 = sbr.rel (%p1248) target = $region72
        $region71: #{tpu_custom_call.1} parent=67 // pred_region
          %s1251 = sand.u32 %s164, 1
          %s1252 = scalar_lea.sflag [#allocation4], %s1251
          %s1253 = sand.u32 %s164, 1
          %s1254 = smul.addr %s1253, 32
          %s1255 = scalar_lea.vmem [#allocation10], %s1254
          %1256 = dma.done %s1252, 512
        $region72: #{tpu_custom_call.1} parent=67 // pred_fallthru
          _
        // Predicated region
        $region73: #{tpu_custom_call.1} parent=67 // pred_check
          %p1257 = pneg %p207
        $region74: #{tpu_custom_call.1} parent=67 // pred_check_branch
          %1259 = sbr.rel (%p1257) target = $region76
        $region75: #{tpu_custom_call.1} parent=67 // pred_region
          %s1260 = sand.u32 %s34, 1
          %s1261 = scalar_lea.sflag [#allocation12], %s1260
          %s1262 = sand.u32 %s192, 1
          %s1263 = smul.addr %s1262, 32
          %s1264 = scalar_lea.vmem [#allocation11], %s1263
          %1265 = dma.done %s1261, 512
        $region76: #{tpu_custom_call.1} parent=67 // pred_fallthru
          _
        // Predicated region
        $region77: #{tpu_custom_call.1} parent=67 // pred_check
          %p1266 = pneg %p235
        $region78: #{tpu_custom_call.1} parent=67 // pred_check_branch
          %1268 = sbr.rel (%p1266) target = $region80
        $region79: #{tpu_custom_call.1} parent=67 // pred_region
          %s1269 = sand.u32 %s34, 1
          %s1270 = scalar_lea.sflag [#allocation12], %s1269
          %s1271 = sand.u32 %s220, 1
          %s1272 = smul.addr %s1271, 32
          %s1273 = scalar_lea.vmem [#allocation13], %s1272
          %1274 = dma.done %s1270, 512
        $region80: #{tpu_custom_call.1} parent=67 // pred_fallthru
          _
      $region68: #{tpu_custom_call.1} parent=5 // pred_fallthru
        _
    $region6: #{tpu_custom_call.1} parent=1 // loop_footer
      %s32 = sadd.s32 1, %s28
    $region7: #{tpu_custom_call.1} parent=1 // loop_footer_branch
      %27 = sbr.rel target = $region3
    $region8: #{tpu_custom_call.1} parent=1 // loop_exit
      _
    %1275 = vsyncpa [#allocation3], 1
    %s1276 = scalar_lea.sflag [#allocation3], 1
    %1277 = vsyncpa %s1276, 1
    %1278 = vsyncpa [#allocation6], 1
    %s1279 = scalar_lea.sflag [#allocation6], 1
    %1280 = vsyncpa %s1279, 1
    %1281 = vsyncpa [#allocation9], 1
    %s1282 = scalar_lea.sflag [#allocation9], 1
    %1283 = vsyncpa %s1282, 1
    %1284 = vsyncpa [#allocation4], 1
    %s1285 = scalar_lea.sflag [#allocation4], 1
    %1286 = vsyncpa %s1285, 1
    %1287 = vsyncpa [#allocation12], 1
    %s1288 = scalar_lea.sflag [#allocation12], 1
    %1289 = vsyncpa %s1288, 1

</llo_original>
